<compile_context>
chip_gen: v6e
topology: v6e:2x2x1
jax: 0.10.0
libtpu: 0.0.40
codegen_flags: <defaults>
</compile_context>

<pallas_src>
import functools

import numpy as np

import jax
import jax.numpy as jnp
from jax import lax
from jax.experimental import pallas as pl
from jax.experimental.pallas import tpu as pltpu

BN_EPS = 1e-5
VMEM_LIMIT_BYTES = 64 * 1024 * 1024


def _compiler_params():
    return pltpu.CompilerParams(dimension_semantics=("parallel",),
                                vmem_limit_bytes=VMEM_LIMIT_BYTES)


def _valid_mask(D, H, Hp, W, Wp, C, P, Rrows):
    """(Rrows, Wp*C) bool mask of valid conv-output positions (iota-derived)."""
    r = lax.broadcasted_iota(jnp.int32, (Rrows, 1), 0)
    rowvalid = jnp.zeros((Rrows, 1), jnp.bool_)
    for d in range(D):                      # valid rows: r in [d*Hp, d*Hp + H)
        rowvalid = rowvalid | ((r >= d * Hp) & (r < d * Hp + H))
    lane = lax.broadcasted_iota(jnp.int32, (1, Wp * C), 1)
    lanevalid = (lane >= P * C) & (lane < (P + W) * C)
    return rowvalid & lanevalid


def _conv_stage_kernel(dims, apply_act, *refs):
    """[optional BN-affine+ReLU of the input] -> conv3d -> partial BN stats."""
    C, D, H, W, K = dims
    P = K // 2
    Hp, Wp, Dp = H + 2 * P, W + 2 * P, D + 2 * P
    WpC = Wp * C
    row_center = P * Hp + P                 # flat (d,h) offset of window centre
    Rrows = D * Hp - 2 * P                  # number of conv output rows

    if apply_act:
        (src_ref, wcol_ref, bias_ref, scale_ref, shift_ref,
         z_ref, stat_ref, pad_ref, col_ref) = refs
    else:
        (src_ref, wcol_ref, bias_ref,
         z_ref, stat_ref, pad_ref, col_ref) = refs

    mask = _valid_mask(D, H, Hp, W, Wp, C, P, Rrows)

    # ---- stage the zero-padded bf16 input volume in VMEM (halo rows only) ----
    if apply_act:
        v = src_ref[0, 0:Rrows, :]                           # raw conv1 out, f32
        v = jnp.maximum(v * scale_ref[...] + shift_ref[...], 0.0)
        v = jnp.where(mask, v, 0.0).astype(jnp.bfloat16)
    else:
        v = src_ref[0, 0:Rrows, :]                           # pre-padded bf16 x

    if row_center > 0:
        pad_ref[0:row_center, :] = jnp.zeros((row_center, WpC), jnp.bfloat16)
        pad_ref[row_center + Rrows:Dp * Hp, :] = jnp.zeros(
            (Dp * Hp - row_center - Rrows, WpC), jnp.bfloat16)
    pad_ref[row_center:row_center + Rrows, :] = v

    # ---- im2col over the K*K (kd,kh) taps; (kw, Cin) live in the band weight --
    for kd in range(K):
        for kh in range(K):
            t = kd * K + kh
            off = kd * Hp + kh
            col_ref[:, t * WpC:(t + 1) * WpC] = pad_ref[off:off + Rrows, :]

    # single MXU matmul: (Rrows, K*K*Wp*C) x (K*K*Wp*C, Wp*C), f32 accumulation
    z = jnp.dot(col_ref[...], wcol_ref[...],
                preferred_element_type=jnp.float32) + bias_ref[...]
    z_ref[0, 0:Rrows, :] = z

    # ---- masked partial BN statistics (per-channel reduce finishes in JAX) ----
    zm = jnp.where(mask, z, 0.0)
    stat_ref[0, 0:1, :] = jnp.sum(zm, axis=0, keepdims=True)
    stat_ref[0, 1:2, :] = jnp.sum(zm * zm, axis=0, keepdims=True)


def _bn_act_kernel(skip_leak, *refs):
    """Final BN-affine + ReLU (+ optional residual leak)."""
    if skip_leak:
        z_ref, scale_ref, shift_ref, x_ref, out_ref = refs
    else:
        z_ref, scale_ref, shift_ref, out_ref = refs
    y = jnp.maximum(z_ref[0] * scale_ref[...] + shift_ref[...], 0.0)
    if skip_leak:
        y = y + x_ref[0]
    out_ref[0] = y


def _band_weights(w_dhwio, C, W, Wp, P, K):
    """(K*K*Wp*C, Wp*C) bf16 block-banded weight folding (kd,kh,kw,Cin)->Cout."""
    w = jnp.asarray(w_dhwio, jnp.float32)
    sel = []
    for kw in range(K):
        s = np.zeros((Wp, Wp), np.float32)
        for wo in range(W):
            s[wo + kw, wo + P] = 1.0       # input w_pad = wo+kw -> output w_pad = wo+P
        sel.append(jnp.asarray(s))
    blocks = []
    for kd in range(K):
        for kh in range(K):
            blocks.append(sum(jnp.kron(sel[kw], w[kd, kh, kw]) for kw in range(K)))
    return jnp.concatenate(blocks, axis=0).astype(jnp.bfloat16)


def _bn_scale_shift(stats, gamma, beta, count, Wp, C):
    """Finalize training-mode BN from masked partial sums (tiny, stays in jit)."""
    s = stats[:, 0, :].reshape(-1, Wp, C).sum(axis=(0, 1))
    ss = stats[:, 1, :].reshape(-1, Wp, C).sum(axis=(0, 1))
    mean = s / count
    var = ss / count - mean * mean                       # biased variance
    scale = jnp.asarray(gamma, jnp.float32) * lax.rsqrt(var + BN_EPS)
    shift = jnp.asarray(beta, jnp.float32) - mean * scale
    return (jnp.tile(scale, Wp).reshape(1, Wp * C),
            jnp.tile(shift, Wp).reshape(1, Wp * C))


def _conv_stage(src, wcol, bias_row, dims, scale_row=None, shift_row=None):
    C, D, H, W, K = dims
    N = src.shape[0]
    P = K // 2
    Hp, Wp, Dp = H + 2 * P, W + 2 * P, D + 2 * P
    WpC = Wp * C
    DHp = D * Hp
    Rrows = DHp - 2 * P
    apply_act = scale_row is not None

    vol_spec = pl.BlockSpec((1, DHp, WpC), lambda n: (n, 0, 0))
    row_spec = pl.BlockSpec((1, WpC), lambda n: (0, 0))
    in_specs = [vol_spec,
                pl.BlockSpec((K * K * WpC, WpC), lambda n: (0, 0)),
                row_spec]
    args = [src, wcol, bias_row]
    if apply_act:
        in_specs += [row_spec, row_spec]
        args += [scale_row, shift_row]

    kern = functools.partial(_conv_stage_kernel, dims, apply_act)
    z, stats = pl.pallas_call(
        kern,
        out_shape=(jax.ShapeDtypeStruct((N, DHp, WpC), jnp.float32),
                   jax.ShapeDtypeStruct((N, 2, WpC), jnp.float32)),
        grid=(N,),
        in_specs=in_specs,
        out_specs=(vol_spec, pl.BlockSpec((1, 2, WpC), lambda n: (n, 0, 0))),
        scratch_shapes=[pltpu.VMEM((Dp * Hp, WpC), jnp.bfloat16),
                        pltpu.VMEM((Rrows, K * K * WpC), jnp.bfloat16)],
        compiler_params=_compiler_params(),
    )(*args)
    return z, stats


def _bn_act(z, scale_row, shift_row, x_res, dims):
    C, D, H, W, K = dims
    N = z.shape[0]
    P = K // 2
    Hp, Wp = H + 2 * P, W + 2 * P
    WpC = Wp * C
    DHp = D * Hp
    skip_leak = x_res is not None

    vol_spec = pl.BlockSpec((1, DHp, WpC), lambda n: (n, 0, 0))
    row_spec = pl.BlockSpec((1, WpC), lambda n: (0, 0))
    in_specs = [vol_spec, row_spec, row_spec]
    args = [z, scale_row, shift_row]
    if skip_leak:
        in_specs.append(vol_spec)
        args.append(x_res)

    kern = functools.partial(_bn_act_kernel, skip_leak)
    return pl.pallas_call(
        kern,
        out_shape=jax.ShapeDtypeStruct((N, DHp, WpC), jnp.float32),
        grid=(N,),
        in_specs=in_specs,
        out_specs=vol_spec,
        compiler_params=_compiler_params(),
    )(*args)


@functools.partial(jax.jit, static_argnames=("kernel_size", "skip_leak"))
def double_conv_block_pallas(x_ncdhw, params, *, kernel_size, skip_leak=False):
    """x_ncdhw: (N, C, D, H, W) float32.  Returns same layout/shape."""
    w1, b1, g1, be1, w2, b2, g2, be2 = params
    N, C, D, H, W = x_ncdhw.shape
    K = kernel_size
    P = K // 2
    Hp, Wp = H + 2 * P, W + 2 * P
    WpC = Wp * C
    DHp = D * Hp
    dims = (C, D, H, W, K)
    count = float(N * D * H * W)

    # layout plumbing (fused into the same jit): NCDHW -> rows=(d, h_pad),
    # lanes=(w_pad, c); h padded low-corner (end), w centred.
    xt = jnp.transpose(x_ncdhw, (0, 2, 3, 4, 1)).astype(jnp.float32)
    xc = jnp.pad(xt, ((0, 0), (0, 0), (0, 2 * P), (P, P), (0, 0))).reshape(N, DHp, WpC)

    wcol1 = _band_weights(w1, C, W, Wp, P, K)
    wcol2 = _band_weights(w2, C, W, Wp, P, K)
    brow = lambda b: jnp.tile(jnp.asarray(b, jnp.float32), Wp).reshape(1, WpC)

    z1, st1 = _conv_stage(xc.astype(jnp.bfloat16), wcol1, brow(b1), dims)
    scale1, shift1 = _bn_scale_shift(st1, g1, be1, count, Wp, C)
    z2, st2 = _conv_stage(z1, wcol2, brow(b2), dims, scale1, shift1)
    scale2, shift2 = _bn_scale_shift(st2, g2, be2, count, Wp, C)
    out2d = _bn_act(z2, scale2, shift2, xc if skip_leak else None, dims)

    out = out2d.reshape(N, D, Hp, Wp, C)[:, :, :H, P:P + W, :]
    return jnp.transpose(out, (0, 4, 1, 2, 3))


def conv_skip_bloc_forward(skips, params, kernel_size, skip_leak=False):
    """ConvSkipBloc.forward: one DoubleConvBlock per skip connection."""
    return [double_conv_block_pallas(s, p, kernel_size=kernel_size,
                                     skip_leak=skip_leak)
            for s, p in zip(skips, params)]


def _init_params(key, num_channels_list, kernel_size):
    """Deterministic synthetic parameters (conv weights/bias, BN gamma/beta)."""
    K = kernel_size
    params = []
    for ch in num_channels_list:
        key, kw1, kb1, kg1, kbe1, kw2, kb2, kg2, kbe2 = jax.random.split(key, 9)
        bound = float(ch * K * K * K) ** -0.5
        u = lambda k, s, lo, hi: jax.random.uniform(k, s, jnp.float32, lo, hi)
        params.append((
            u(kw1, (K, K, K, ch, ch), -bound, bound), u(kb1, (ch,), -bound, bound),
            u(kg1, (ch,), 0.5, 1.5), u(kbe1, (ch,), -0.5, 0.5),
            u(kw2, (K, K, K, ch, ch), -bound, bound), u(kb2, (ch,), -bound, bound),
            u(kg2, (ch,), 0.5, 1.5), u(kbe2, (ch,), -0.5, 0.5),
        ))
    return params


def _reference_double_conv(x_ncdhw, params, skip_leak=False):
    """Pure-JAX reference (training-mode BN, SAME conv, bf16 MXU operands)."""
    w1, b1, g1, be1, w2, b2, g2, be2 = params
    x = jnp.transpose(x_ncdhw, (0, 2, 3, 4, 1)).astype(jnp.float32)   # NDHWC

    def conv3d(a, w, b):
        y = lax.conv_general_dilated(
            a.astype(jnp.bfloat16), jnp.asarray(w, jnp.bfloat16), (1, 1, 1),
            'SAME', dimension_numbers=('NDHWC', 'DHWIO', 'NDHWC'),
            preferred_element_type=jnp.float32)
        return y + b

    def bn_relu(z, g, be):
        mean = jnp.mean(z, axis=(0, 1, 2, 3), keepdims=True)
        var = jnp.mean((z - mean) ** 2, axis=(0, 1, 2, 3), keepdims=True)
        return jnp.maximum((z - mean) * lax.rsqrt(var + BN_EPS) * g + be, 0.0)

    y = bn_relu(conv3d(x, w1, b1), g1, be1)
    y = bn_relu(conv3d(y, w2, b2), g2, be2)
    if skip_leak:
        y = y + x
    return jnp.transpose(y, (0, 4, 1, 2, 3))


if __name__ == "__main__":
    root = jax.random.PRNGKey(0)
    pkey, xkey = jax.random.split(root)

    num_channels_list = [4, 8]
    kernel_size = 3
    params = _init_params(pkey, num_channels_list, kernel_size)

    xk1, xk2 = jax.random.split(xkey)
    skips = [jax.random.normal(xk1, (2, 4, 6, 6, 6), jnp.float32),   # (N, C, D, H, W)
             jax.random.normal(xk2, (2, 8, 4, 4, 4), jnp.float32)]

    for leak in (False, True):
        outs = conv_skip_bloc_forward(skips, params, kernel_size, skip_leak=leak)
        outs = jax.block_until_ready(outs)
        for s, p, o in zip(skips, params, outs):
            ref = _reference_double_conv(s, p, skip_leak=leak)
            err = float(jnp.max(jnp.abs(o - ref)))
            # both kernel and reference use bf16 MXU operands with f32 accumulation
            assert o.shape == s.shape and err < 2e-2, f"mismatch: {err}"
    print("KERNEL_OK")
</pallas_src>

<mosaic_0001>
module attributes {stable_mosaic.version = 11 : i64} {
  func.func @_conv_stage_kernel(%arg0: i32, %arg1: memref<1x48x32xbf16, #tpu.memory_space<vmem>>, %arg2: memref<288x32xbf16, #tpu.memory_space<vmem>>, %arg3: memref<1x32xf32, #tpu.memory_space<vmem>>, %arg4: memref<1x48x32xf32, #tpu.memory_space<vmem>>, %arg5: memref<1x2x32xf32, #tpu.memory_space<vmem>>, %arg6: memref<64x32xbf16, #tpu.memory_space<vmem>>, %arg7: memref<46x288xbf16, #tpu.memory_space<vmem>>) attributes {dimension_semantics = [#tpu.dimension_semantics<parallel>], iteration_bounds = array<i64: 2>, scalar_prefetch = 0 : i64, scratch_operands = 2 : i64, tpu.core_type = #tpu.core_type<tc>, window_params = [{transform_indices = @transform_0, window_bounds = array<i64: 1, 48, 32>}, {pipeline_mode = #tpu.pipeline_mode<synchronous>, transform_indices = @transform_1, window_bounds = array<i64: 288, 32>}, {pipeline_mode = #tpu.pipeline_mode<synchronous>, transform_indices = @transform_2, window_bounds = array<i64: 1, 32>}, {transform_indices = @transform_3, window_bounds = array<i64: 1, 48, 32>}, {transform_indices = @transform_4, window_bounds = array<i64: 1, 2, 32>}]} {
    %0 = tpu.iota {dimensions = array<i32: 0>} : vector<46x1xi32>
    %false = arith.constant false
    %1 = vector.broadcast %false : i1 to vector<46x1xi1>
    %c0_i32 = arith.constant 0 : i32
    %2 = vector.broadcast %c0_i32 : i32 to vector<46x1xi32>
    %3 = arith.cmpi sge, %0, %2 : vector<46x1xi32>
    %c6_i32 = arith.constant 6 : i32
    %4 = vector.broadcast %c6_i32 : i32 to vector<46x1xi32>
    %5 = arith.cmpi slt, %0, %4 : vector<46x1xi32>
    %6 = arith.andi %3, %5 : vector<46x1xi1>
    %7 = arith.ori %1, %6 : vector<46x1xi1>
    %c8_i32 = arith.constant 8 : i32
    %8 = vector.broadcast %c8_i32 : i32 to vector<46x1xi32>
    %9 = arith.cmpi sge, %0, %8 : vector<46x1xi32>
    %c14_i32 = arith.constant 14 : i32
    %10 = vector.broadcast %c14_i32 : i32 to vector<46x1xi32>
    %11 = arith.cmpi slt, %0, %10 : vector<46x1xi32>
    %12 = arith.andi %9, %11 : vector<46x1xi1>
    %13 = arith.ori %7, %12 : vector<46x1xi1>
    %c16_i32 = arith.constant 16 : i32
    %14 = vector.broadcast %c16_i32 : i32 to vector<46x1xi32>
    %15 = arith.cmpi sge, %0, %14 : vector<46x1xi32>
    %c22_i32 = arith.constant 22 : i32
    %16 = vector.broadcast %c22_i32 : i32 to vector<46x1xi32>
    %17 = arith.cmpi slt, %0, %16 : vector<46x1xi32>
    %18 = arith.andi %15, %17 : vector<46x1xi1>
    %19 = arith.ori %13, %18 : vector<46x1xi1>
    %c24_i32 = arith.constant 24 : i32
    %20 = vector.broadcast %c24_i32 : i32 to vector<46x1xi32>
    %21 = arith.cmpi sge, %0, %20 : vector<46x1xi32>
    %c30_i32 = arith.constant 30 : i32
    %22 = vector.broadcast %c30_i32 : i32 to vector<46x1xi32>
    %23 = arith.cmpi slt, %0, %22 : vector<46x1xi32>
    %24 = arith.andi %21, %23 : vector<46x1xi1>
    %25 = arith.ori %19, %24 : vector<46x1xi1>
    %c32_i32 = arith.constant 32 : i32
    %26 = vector.broadcast %c32_i32 : i32 to vector<46x1xi32>
    %27 = arith.cmpi sge, %0, %26 : vector<46x1xi32>
    %c38_i32 = arith.constant 38 : i32
    %28 = vector.broadcast %c38_i32 : i32 to vector<46x1xi32>
    %29 = arith.cmpi slt, %0, %28 : vector<46x1xi32>
    %30 = arith.andi %27, %29 : vector<46x1xi1>
    %31 = arith.ori %25, %30 : vector<46x1xi1>
    %c40_i32 = arith.constant 40 : i32
    %32 = vector.broadcast %c40_i32 : i32 to vector<46x1xi32>
    %33 = arith.cmpi sge, %0, %32 : vector<46x1xi32>
    %c46_i32 = arith.constant 46 : i32
    %34 = vector.broadcast %c46_i32 : i32 to vector<46x1xi32>
    %35 = arith.cmpi slt, %0, %34 : vector<46x1xi32>
    %36 = arith.andi %33, %35 : vector<46x1xi1>
    %37 = arith.ori %31, %36 : vector<46x1xi1>
    %38 = tpu.iota {dimensions = array<i32: 1>} : vector<1x32xi32>
    %c4_i32 = arith.constant 4 : i32
    %39 = vector.broadcast %c4_i32 : i32 to vector<1x32xi32>
    %40 = arith.cmpi sge, %38, %39 : vector<1x32xi32>
    %c28_i32 = arith.constant 28 : i32
    %41 = vector.broadcast %c28_i32 : i32 to vector<1x32xi32>
    %42 = arith.cmpi slt, %38, %41 : vector<1x32xi32>
    %43 = arith.andi %40, %42 : vector<1x32xi1>
    %44 = vector.broadcast %37 : vector<46x1xi1> to vector<46x32xi1>
    %45 = vector.broadcast %43 : vector<1x32xi1> to vector<46x32xi1>
    %46 = arith.andi %44, %45 : vector<46x32xi1>
    %c0 = arith.constant 0 : index
    %c0_0 = arith.constant 0 : index
    %c0_1 = arith.constant 0 : index
    %47 = vector.load %arg1[%c0, %c0_0, %c0_1] : memref<1x48x32xbf16, #tpu.memory_space<vmem>>, vector<1x46x32xbf16>
    %48 = vector.shape_cast %47 : vector<1x46x32xbf16> to vector<46x32xbf16>
    %cst = arith.constant 0.000000e+00 : bf16
    %49 = vector.broadcast %cst : bf16 to vector<9x32xbf16>
    %c0_2 = arith.constant 0 : index
    %c0_3 = arith.constant 0 : index
    %50 = vector.load %arg6[%c0_2, %c0_3] : memref<64x32xbf16, #tpu.memory_space<vmem>>, vector<9x32xbf16>
    tpu.vector_store %arg6[%c0_2, %c0_3], %49 {strides = array<i32>} : memref<64x32xbf16, #tpu.memory_space<vmem>>, vector<9x32xbf16>,
    %cst_4 = arith.constant 0.000000e+00 : bf16
    %51 = vector.broadcast %cst_4 : bf16 to vector<9x32xbf16>
    %c55 = arith.constant 55 : index
    %c0_5 = arith.constant 0 : index
    %52 = vector.load %arg6[%c55, %c0_5] : memref<64x32xbf16, #tpu.memory_space<vmem>>, vector<9x32xbf16>
    tpu.vector_store %arg6[%c55, %c0_5], %51 {strides = array<i32>} : memref<64x32xbf16, #tpu.memory_space<vmem>>, vector<9x32xbf16>,
    %c9 = arith.constant 9 : index
    %c0_6 = arith.constant 0 : index
    %53 = vector.load %arg6[%c9, %c0_6] : memref<64x32xbf16, #tpu.memory_space<vmem>>, vector<46x32xbf16>
    tpu.vector_store %arg6[%c9, %c0_6], %48 {strides = array<i32>} : memref<64x32xbf16, #tpu.memory_space<vmem>>, vector<46x32xbf16>,
    %c0_7 = arith.constant 0 : index
    %c0_8 = arith.constant 0 : index
    %54 = vector.load %arg6[%c0_7, %c0_8] : memref<64x32xbf16, #tpu.memory_space<vmem>>, vector<46x32xbf16>
    %c0_9 = arith.constant 0 : index
    %c0_10 = arith.constant 0 : index
    %55 = vector.load %arg7[%c0_9, %c0_10] : memref<46x288xbf16, #tpu.memory_space<vmem>>, vector<46x32xbf16>
    tpu.vector_store %arg7[%c0_9, %c0_10], %54 {strides = array<i32>} : memref<46x288xbf16, #tpu.memory_space<vmem>>, vector<46x32xbf16>,
    %c1 = arith.constant 1 : index
    %c0_11 = arith.constant 0 : index
    %56 = vector.load %arg6[%c1, %c0_11] : memref<64x32xbf16, #tpu.memory_space<vmem>>, vector<46x32xbf16>
    %c0_12 = arith.constant 0 : index
    %c32 = arith.constant 32 : index
    %57 = vector.load %arg7[%c0_12, %c32] : memref<46x288xbf16, #tpu.memory_space<vmem>>, vector<46x32xbf16>
    tpu.vector_store %arg7[%c0_12, %c32], %56 {strides = array<i32>} : memref<46x288xbf16, #tpu.memory_space<vmem>>, vector<46x32xbf16>,
    %c2 = arith.constant 2 : index
    %c0_13 = arith.constant 0 : index
    %58 = vector.load %arg6[%c2, %c0_13] : memref<64x32xbf16, #tpu.memory_space<vmem>>, vector<46x32xbf16>
    %c0_14 = arith.constant 0 : index
    %c64 = arith.constant 64 : index
    %59 = vector.load %arg7[%c0_14, %c64] : memref<46x288xbf16, #tpu.memory_space<vmem>>, vector<46x32xbf16>
    tpu.vector_store %arg7[%c0_14, %c64], %58 {strides = array<i32>} : memref<46x288xbf16, #tpu.memory_space<vmem>>, vector<46x32xbf16>,
    %c8 = arith.constant 8 : index
    %c0_15 = arith.constant 0 : index
    %60 = vector.load %arg6[%c8, %c0_15] : memref<64x32xbf16, #tpu.memory_space<vmem>>, vector<46x32xbf16>
    %c0_16 = arith.constant 0 : index
    %c96 = arith.constant 96 : index
    %61 = vector.load %arg7[%c0_16, %c96] : memref<46x288xbf16, #tpu.memory_space<vmem>>, vector<46x32xbf16>
    tpu.vector_store %arg7[%c0_16, %c96], %60 {strides = array<i32>} : memref<46x288xbf16, #tpu.memory_space<vmem>>, vector<46x32xbf16>,
    %c9_17 = arith.constant 9 : index
    %c0_18 = arith.constant 0 : index
    %62 = vector.load %arg6[%c9_17, %c0_18] : memref<64x32xbf16, #tpu.memory_space<vmem>>, vector<46x32xbf16>
    %c0_19 = arith.constant 0 : index
    %c128 = arith.constant 128 : index
    %63 = vector.load %arg7[%c0_19, %c128] : memref<46x288xbf16, #tpu.memory_space<vmem>>, vector<46x32xbf16>
    tpu.vector_store %arg7[%c0_19, %c128], %62 {strides = array<i32>} : memref<46x288xbf16, #tpu.memory_space<vmem>>, vector<46x32xbf16>,
    %c10 = arith.constant 10 : index
    %c0_20 = arith.constant 0 : index
    %64 = vector.load %arg6[%c10, %c0_20] : memref<64x32xbf16, #tpu.memory_space<vmem>>, vector<46x32xbf16>
    %c0_21 = arith.constant 0 : index
    %c160 = arith.constant 160 : index
    %65 = vector.load %arg7[%c0_21, %c160] : memref<46x288xbf16, #tpu.memory_space<vmem>>, vector<46x32xbf16>
    tpu.vector_store %arg7[%c0_21, %c160], %64 {strides = array<i32>} : memref<46x288xbf16, #tpu.memory_space<vmem>>, vector<46x32xbf16>,
    %c16 = arith.constant 16 : index
    %c0_22 = arith.constant 0 : index
    %66 = vector.load %arg6[%c16, %c0_22] : memref<64x32xbf16, #tpu.memory_space<vmem>>, vector<46x32xbf16>
    %c0_23 = arith.constant 0 : index
    %c192 = arith.constant 192 : index
    %67 = vector.load %arg7[%c0_23, %c192] : memref<46x288xbf16, #tpu.memory_space<vmem>>, vector<46x32xbf16>
    tpu.vector_store %arg7[%c0_23, %c192], %66 {strides = array<i32>} : memref<46x288xbf16, #tpu.memory_space<vmem>>, vector<46x32xbf16>,
    %c17 = arith.constant 17 : index
    %c0_24 = arith.constant 0 : index
    %68 = vector.load %arg6[%c17, %c0_24] : memref<64x32xbf16, #tpu.memory_space<vmem>>, vector<46x32xbf16>
    %c0_25 = arith.constant 0 : index
    %c224 = arith.constant 224 : index
    %69 = vector.load %arg7[%c0_25, %c224] : memref<46x288xbf16, #tpu.memory_space<vmem>>, vector<46x32xbf16>
    tpu.vector_store %arg7[%c0_25, %c224], %68 {strides = array<i32>} : memref<46x288xbf16, #tpu.memory_space<vmem>>, vector<46x32xbf16>,
    %c18 = arith.constant 18 : index
    %c0_26 = arith.constant 0 : index
    %70 = vector.load %arg6[%c18, %c0_26] : memref<64x32xbf16, #tpu.memory_space<vmem>>, vector<46x32xbf16>
    %c0_27 = arith.constant 0 : index
    %c256 = arith.constant 256 : index
    %71 = vector.load %arg7[%c0_27, %c256] : memref<46x288xbf16, #tpu.memory_space<vmem>>, vector<46x32xbf16>
    tpu.vector_store %arg7[%c0_27, %c256], %70 {strides = array<i32>} : memref<46x288xbf16, #tpu.memory_space<vmem>>, vector<46x32xbf16>,
    %c0_28 = arith.constant 0 : index
    %c0_29 = arith.constant 0 : index
    %72 = vector.load %arg7[%c0_28, %c0_29] : memref<46x288xbf16, #tpu.memory_space<vmem>>, vector<46x288xbf16>
    %c0_30 = arith.constant 0 : index
    %c0_31 = arith.constant 0 : index
    %73 = vector.load %arg2[%c0_30, %c0_31] : memref<288x32xbf16, #tpu.memory_space<vmem>>, vector<288x32xbf16>
    %cst_32 = arith.constant dense<0.000000e+00> : vector<46x32xf32>
    %74 = tpu.matmul %72, %73, %cst_32 {dimension_numbers = #tpu.dot_dimension_numbers<[1], [0], [0], [1], [0, 0, 1, 1], [], []>} : vector<46x288xbf16>, vector<288x32xbf16>, vector<46x32xf32> -> vector<46x32xf32>
    %c0_33 = arith.constant 0 : index
    %c0_34 = arith.constant 0 : index
    %75 = vector.load %arg3[%c0_33, %c0_34] : memref<1x32xf32, #tpu.memory_space<vmem>>, vector<1x32xf32>
    %76 = vector.broadcast %75 : vector<1x32xf32> to vector<46x32xf32>
    %77 = arith.addf %74, %76 : vector<46x32xf32>
    %c0_35 = arith.constant 0 : index
    %c0_36 = arith.constant 0 : index
    %c0_37 = arith.constant 0 : index
    %78 = vector.load %arg4[%c0_35, %c0_36, %c0_37] : memref<1x48x32xf32, #tpu.memory_space<vmem>>, vector<1x46x32xf32>
    %79 = vector.shape_cast %78 : vector<1x46x32xf32> to vector<46x32xf32>
    %80 = vector.shape_cast %77 : vector<46x32xf32> to vector<1x46x32xf32>
    tpu.vector_store %arg4[%c0_35, %c0_36, %c0_37], %80 {strides = array<i32>} : memref<1x48x32xf32, #tpu.memory_space<vmem>>, vector<1x46x32xf32>,
    %cst_38 = arith.constant 0.000000e+00 : f32
    %81 = vector.broadcast %cst_38 : f32 to vector<46x32xf32>
    %82 = arith.select %46, %77, %81 : vector<46x32xi1>, vector<46x32xf32>
    %cst_39 = arith.constant dense<0.000000e+00> : vector<32xf32>
    %83 = vector.multi_reduction <add>, %82, %cst_39 [0] : vector<46x32xf32> to vector<32xf32>
    %84 = vector.shape_cast %83 : vector<32xf32> to vector<1x32xf32>
    %c0_40 = arith.constant 0 : index
    %c0_41 = arith.constant 0 : index
    %c0_42 = arith.constant 0 : index
    %85 = vector.load %arg5[%c0_40, %c0_41, %c0_42] : memref<1x2x32xf32, #tpu.memory_space<vmem>>, vector<1x1x32xf32>
    %86 = vector.shape_cast %85 : vector<1x1x32xf32> to vector<1x32xf32>
    %87 = vector.shape_cast %84 : vector<1x32xf32> to vector<1x1x32xf32>
    tpu.vector_store %arg5[%c0_40, %c0_41, %c0_42], %87 {strides = array<i32>} : memref<1x2x32xf32, #tpu.memory_space<vmem>>, vector<1x1x32xf32>,
    %88 = arith.mulf %82, %82 : vector<46x32xf32>
    %cst_43 = arith.constant dense<0.000000e+00> : vector<32xf32>
    %89 = vector.multi_reduction <add>, %88, %cst_43 [0] : vector<46x32xf32> to vector<32xf32>
    %90 = vector.shape_cast %89 : vector<32xf32> to vector<1x32xf32>
    %c0_44 = arith.constant 0 : index
    %c1_45 = arith.constant 1 : index
    %c0_46 = arith.constant 0 : index
    %91 = vector.load %arg5[%c0_44, %c1_45, %c0_46] : memref<1x2x32xf32, #tpu.memory_space<vmem>>, vector<1x1x32xf32>
    %92 = vector.shape_cast %91 : vector<1x1x32xf32> to vector<1x32xf32>
    %93 = vector.shape_cast %90 : vector<1x32xf32> to vector<1x1x32xf32>
    tpu.vector_store %arg5[%c0_44, %c1_45, %c0_46], %93 {strides = array<i32>} : memref<1x2x32xf32, #tpu.memory_space<vmem>>, vector<1x1x32xf32>,
    return
  }
  func.func @transform_0(%arg0: i32) -> (i32, i32, i32) {
    %c0_i32 = arith.constant 0 : i32
    %c0_i32_0 = arith.constant 0 : i32
    %c0_i32_1 = arith.constant 0 : i32
    return %arg0, %c0_i32, %c0_i32_0 : i32, i32, i32
  }
  func.func @transform_1(%arg0: i32) -> (i32, i32) {
    %c0_i32 = arith.constant 0 : i32
    %c0_i32_0 = arith.constant 0 : i32
    %c0_i32_1 = arith.constant 0 : i32
    return %c0_i32, %c0_i32_0 : i32, i32
  }
  func.func @transform_2(%arg0: i32) -> (i32, i32) {
    %c0_i32 = arith.constant 0 : i32
    %c0_i32_0 = arith.constant 0 : i32
    %c0_i32_1 = arith.constant 0 : i32
    return %c0_i32, %c0_i32_0 : i32, i32
  }
  func.func @transform_3(%arg0: i32) -> (i32, i32, i32) {
    %c0_i32 = arith.constant 0 : i32
    %c0_i32_0 = arith.constant 0 : i32
    %c0_i32_1 = arith.constant 0 : i32
    return %arg0, %c0_i32, %c0_i32_0 : i32, i32, i32
  }
  func.func @transform_4(%arg0: i32) -> (i32, i32, i32) {
    %c0_i32 = arith.constant 0 : i32
    %c0_i32_0 = arith.constant 0 : i32
    %c0_i32_1 = arith.constant 0 : i32
    return %arg0, %c0_i32, %c0_i32_0 : i32, i32, i32
  }
}

module attributes {stable_mosaic.version = 11 : i64} {
  func.func @_bn_act_kernel(%arg0: i32, %arg1: memref<1x48x32xf32, #tpu.memory_space<vmem>>, %arg2: memref<1x32xf32, #tpu.memory_space<vmem>>, %arg3: memref<1x32xf32, #tpu.memory_space<vmem>>, %arg4: memref<1x48x32xf32, #tpu.memory_space<vmem>>) attributes {dimension_semantics = [#tpu.dimension_semantics<parallel>], iteration_bounds = array<i64: 2>, scalar_prefetch = 0 : i64, scratch_operands = 0 : i64, tpu.core_type = #tpu.core_type<tc>, window_params = [{transform_indices = @transform_0, window_bounds = array<i64: 1, 48, 32>}, {pipeline_mode = #tpu.pipeline_mode<synchronous>, transform_indices = @transform_1, window_bounds = array<i64: 1, 32>}, {pipeline_mode = #tpu.pipeline_mode<synchronous>, transform_indices = @transform_2, window_bounds = array<i64: 1, 32>}, {transform_indices = @transform_3, window_bounds = array<i64: 1, 48, 32>}]} {
    %c0 = arith.constant 0 : index
    %c0_0 = arith.constant 0 : index
    %c0_1 = arith.constant 0 : index
    %0 = vector.load %arg1[%c0, %c0_0, %c0_1] : memref<1x48x32xf32, #tpu.memory_space<vmem>>, vector<1x48x32xf32>
    %1 = vector.shape_cast %0 : vector<1x48x32xf32> to vector<48x32xf32>
    %c0_2 = arith.constant 0 : index
    %c0_3 = arith.constant 0 : index
    %2 = vector.load %arg2[%c0_2, %c0_3] : memref<1x32xf32, #tpu.memory_space<vmem>>, vector<1x32xf32>
    %3 = vector.broadcast %2 : vector<1x32xf32> to vector<48x32xf32>
    %4 = arith.mulf %1, %3 : vector<48x32xf32>
    %c0_4 = arith.constant 0 : index
    %c0_5 = arith.constant 0 : index
    %5 = vector.load %arg3[%c0_4, %c0_5] : memref<1x32xf32, #tpu.memory_space<vmem>>, vector<1x32xf32>
    %6 = vector.broadcast %5 : vector<1x32xf32> to vector<48x32xf32>
    %7 = arith.addf %4, %6 : vector<48x32xf32>
    %cst = arith.constant 0.000000e+00 : f32
    %8 = vector.broadcast %cst : f32 to vector<48x32xf32>
    %9 = arith.maximumf %7, %8 : vector<48x32xf32>
    %c0_6 = arith.constant 0 : index
    %c0_7 = arith.constant 0 : index
    %c0_8 = arith.constant 0 : index
    %10 = vector.load %arg4[%c0_6, %c0_7, %c0_8] : memref<1x48x32xf32, #tpu.memory_space<vmem>>, vector<1x48x32xf32>
    %11 = vector.shape_cast %10 : vector<1x48x32xf32> to vector<48x32xf32>
    %12 = vector.shape_cast %9 : vector<48x32xf32> to vector<1x48x32xf32>
    tpu.vector_store %arg4[%c0_6, %c0_7, %c0_8], %12 {strides = array<i32>} : memref<1x48x32xf32, #tpu.memory_space<vmem>>, vector<1x48x32xf32>,
    return
  }
  func.func @transform_0(%arg0: i32) -> (i32, i32, i32) {
    %c0_i32 = arith.constant 0 : i32
    %c0_i32_0 = arith.constant 0 : i32
    %c0_i32_1 = arith.constant 0 : i32
    return %arg0, %c0_i32, %c0_i32_0 : i32, i32, i32
  }
  func.func @transform_1(%arg0: i32) -> (i32, i32) {
    %c0_i32 = arith.constant 0 : i32
    %c0_i32_0 = arith.constant 0 : i32
    %c0_i32_1 = arith.constant 0 : i32
    return %c0_i32, %c0_i32_0 : i32, i32
  }
  func.func @transform_2(%arg0: i32) -> (i32, i32) {
    %c0_i32 = arith.constant 0 : i32
    %c0_i32_0 = arith.constant 0 : i32
    %c0_i32_1 = arith.constant 0 : i32
    return %c0_i32, %c0_i32_0 : i32, i32
  }
  func.func @transform_3(%arg0: i32) -> (i32, i32, i32) {
    %c0_i32 = arith.constant 0 : i32
    %c0_i32_0 = arith.constant 0 : i32
    %c0_i32_1 = arith.constant 0 : i32
    return %arg0, %c0_i32, %c0_i32_0 : i32, i32, i32
  }
}

module attributes {stable_mosaic.version = 11 : i64} {
  func.func @_conv_stage_kernel(%arg0: i32, %arg1: memref<1x48x32xf32, #tpu.memory_space<vmem>>, %arg2: memref<288x32xbf16, #tpu.memory_space<vmem>>, %arg3: memref<1x32xf32, #tpu.memory_space<vmem>>, %arg4: memref<1x32xf32, #tpu.memory_space<vmem>>, %arg5: memref<1x32xf32, #tpu.memory_space<vmem>>, %arg6: memref<1x48x32xf32, #tpu.memory_space<vmem>>, %arg7: memref<1x2x32xf32, #tpu.memory_space<vmem>>, %arg8: memref<64x32xbf16, #tpu.memory_space<vmem>>, %arg9: memref<46x288xbf16, #tpu.memory_space<vmem>>) attributes {dimension_semantics = [#tpu.dimension_semantics<parallel>], iteration_bounds = array<i64: 2>, scalar_prefetch = 0 : i64, scratch_operands = 2 : i64, tpu.core_type = #tpu.core_type<tc>, window_params = [{transform_indices = @transform_0, window_bounds = array<i64: 1, 48, 32>}, {pipeline_mode = #tpu.pipeline_mode<synchronous>, transform_indices = @transform_1, window_bounds = array<i64: 288, 32>}, {pipeline_mode = #tpu.pipeline_mode<synchronous>, transform_indices = @transform_2, window_bounds = array<i64: 1, 32>}, {pipeline_mode = #tpu.pipeline_mode<synchronous>, transform_indices = @transform_3, window_bounds = array<i64: 1, 32>}, {pipeline_mode = #tpu.pipeline_mode<synchronous>, transform_indices = @transform_4, window_bounds = array<i64: 1, 32>}, {transform_indices = @transform_5, window_bounds = array<i64: 1, 48, 32>}, {transform_indices = @transform_6, window_bounds = array<i64: 1, 2, 32>}]} {
    %0 = tpu.iota {dimensions = array<i32: 0>} : vector<46x1xi32>
    %false = arith.constant false
    %1 = vector.broadcast %false : i1 to vector<46x1xi1>
    %c0_i32 = arith.constant 0 : i32
    %2 = vector.broadcast %c0_i32 : i32 to vector<46x1xi32>
    %3 = arith.cmpi sge, %0, %2 : vector<46x1xi32>
    %c6_i32 = arith.constant 6 : i32
    %4 = vector.broadcast %c6_i32 : i32 to vector<46x1xi32>
    %5 = arith.cmpi slt, %0, %4 : vector<46x1xi32>
    %6 = arith.andi %3, %5 : vector<46x1xi1>
    %7 = arith.ori %1, %6 : vector<46x1xi1>
    %c8_i32 = arith.constant 8 : i32
    %8 = vector.broadcast %c8_i32 : i32 to vector<46x1xi32>
    %9 = arith.cmpi sge, %0, %8 : vector<46x1xi32>
    %c14_i32 = arith.constant 14 : i32
    %10 = vector.broadcast %c14_i32 : i32 to vector<46x1xi32>
    %11 = arith.cmpi slt, %0, %10 : vector<46x1xi32>
    %12 = arith.andi %9, %11 : vector<46x1xi1>
    %13 = arith.ori %7, %12 : vector<46x1xi1>
    %c16_i32 = arith.constant 16 : i32
    %14 = vector.broadcast %c16_i32 : i32 to vector<46x1xi32>
    %15 = arith.cmpi sge, %0, %14 : vector<46x1xi32>
    %c22_i32 = arith.constant 22 : i32
    %16 = vector.broadcast %c22_i32 : i32 to vector<46x1xi32>
    %17 = arith.cmpi slt, %0, %16 : vector<46x1xi32>
    %18 = arith.andi %15, %17 : vector<46x1xi1>
    %19 = arith.ori %13, %18 : vector<46x1xi1>
    %c24_i32 = arith.constant 24 : i32
    %20 = vector.broadcast %c24_i32 : i32 to vector<46x1xi32>
    %21 = arith.cmpi sge, %0, %20 : vector<46x1xi32>
    %c30_i32 = arith.constant 30 : i32
    %22 = vector.broadcast %c30_i32 : i32 to vector<46x1xi32>
    %23 = arith.cmpi slt, %0, %22 : vector<46x1xi32>
    %24 = arith.andi %21, %23 : vector<46x1xi1>
    %25 = arith.ori %19, %24 : vector<46x1xi1>
    %c32_i32 = arith.constant 32 : i32
    %26 = vector.broadcast %c32_i32 : i32 to vector<46x1xi32>
    %27 = arith.cmpi sge, %0, %26 : vector<46x1xi32>
    %c38_i32 = arith.constant 38 : i32
    %28 = vector.broadcast %c38_i32 : i32 to vector<46x1xi32>
    %29 = arith.cmpi slt, %0, %28 : vector<46x1xi32>
    %30 = arith.andi %27, %29 : vector<46x1xi1>
    %31 = arith.ori %25, %30 : vector<46x1xi1>
    %c40_i32 = arith.constant 40 : i32
    %32 = vector.broadcast %c40_i32 : i32 to vector<46x1xi32>
    %33 = arith.cmpi sge, %0, %32 : vector<46x1xi32>
    %c46_i32 = arith.constant 46 : i32
    %34 = vector.broadcast %c46_i32 : i32 to vector<46x1xi32>
    %35 = arith.cmpi slt, %0, %34 : vector<46x1xi32>
    %36 = arith.andi %33, %35 : vector<46x1xi1>
    %37 = arith.ori %31, %36 : vector<46x1xi1>
    %38 = tpu.iota {dimensions = array<i32: 1>} : vector<1x32xi32>
    %c4_i32 = arith.constant 4 : i32
    %39 = vector.broadcast %c4_i32 : i32 to vector<1x32xi32>
    %40 = arith.cmpi sge, %38, %39 : vector<1x32xi32>
    %c28_i32 = arith.constant 28 : i32
    %41 = vector.broadcast %c28_i32 : i32 to vector<1x32xi32>
    %42 = arith.cmpi slt, %38, %41 : vector<1x32xi32>
    %43 = arith.andi %40, %42 : vector<1x32xi1>
    %44 = vector.broadcast %37 : vector<46x1xi1> to vector<46x32xi1>
    %45 = vector.broadcast %43 : vector<1x32xi1> to vector<46x32xi1>
    %46 = arith.andi %44, %45 : vector<46x32xi1>
    %c0 = arith.constant 0 : index
    %c0_0 = arith.constant 0 : index
    %c0_1 = arith.constant 0 : index
    %47 = vector.load %arg1[%c0, %c0_0, %c0_1] : memref<1x48x32xf32, #tpu.memory_space<vmem>>, vector<1x46x32xf32>
    %48 = vector.shape_cast %47 : vector<1x46x32xf32> to vector<46x32xf32>
    %c0_2 = arith.constant 0 : index
    %c0_3 = arith.constant 0 : index
    %49 = vector.load %arg4[%c0_2, %c0_3] : memref<1x32xf32, #tpu.memory_space<vmem>>, vector<1x32xf32>
    %50 = vector.broadcast %49 : vector<1x32xf32> to vector<46x32xf32>
    %51 = arith.mulf %48, %50 : vector<46x32xf32>
    %c0_4 = arith.constant 0 : index
    %c0_5 = arith.constant 0 : index
    %52 = vector.load %arg5[%c0_4, %c0_5] : memref<1x32xf32, #tpu.memory_space<vmem>>, vector<1x32xf32>
    %53 = vector.broadcast %52 : vector<1x32xf32> to vector<46x32xf32>
    %54 = arith.addf %51, %53 : vector<46x32xf32>
    %cst = arith.constant 0.000000e+00 : f32
    %55 = vector.broadcast %cst : f32 to vector<46x32xf32>
    %56 = arith.maximumf %54, %55 : vector<46x32xf32>
    %cst_6 = arith.constant 0.000000e+00 : f32
    %57 = vector.broadcast %cst_6 : f32 to vector<46x32xf32>
    %58 = arith.select %46, %56, %57 : vector<46x32xi1>, vector<46x32xf32>
    %59 = arith.truncf %58 : vector<46x32xf32> to vector<46x32xbf16>
    %cst_7 = arith.constant 0.000000e+00 : bf16
    %60 = vector.broadcast %cst_7 : bf16 to vector<9x32xbf16>
    %c0_8 = arith.constant 0 : index
    %c0_9 = arith.constant 0 : index
    %61 = vector.load %arg8[%c0_8, %c0_9] : memref<64x32xbf16, #tpu.memory_space<vmem>>, vector<9x32xbf16>
    tpu.vector_store %arg8[%c0_8, %c0_9], %60 {strides = array<i32>} : memref<64x32xbf16, #tpu.memory_space<vmem>>, vector<9x32xbf16>,
    %cst_10 = arith.constant 0.000000e+00 : bf16
    %62 = vector.broadcast %cst_10 : bf16 to vector<9x32xbf16>
    %c55 = arith.constant 55 : index
    %c0_11 = arith.constant 0 : index
    %63 = vector.load %arg8[%c55, %c0_11] : memref<64x32xbf16, #tpu.memory_space<vmem>>, vector<9x32xbf16>
    tpu.vector_store %arg8[%c55, %c0_11], %62 {strides = array<i32>} : memref<64x32xbf16, #tpu.memory_space<vmem>>, vector<9x32xbf16>,
    %c9 = arith.constant 9 : index
    %c0_12 = arith.constant 0 : index
    %64 = vector.load %arg8[%c9, %c0_12] : memref<64x32xbf16, #tpu.memory_space<vmem>>, vector<46x32xbf16>
    tpu.vector_store %arg8[%c9, %c0_12], %59 {strides = array<i32>} : memref<64x32xbf16, #tpu.memory_space<vmem>>, vector<46x32xbf16>,
    %c0_13 = arith.constant 0 : index
    %c0_14 = arith.constant 0 : index
    %65 = vector.load %arg8[%c0_13, %c0_14] : memref<64x32xbf16, #tpu.memory_space<vmem>>, vector<46x32xbf16>
    %c0_15 = arith.constant 0 : index
    %c0_16 = arith.constant 0 : index
    %66 = vector.load %arg9[%c0_15, %c0_16] : memref<46x288xbf16, #tpu.memory_space<vmem>>, vector<46x32xbf16>
    tpu.vector_store %arg9[%c0_15, %c0_16], %65 {strides = array<i32>} : memref<46x288xbf16, #tpu.memory_space<vmem>>, vector<46x32xbf16>,
    %c1 = arith.constant 1 : index
    %c0_17 = arith.constant 0 : index
    %67 = vector.load %arg8[%c1, %c0_17] : memref<64x32xbf16, #tpu.memory_space<vmem>>, vector<46x32xbf16>
    %c0_18 = arith.constant 0 : index
    %c32 = arith.constant 32 : index
    %68 = vector.load %arg9[%c0_18, %c32] : memref<46x288xbf16, #tpu.memory_space<vmem>>, vector<46x32xbf16>
    tpu.vector_store %arg9[%c0_18, %c32], %67 {strides = array<i32>} : memref<46x288xbf16, #tpu.memory_space<vmem>>, vector<46x32xbf16>,
    %c2 = arith.constant 2 : index
    %c0_19 = arith.constant 0 : index
    %69 = vector.load %arg8[%c2, %c0_19] : memref<64x32xbf16, #tpu.memory_space<vmem>>, vector<46x32xbf16>
    %c0_20 = arith.constant 0 : index
    %c64 = arith.constant 64 : index
    %70 = vector.load %arg9[%c0_20, %c64] : memref<46x288xbf16, #tpu.memory_space<vmem>>, vector<46x32xbf16>
    tpu.vector_store %arg9[%c0_20, %c64], %69 {strides = array<i32>} : memref<46x288xbf16, #tpu.memory_space<vmem>>, vector<46x32xbf16>,
    %c8 = arith.constant 8 : index
    %c0_21 = arith.constant 0 : index
    %71 = vector.load %arg8[%c8, %c0_21] : memref<64x32xbf16, #tpu.memory_space<vmem>>, vector<46x32xbf16>
    %c0_22 = arith.constant 0 : index
    %c96 = arith.constant 96 : index
    %72 = vector.load %arg9[%c0_22, %c96] : memref<46x288xbf16, #tpu.memory_space<vmem>>, vector<46x32xbf16>
    tpu.vector_store %arg9[%c0_22, %c96], %71 {strides = array<i32>} : memref<46x288xbf16, #tpu.memory_space<vmem>>, vector<46x32xbf16>,
    %c9_23 = arith.constant 9 : index
    %c0_24 = arith.constant 0 : index
    %73 = vector.load %arg8[%c9_23, %c0_24] : memref<64x32xbf16, #tpu.memory_space<vmem>>, vector<46x32xbf16>
    %c0_25 = arith.constant 0 : index
    %c128 = arith.constant 128 : index
    %74 = vector.load %arg9[%c0_25, %c128] : memref<46x288xbf16, #tpu.memory_space<vmem>>, vector<46x32xbf16>
    tpu.vector_store %arg9[%c0_25, %c128], %73 {strides = array<i32>} : memref<46x288xbf16, #tpu.memory_space<vmem>>, vector<46x32xbf16>,
    %c10 = arith.constant 10 : index
    %c0_26 = arith.constant 0 : index
    %75 = vector.load %arg8[%c10, %c0_26] : memref<64x32xbf16, #tpu.memory_space<vmem>>, vector<46x32xbf16>
    %c0_27 = arith.constant 0 : index
    %c160 = arith.constant 160 : index
    %76 = vector.load %arg9[%c0_27, %c160] : memref<46x288xbf16, #tpu.memory_space<vmem>>, vector<46x32xbf16>
    tpu.vector_store %arg9[%c0_27, %c160], %75 {strides = array<i32>} : memref<46x288xbf16, #tpu.memory_space<vmem>>, vector<46x32xbf16>,
    %c16 = arith.constant 16 : index
    %c0_28 = arith.constant 0 : index
    %77 = vector.load %arg8[%c16, %c0_28] : memref<64x32xbf16, #tpu.memory_space<vmem>>, vector<46x32xbf16>
    %c0_29 = arith.constant 0 : index
    %c192 = arith.constant 192 : index
    %78 = vector.load %arg9[%c0_29, %c192] : memref<46x288xbf16, #tpu.memory_space<vmem>>, vector<46x32xbf16>
    tpu.vector_store %arg9[%c0_29, %c192], %77 {strides = array<i32>} : memref<46x288xbf16, #tpu.memory_space<vmem>>, vector<46x32xbf16>,
    %c17 = arith.constant 17 : index
    %c0_30 = arith.constant 0 : index
    %79 = vector.load %arg8[%c17, %c0_30] : memref<64x32xbf16, #tpu.memory_space<vmem>>, vector<46x32xbf16>
    %c0_31 = arith.constant 0 : index
    %c224 = arith.constant 224 : index
    %80 = vector.load %arg9[%c0_31, %c224] : memref<46x288xbf16, #tpu.memory_space<vmem>>, vector<46x32xbf16>
    tpu.vector_store %arg9[%c0_31, %c224], %79 {strides = array<i32>} : memref<46x288xbf16, #tpu.memory_space<vmem>>, vector<46x32xbf16>,
    %c18 = arith.constant 18 : index
    %c0_32 = arith.constant 0 : index
    %81 = vector.load %arg8[%c18, %c0_32] : memref<64x32xbf16, #tpu.memory_space<vmem>>, vector<46x32xbf16>
    %c0_33 = arith.constant 0 : index
    %c256 = arith.constant 256 : index
    %82 = vector.load %arg9[%c0_33, %c256] : memref<46x288xbf16, #tpu.memory_space<vmem>>, vector<46x32xbf16>
    tpu.vector_store %arg9[%c0_33, %c256], %81 {strides = array<i32>} : memref<46x288xbf16, #tpu.memory_space<vmem>>, vector<46x32xbf16>,
    %c0_34 = arith.constant 0 : index
    %c0_35 = arith.constant 0 : index
    %83 = vector.load %arg9[%c0_34, %c0_35] : memref<46x288xbf16, #tpu.memory_space<vmem>>, vector<46x288xbf16>
    %c0_36 = arith.constant 0 : index
    %c0_37 = arith.constant 0 : index
    %84 = vector.load %arg2[%c0_36, %c0_37] : memref<288x32xbf16, #tpu.memory_space<vmem>>, vector<288x32xbf16>
    %cst_38 = arith.constant dense<0.000000e+00> : vector<46x32xf32>
    %85 = tpu.matmul %83, %84, %cst_38 {dimension_numbers = #tpu.dot_dimension_numbers<[1], [0], [0], [1], [0, 0, 1, 1], [], []>} : vector<46x288xbf16>, vector<288x32xbf16>, vector<46x32xf32> -> vector<46x32xf32>
    %c0_39 = arith.constant 0 : index
    %c0_40 = arith.constant 0 : index
    %86 = vector.load %arg3[%c0_39, %c0_40] : memref<1x32xf32, #tpu.memory_space<vmem>>, vector<1x32xf32>
    %87 = vector.broadcast %86 : vector<1x32xf32> to vector<46x32xf32>
    %88 = arith.addf %85, %87 : vector<46x32xf32>
    %c0_41 = arith.constant 0 : index
    %c0_42 = arith.constant 0 : index
    %c0_43 = arith.constant 0 : index
    %89 = vector.load %arg6[%c0_41, %c0_42, %c0_43] : memref<1x48x32xf32, #tpu.memory_space<vmem>>, vector<1x46x32xf32>
    %90 = vector.shape_cast %89 : vector<1x46x32xf32> to vector<46x32xf32>
    %91 = vector.shape_cast %88 : vector<46x32xf32> to vector<1x46x32xf32>
    tpu.vector_store %arg6[%c0_41, %c0_42, %c0_43], %91 {strides = array<i32>} : memref<1x48x32xf32, #tpu.memory_space<vmem>>, vector<1x46x32xf32>,
    %cst_44 = arith.constant 0.000000e+00 : f32
    %92 = vector.broadcast %cst_44 : f32 to vector<46x32xf32>
    %93 = arith.select %46, %88, %92 : vector<46x32xi1>, vector<46x32xf32>
    %cst_45 = arith.constant dense<0.000000e+00> : vector<32xf32>
    %94 = vector.multi_reduction <add>, %93, %cst_45 [0] : vector<46x32xf32> to vector<32xf32>
    %95 = vector.shape_cast %94 : vector<32xf32> to vector<1x32xf32>
    %c0_46 = arith.constant 0 : index
    %c0_47 = arith.constant 0 : index
    %c0_48 = arith.constant 0 : index
    %96 = vector.load %arg7[%c0_46, %c0_47, %c0_48] : memref<1x2x32xf32, #tpu.memory_space<vmem>>, vector<1x1x32xf32>
    %97 = vector.shape_cast %96 : vector<1x1x32xf32> to vector<1x32xf32>
    %98 = vector.shape_cast %95 : vector<1x32xf32> to vector<1x1x32xf32>
    tpu.vector_store %arg7[%c0_46, %c0_47, %c0_48], %98 {strides = array<i32>} : memref<1x2x32xf32, #tpu.memory_space<vmem>>, vector<1x1x32xf32>,
    %99 = arith.mulf %93, %93 : vector<46x32xf32>
    %cst_49 = arith.constant dense<0.000000e+00> : vector<32xf32>
    %100 = vector.multi_reduction <add>, %99, %cst_49 [0] : vector<46x32xf32> to vector<32xf32>
    %101 = vector.shape_cast %100 : vector<32xf32> to vector<1x32xf32>
    %c0_50 = arith.constant 0 : index
    %c1_51 = arith.constant 1 : index
    %c0_52 = arith.constant 0 : index
    %102 = vector.load %arg7[%c0_50, %c1_51, %c0_52] : memref<1x2x32xf32, #tpu.memory_space<vmem>>, vector<1x1x32xf32>
    %103 = vector.shape_cast %102 : vector<1x1x32xf32> to vector<1x32xf32>
    %104 = vector.shape_cast %101 : vector<1x32xf32> to vector<1x1x32xf32>
    tpu.vector_store %arg7[%c0_50, %c1_51, %c0_52], %104 {strides = array<i32>} : memref<1x2x32xf32, #tpu.memory_space<vmem>>, vector<1x1x32xf32>,
    return
  }
  func.func @transform_0(%arg0: i32) -> (i32, i32, i32) {
    %c0_i32 = arith.constant 0 : i32
    %c0_i32_0 = arith.constant 0 : i32
    %c0_i32_1 = arith.constant 0 : i32
    return %arg0, %c0_i32, %c0_i32_0 : i32, i32, i32
  }
  func.func @transform_1(%arg0: i32) -> (i32, i32) {
    %c0_i32 = arith.constant 0 : i32
    %c0_i32_0 = arith.constant 0 : i32
    %c0_i32_1 = arith.constant 0 : i32
    return %c0_i32, %c0_i32_0 : i32, i32
  }
  func.func @transform_2(%arg0: i32) -> (i32, i32) {
    %c0_i32 = arith.constant 0 : i32
    %c0_i32_0 = arith.constant 0 : i32
    %c0_i32_1 = arith.constant 0 : i32
    return %c0_i32, %c0_i32_0 : i32, i32
  }
  func.func @transform_3(%arg0: i32) -> (i32, i32) {
    %c0_i32 = arith.constant 0 : i32
    %c0_i32_0 = arith.constant 0 : i32
    %c0_i32_1 = arith.constant 0 : i32
    return %c0_i32, %c0_i32_0 : i32, i32
  }
  func.func @transform_4(%arg0: i32) -> (i32, i32) {
    %c0_i32 = arith.constant 0 : i32
    %c0_i32_0 = arith.constant 0 : i32
    %c0_i32_1 = arith.constant 0 : i32
    return %c0_i32, %c0_i32_0 : i32, i32
  }
  func.func @transform_5(%arg0: i32) -> (i32, i32, i32) {
    %c0_i32 = arith.constant 0 : i32
    %c0_i32_0 = arith.constant 0 : i32
    %c0_i32_1 = arith.constant 0 : i32
    return %arg0, %c0_i32, %c0_i32_0 : i32, i32, i32
  }
  func.func @transform_6(%arg0: i32) -> (i32, i32, i32) {
    %c0_i32 = arith.constant 0 : i32
    %c0_i32_0 = arith.constant 0 : i32
    %c0_i32_1 = arith.constant 0 : i32
    return %arg0, %c0_i32, %c0_i32_0 : i32, i32, i32
  }
}

</mosaic_0001>

<llo_original>
// kernel: tile.34
$region0: #{tile.34}
  %s0 = inlined_call_operand.vmem [shape: f32[8,4], index: 0, kind: input, shape index: {}]
  %s1 = inlined_call_operand.vmem [shape: f32[1,32], index: 1, kind: output, shape index: {}]
  $region1: #{tile.34} parent=0
    #allocation0 [shape = 'u8[4096]{0}', space=vmem, size = 0x1000, scoped, tag = 'scoped mem for output reshape']
    %v2 = vld [vmem:[%s0] sm:$0x1]
    %vm3 = vcmask 31744
    %4 = vst.msk [vmem:[#allocation0] sm:$0x1] %vm3, %v2
    %s5 = scalar_lea.vmem %s0, 7
    %v6 = vld [vmem:[%s5] sm:$0x1]
    %7 = vrot.lane.b32.xlu0 %v6, 28
    %v8 = vpop.permute.xlu0 %7
    %vm9 = vcmask 261344
    %10 = vst.msk [vmem:[#allocation0] sm:$0x1] %vm9, %v8
    %s11 = scalar_lea.vmem %s0, 6
    %v12 = vld [vmem:[%s11] sm:$0x1]
    %13 = vrot.lane.b32.xlu0 %v12, 24
    %v14 = vpop.permute.xlu0 %13
    %vm15 = vcmask 228544
    %16 = vst.msk [vmem:[#allocation0] sm:$0x1] %vm15, %v14
    %s17 = scalar_lea.vmem %s0, 5
    %v18 = vld [vmem:[%s17] sm:$0x1]
    %19 = vrot.lane.b32.xlu0 %v18, 20
    %v20 = vpop.permute.xlu0 %19
    %vm21 = vcmask 195744
    %22 = vst.msk [vmem:[#allocation0] sm:$0x1] %vm21, %v20
    %s23 = scalar_lea.vmem %s0, 4
    %v24 = vld [vmem:[%s23] sm:$0x1]
    %25 = vrot.lane.b32.xlu0 %v24, 16
    %v26 = vpop.permute.xlu0 %25
    %vm27 = vcmask 162944
    %28 = vst.msk [vmem:[#allocation0] sm:$0x1] %vm27, %v26
    %s29 = scalar_lea.vmem %s0, 3
    %v30 = vld [vmem:[%s29] sm:$0x1]
    %31 = vrot.lane.b32.xlu0 %v30, 12
    %v32 = vpop.permute.xlu0 %31
    %vm33 = vcmask 130144
    %34 = vst.msk [vmem:[#allocation0] sm:$0x1] %vm33, %v32
    %s35 = scalar_lea.vmem %s0, 2
    %v36 = vld [vmem:[%s35] sm:$0x1]
    %37 = vrot.lane.b32.xlu0 %v36, 8
    %v38 = vpop.permute.xlu0 %37
    %vm39 = vcmask 97344
    %40 = vst.msk [vmem:[#allocation0] sm:$0x1] %vm39, %v38
    %s41 = scalar_lea.vmem %s0, 1
    %v42 = vld [vmem:[%s41] sm:$0x1]
    %43 = vrot.lane.b32.xlu0 %v42, 4
    %v44 = vpop.permute.xlu0 %43
    %vm45 = vcmask 64544
    %46 = vst.msk [vmem:[#allocation0] sm:$0x1] %vm45, %v44
    %s48 = sshll.u32 1, 1
    %s49 = ssub.s32 %s48, 1
    %v51 = vld [vmem:[#allocation0] sm:%s49]
    %s52 = sshll.u32 1, 1
    %s53 = ssub.s32 %s52, 1
    %54 = vst [vmem:[%s1] sm:%s53] %v51

// kernel: tile.33
$region0: #{tile.33}
  #allocation2 [shape = 's32[1]{0}', space=sflag, size = 0x4, scoped, tag = 'scoped memory for tile.33']
  %s0 = inlined_call_operand.hbm [shape: f32[4], index: 0, kind: input, shape index: {}]
  %s1 = inlined_call_operand.vmem [shape: f32[8,4], index: 1, kind: output, shape index: {}]
  $region1: #{tile.33} parent=0
    #allocation0 [shape = 'u8[512]{0}', space=vmem, size = 0x400, scoped, tag = 'operand span for operand 0']
    #allocation1 [shape = 's32[1]{0}', space=sflag, size = 0x4, scoped, tag = 'scoped memory for tile.33']
    %2 = vsyncpa [#allocation1], 0
    // Predicated region
    $region2: #{tile.33} parent=1 // pred_check
      _
    $region3: #{tile.33} parent=1 // pred_check_branch
      %4 = sbr.rel (0) target = $region5
    $region4: #{tile.33} parent=1 // pred_region
      %s6 = ssub.s32 16, 16
      %7 = vsyncadd [#allocation1], %s6
      %s9 = sshll.u32 [#allocation0], 4
      %s10 = int_to_ptr.vmem [resolvable:$true] %s9
      %12 = dma.hbm_to_vmem [thread:$0]  %s0, 16, %s10, [#allocation1]
    $region5: #{tile.33} parent=1 // pred_fallthru
      _
    // Predicated region
    $region6: #{tile.33} parent=1 // pred_check
      _
    $region7: #{tile.33} parent=1 // pred_check_branch
      %14 = sbr.rel (0) target = $region9
    $region8: #{tile.33} parent=1 // pred_region
      %15 = dma.done [#allocation1], 16
    $region9: #{tile.33} parent=1 // pred_fallthru
      _
    %v16 = vld [vmem:[#allocation0] ss:$0 sm:$0xff]
    %17 = vst [vmem:[%s1] sm:$0xff] %v16
    %18 = vsyncpa [#allocation1], 1

// kernel: tile.43
$region0: #{tile.43}
  #allocation0 [shape = 's32[1]{0}', space=sflag, size = 0x4, scoped, tag = 'scoped memory for tile.43']
  %s0 = inlined_call_operand.vmem [shape: f32[4], index: 0, kind: input, shape index: {}]
  %s1 = inlined_call_operand.vmem [shape: f32[8,4], index: 1, kind: output, shape index: {}]
  // Predicated region
  $region2: #{tile.43} parent=0 // pred_check
    _
  $region3: #{tile.43} parent=0 // pred_check_branch
    %3 = sbr.rel (0) target = $region5
  $region4: #{tile.43} parent=0 // pred_region
    _
  $region5: #{tile.43} parent=0 // pred_fallthru
    _
  %v4 = vld [vmem:[%s0] ss:$0 sm:$0xff]
  %5 = vst [vmem:[%s1] sm:$0xff] %v4

// kernel: double_conv_block_pallas.5
$region0: #{double_conv_block_pallas.5}
  #allocation0 [shape = 'u32[]', space=smem, size = 0x4, offset = 0x4, fixed_abs, tag = 'smem constant byte address 0x4 - core index']
  #allocation1 [shape = 'u32[144,128]{1,0:T(1,128)}', space=vmem, size = 0x12000, scoped, tag = 'internal scratch']
  %s0 = inlined_call_operand.vmem [shape: f32[2,48,32], index: 0, kind: input, shape index: {}]
  %s1 = inlined_call_operand.vmem [shape: f32[1,32], index: 1, kind: input, shape index: {}]
  %s2 = inlined_call_operand.vmem [shape: f32[1,32], index: 2, kind: input, shape index: {}]
  %s3 = inlined_call_operand.vmem [shape: f32[2,48,32], index: 3, kind: output, shape index: {}]
  %s4 = sld [smem:[#allocation0]]
  $region45: #{double_conv_block_pallas.5} parent=0
    _
  %s6 = ssub.s32 1, %s4
  %s7 = scalar_select 0, %s6, %s4
  loop: start=0, step=1, limit=4
  $region2: #{double_conv_block_pallas.5} parent=0 // loop_pre_header
    _
  $region3: #{double_conv_block_pallas.5} parent=0 // loop_header
    %s9 = sphi 0, %s13
    %p10 = scmp.ge.s32.totalorder %s9, 4
    %s19 = sphi 0, %s21
    %s22 = sphi 0, %s19
    %s23 = sphi 0, %s22
    %s39 = sphi 0, %s23
    %s43 = sphi 0, %s43
    %s45 = sphi 0, %s43
    %s46 = sphi 0, %s45
    %s60 = sphi 0, %s46
    %s64 = sphi 0, %s64
    %s66 = sphi 0, %s64
    %s67 = sphi 0, %s66
    %s81 = sphi 0, %s67
    %s87 = sphi 0, %s89
    %s90 = sphi 0, %s87
    %s91 = sphi 0, %s90
    %s107 = sphi 0, %s91
  $region4: #{double_conv_block_pallas.5} parent=0 // loop_header_branch
    %12 = sbr.rel (%p10) target = $region8
  $region5: #{double_conv_block_pallas.5} parent=0 // loop_body
    %s14 = ssub.s32 %s9, 1
    %s15 = ssub.s32 %s9, 2
    %s16 = sadd.s32 %s9, 1
    %s17 = ssub.s32 %s9, %s16
    %p18 = scmp.eq.s32.totalorder %s17, 0
    %s20 = sadd.s32 %s19, 1
    %s21 = scalar_select %p18, %s19, %s20
    %p24 = pneg %p18
    %p25 = scmp.eq.s32.totalorder %s9, 1
    %p26 = por %p24, %p25
    %p27 = scmp.ne.s32.totalorder %s19, %s22
    %p28 = scmp.eq.s32.totalorder %s9, 0
    %p29 = por %p27, %p28
    %p30 = scmp.ne.s32.totalorder %s19, %s22
    %p31 = scmp.eq.s32.totalorder %s14, 1
    %p32 = por %p30, %p31
    %p33 = scmp.ne.s32.totalorder %s22, %s23
    %p34 = scmp.eq.s32.totalorder %s14, 0
    %p35 = por %p33, %p34
    %p36 = scmp.ne.s32.totalorder %s22, %s23
    %p37 = scmp.eq.s32.totalorder %s15, 1
    %p38 = por %p36, %p37
    %p40 = scmp.ne.s32.totalorder %s23, %s39
    %p41 = scmp.eq.s32.totalorder %s15, 0
    %p42 = por %p40, %p41
    %s44 = sadd.s32 %s43, 1
    %p47 = scmp.eq.s32.totalorder %s9, 1
    %p48 = scmp.ne.s32.totalorder %s43, %s45
    %p49 = scmp.eq.s32.totalorder %s9, 0
    %p50 = por %p48, %p49
    %p51 = scmp.ne.s32.totalorder %s43, %s45
    %p52 = scmp.eq.s32.totalorder %s14, 1
    %p53 = por %p51, %p52
    %p54 = scmp.ne.s32.totalorder %s45, %s46
    %p55 = scmp.eq.s32.totalorder %s14, 0
    %p56 = por %p54, %p55
    %p57 = scmp.ne.s32.totalorder %s45, %s46
    %p58 = scmp.eq.s32.totalorder %s15, 1
    %p59 = por %p57, %p58
    %p61 = scmp.ne.s32.totalorder %s46, %s60
    %p62 = scmp.eq.s32.totalorder %s15, 0
    %p63 = por %p61, %p62
    %s65 = sadd.s32 %s64, 1
    %p68 = scmp.eq.s32.totalorder %s9, 1
    %p69 = scmp.ne.s32.totalorder %s64, %s66
    %p70 = scmp.eq.s32.totalorder %s9, 0
    %p71 = por %p69, %p70
    %p72 = scmp.ne.s32.totalorder %s64, %s66
    %p73 = scmp.eq.s32.totalorder %s14, 1
    %p74 = por %p72, %p73
    %p75 = scmp.ne.s32.totalorder %s66, %s67
    %p76 = scmp.eq.s32.totalorder %s14, 0
    %p77 = por %p75, %p76
    %p78 = scmp.ne.s32.totalorder %s66, %s67
    %p79 = scmp.eq.s32.totalorder %s15, 1
    %p80 = por %p78, %p79
    %p82 = scmp.ne.s32.totalorder %s67, %s81
    %p83 = scmp.eq.s32.totalorder %s15, 0
    %p84 = por %p82, %p83
    %s85 = ssub.s32 %s9, %s16
    %p86 = scmp.eq.s32.totalorder %s85, 0
    %s88 = sadd.s32 %s87, 1
    %s89 = scalar_select %p86, %s87, %s88
    %p92 = pneg %p86
    %p93 = scmp.eq.s32.totalorder %s9, 1
    %p94 = por %p92, %p93
    %p95 = scmp.ne.s32.totalorder %s87, %s90
    %p96 = scmp.eq.s32.totalorder %s9, 0
    %p97 = por %p95, %p96
    %p98 = scmp.ne.s32.totalorder %s87, %s90
    %p99 = scmp.eq.s32.totalorder %s14, 1
    %p100 = por %p98, %p99
    %p101 = scmp.ne.s32.totalorder %s90, %s91
    %p102 = scmp.eq.s32.totalorder %s14, 0
    %p103 = por %p101, %p102
    %p104 = scmp.ne.s32.totalorder %s90, %s91
    %p105 = scmp.eq.s32.totalorder %s15, 1
    %p106 = por %p104, %p105
    %p108 = scmp.ne.s32.totalorder %s91, %s107
    %p109 = scmp.eq.s32.totalorder %s15, 0
    %p110 = por %p108, %p109
    %p111 = scmp.le.s32.totalorder 1, %s9
    %p112 = scmp.lt.s32.totalorder %s9, 3
    %p113 = pnand %p111, %p112
    %p114 = pneg %p113
    // Predicated region
    $region9: #{double_conv_block_pallas.5} parent=5 // pred_check
      _
    $region10: #{double_conv_block_pallas.5} parent=5 // pred_check_branch
      %116 = sbr.rel (%p113) target = $region12
    $region11: #{double_conv_block_pallas.5} parent=5 // pred_region
      %s117 = ssub.s32 %s9, 1
      // Predicated region
      $region13: #{double_conv_block_pallas.5} parent=11 // pred_check
        %p118 = pneg %p56
      $region14: #{double_conv_block_pallas.5} parent=11 // pred_check_branch
        %120 = sbr.rel (%p118) target = $region16
      $region15: #{double_conv_block_pallas.5} parent=11 // pred_region
        _
      $region16: #{double_conv_block_pallas.5} parent=11 // pred_fallthru
        _
      // Predicated region
      $region17: #{double_conv_block_pallas.5} parent=11 // pred_check
        %p121 = pneg %p77
      $region18: #{double_conv_block_pallas.5} parent=11 // pred_check_branch
        %123 = sbr.rel (%p121) target = $region20
      $region19: #{double_conv_block_pallas.5} parent=11 // pred_region
        _
      $region20: #{double_conv_block_pallas.5} parent=11 // pred_fallthru
        _
    $region12: #{double_conv_block_pallas.5} parent=5 // pred_fallthru
      _
    %p124 = scmp.lt.s32.totalorder %s9, 2
    // Predicated region
    $region21: #{double_conv_block_pallas.5} parent=5 // pred_check
      %p125 = pneg %p124
    $region22: #{double_conv_block_pallas.5} parent=5 // pred_check_branch
      %127 = sbr.rel (%p125) target = $region24
    $region23: #{double_conv_block_pallas.5} parent=5 // pred_region
      // Predicated region
      $region25: #{double_conv_block_pallas.5} parent=23 // pred_check
        %p128 = pneg %p29
      $region26: #{double_conv_block_pallas.5} parent=23 // pred_check_branch
        %130 = sbr.rel (%p128) target = $region28
      $region27: #{double_conv_block_pallas.5} parent=23 // pred_region
        %p131 = scmp.lt.s32.totalorder %s9, 1
        %s132 = scalar_select %p131, %s9, 1
        %s133 = smul.addr %s132, 6
        %s134 = smul.addr %s133, 8
        %s135 = scalar_lea.vmem %s0, %s134
      $region28: #{double_conv_block_pallas.5} parent=23 // pred_fallthru
        _
    $region24: #{double_conv_block_pallas.5} parent=5 // pred_fallthru
      _
    %p136 = scmp.le.s32.totalorder 1, %s9
    %p137 = scmp.lt.s32.totalorder %s9, 3
    %p138 = pnand %p136, %p137
    %p139 = pneg %p138
    // Predicated region
    $region29: #{double_conv_block_pallas.5} parent=5 // pred_check
      _
    $region30: #{double_conv_block_pallas.5} parent=5 // pred_check_branch
      %141 = sbr.rel (%p138) target = $region32
    $region31: #{double_conv_block_pallas.5} parent=5 // pred_region
      %s142 = ssub.s32 %s9, 1
      %p143 = scmp.lt.s32.totalorder %s14, 1
      %s144 = scalar_select %p143, %s14, 1
      %s145 = smul.addr %s144, 6
      %s146 = smul.addr %s145, 8
      %s147 = scalar_lea.vmem %s0, %s146
      %p148 = pneg %p35
      %p149 = pneg %p32
      %p150 = pneg %p56
      %p151 = pneg %p53
      %p152 = pneg %p77
      %p153 = pneg %p74
      %p154 = pneg %p103
      %p155 = pneg %p100
      %p156 = scmp.lt.s32.totalorder %s14, 1
      %s157 = scalar_select %p156, %s14, 1
      %s158 = smul.addr %s157, 6
      %s159 = smul.addr %s158, 8
      %s160 = scalar_lea.vmem %s3, %s159
      %p161 = scmp.lt.s32.totalorder %s14, 1
      %s162 = scalar_select %p161, %s14, 1
      %s163 = smul.addr %s162, 6
      %s164 = smul.addr %s163, 8
      %s165 = scalar_lea.vmem %s0, %s164
      %p166 = scmp.lt.s32.totalorder %s14, 1
      %s167 = scalar_select %p166, %s14, 1
      %s168 = smul.addr %s167, 6
      %s169 = smul.addr %s168, 8
      %s170 = scalar_lea.vmem %s3, %s169
      %v171 = vld [vmem:[%s165] sm:$0xff]
      %v172 = vld [vmem:[%s165 + $0x8] sm:$0xff]
      %v173 = vld [vmem:[%s165 + $0x10] sm:$0xff]
      %v174 = vld [vmem:[%s165 + $0x18] sm:$0xff]
      %v175 = vld [vmem:[%s165 + $0x20] sm:$0xff]
      %v176 = vld [vmem:[%s165 + $0x28] sm:$0xff]
      %v177 = vld [vmem:[%s1] sm:$0x1]
      %v179 = vlaneseq
      %v180 = vshrl.u32 %v179, 7
      %v181 = vsub.s32 0, %v180
      %v182 = vrot.slane %v177, %v181
      %v184 = vmul.f32 %v171, %v182
      %v185 = vmul.f32 %v172, %v182
      %v186 = vmul.f32 %v173, %v182
      %v187 = vmul.f32 %v174, %v182
      %v188 = vmul.f32 %v175, %v182
      %v189 = vmul.f32 %v176, %v182
      %v190 = vld [vmem:[%s2] sm:$0x1]
      %v192 = vlaneseq
      %v193 = vshrl.u32 %v192, 7
      %v194 = vsub.s32 0, %v193
      %v195 = vrot.slane %v190, %v194
      %v197 = vadd.f32 %v184, %v195
      %v198 = vadd.f32 %v185, %v195
      %v199 = vadd.f32 %v186, %v195
      %v200 = vadd.f32 %v187, %v195
      %v201 = vadd.f32 %v188, %v195
      %v202 = vadd.f32 %v189, %v195
      %v203 = vmax.f32 %v197, 0.0
      %v204 = vmax.f32 %v198, 0.0
      %v205 = vmax.f32 %v199, 0.0
      %v206 = vmax.f32 %v200, 0.0
      %v207 = vmax.f32 %v201, 0.0
      %v208 = vmax.f32 %v202, 0.0
      %vm209 = vcmask 261120
      %210 = vst.msk [vmem:[%s170] sm:$0xff] %vm209, %v203
      %211 = vst.msk [vmem:[%s170 + $0x8] sm:$0xff] %vm209, %v204
      %212 = vst.msk [vmem:[%s170 + $0x10] sm:$0xff] %vm209, %v205
      %213 = vst.msk [vmem:[%s170 + $0x18] sm:$0xff] %vm209, %v206
      %214 = vst.msk [vmem:[%s170 + $0x20] sm:$0xff] %vm209, %v207
      %215 = vst.msk [vmem:[%s170 + $0x28] sm:$0xff] %vm209, %v208
      %p216 = scmp.lt.s32.totalorder %s14, 1
      %s217 = scalar_select %p216, %s14, 1
      %s218 = smul.addr %s217, 6
      %s219 = smul.addr %s218, 8
      %s220 = scalar_lea.vmem %s3, %s219
      // Predicated region
      $region33: #{double_conv_block_pallas.5} parent=31 // pred_check
        %p221 = pneg %p100
      $region34: #{double_conv_block_pallas.5} parent=31 // pred_check_branch
        %223 = sbr.rel (%p221) target = $region36
      $region35: #{double_conv_block_pallas.5} parent=31 // pred_region
        _
      $region36: #{double_conv_block_pallas.5} parent=31 // pred_fallthru
        _
    $region32: #{double_conv_block_pallas.5} parent=5 // pred_fallthru
      _
    %p224 = scmp.le.s32.totalorder 2, %s9
    // Predicated region
    $region37: #{double_conv_block_pallas.5} parent=5 // pred_check
      %p225 = pneg %p224
    $region38: #{double_conv_block_pallas.5} parent=5 // pred_check_branch
      %227 = sbr.rel (%p225) target = $region40
    $region39: #{double_conv_block_pallas.5} parent=5 // pred_region
      %s228 = ssub.s32 %s9, 2
      // Predicated region
      $region41: #{double_conv_block_pallas.5} parent=39 // pred_check
        %p229 = pneg %p106
      $region42: #{double_conv_block_pallas.5} parent=39 // pred_check_branch
        %231 = sbr.rel (%p229) target = $region44
      $region43: #{double_conv_block_pallas.5} parent=39 // pred_region
        %p232 = scmp.lt.s32.totalorder %s15, 1
        %s233 = scalar_select %p232, %s15, 1
        %s234 = smul.addr %s233, 6
        %s235 = smul.addr %s234, 8
        %s236 = scalar_lea.vmem %s3, %s235
      $region44: #{double_conv_block_pallas.5} parent=39 // pred_fallthru
        _
    $region40: #{double_conv_block_pallas.5} parent=5 // pred_fallthru
      _
  $region6: #{double_conv_block_pallas.5} parent=0 // loop_footer
    %s13 = sadd.s32 1, %s9
  $region7: #{double_conv_block_pallas.5} parent=0 // loop_footer_branch
    %8 = sbr.rel target = $region3
  $region8: #{double_conv_block_pallas.5} parent=0 // loop_exit
    _

// kernel: double_conv_block_pallas.4
$region0: #{double_conv_block_pallas.4}
  #allocation0 [shape = 'u32[]', space=smem, size = 0x4, offset = 0x4, fixed_abs, tag = 'smem constant byte address 0x4 - core index']
  #allocation1 [shape = 'u32[144,128]{1,0:T(1,128)}', space=vmem, size = 0x12000, scoped, tag = 'internal scratch']
  #allocation2 [shape = 'bf16[64,32]{1,0:T(8,128)(2,1)}', space=vmem, size = 0x4000, scoped, tag = 'scratch operand']
  #allocation3 [shape = 'bf16[46,288]{1,0:T(8,128)(2,1)}', space=vmem, size = 0x9000, scoped, tag = 'scratch operand']
  %s0 = inlined_call_operand.vmem [shape: f32[2,48,32], index: 0, kind: input, shape index: {}]
  %s1 = inlined_call_operand.vmem [shape: bf16[288,32], index: 1, kind: input, shape index: {}]
  %s2 = inlined_call_operand.vmem [shape: f32[1,32], index: 2, kind: input, shape index: {}]
  %s3 = inlined_call_operand.vmem [shape: f32[1,32], index: 3, kind: input, shape index: {}]
  %s4 = inlined_call_operand.vmem [shape: f32[1,32], index: 4, kind: input, shape index: {}]
  %s5 = inlined_call_operand.vmem [shape: f32[2,48,32], index: 5, kind: output, shape index: {0}]
  %s6 = inlined_call_operand.vmem [shape: f32[2,2,32], index: 6, kind: output, shape index: {1}]
  %7 = xla_tuple %s5, %s6
  %s8 = sld [smem:[#allocation0]]
  $region61: #{double_conv_block_pallas.4} parent=0
    _
  %s10 = ssub.s32 1, %s8
  %s11 = scalar_select 0, %s10, %s8
  loop: start=0, step=1, limit=4
  $region2: #{double_conv_block_pallas.4} parent=0 // loop_pre_header
    _
  $region3: #{double_conv_block_pallas.4} parent=0 // loop_header
    %s13 = sphi 0, %s17
    %p14 = scmp.ge.s32.totalorder %s13, 4
    %s23 = sphi 0, %s25
    %s26 = sphi 0, %s23
    %s27 = sphi 0, %s26
    %s43 = sphi 0, %s27
    %s47 = sphi 0, %s47
    %s49 = sphi 0, %s47
    %s50 = sphi 0, %s49
    %s64 = sphi 0, %s50
    %s68 = sphi 0, %s68
    %s70 = sphi 0, %s68
    %s71 = sphi 0, %s70
    %s85 = sphi 0, %s71
    %s89 = sphi 0, %s89
    %s91 = sphi 0, %s89
    %s92 = sphi 0, %s91
    %s106 = sphi 0, %s92
    %s110 = sphi 0, %s110
    %s112 = sphi 0, %s110
    %s113 = sphi 0, %s112
    %s127 = sphi 0, %s113
    %s133 = sphi 0, %s135
    %s136 = sphi 0, %s133
    %s137 = sphi 0, %s136
    %s153 = sphi 0, %s137
    %s159 = sphi 0, %s161
    %s162 = sphi 0, %s159
    %s163 = sphi 0, %s162
    %s179 = sphi 0, %s163
  $region4: #{double_conv_block_pallas.4} parent=0 // loop_header_branch
    %16 = sbr.rel (%p14) target = $region8
  $region5: #{double_conv_block_pallas.4} parent=0 // loop_body
    %s18 = ssub.s32 %s13, 1
    %s19 = ssub.s32 %s13, 2
    %s20 = sadd.s32 %s13, 1
    %s21 = ssub.s32 %s13, %s20
    %p22 = scmp.eq.s32.totalorder %s21, 0
    %s24 = sadd.s32 %s23, 1
    %s25 = scalar_select %p22, %s23, %s24
    %p28 = pneg %p22
    %p29 = scmp.eq.s32.totalorder %s13, 1
    %p30 = por %p28, %p29
    %p31 = scmp.ne.s32.totalorder %s23, %s26
    %p32 = scmp.eq.s32.totalorder %s13, 0
    %p33 = por %p31, %p32
    %p34 = scmp.ne.s32.totalorder %s23, %s26
    %p35 = scmp.eq.s32.totalorder %s18, 1
    %p36 = por %p34, %p35
    %p37 = scmp.ne.s32.totalorder %s26, %s27
    %p38 = scmp.eq.s32.totalorder %s18, 0
    %p39 = por %p37, %p38
    %p40 = scmp.ne.s32.totalorder %s26, %s27
    %p41 = scmp.eq.s32.totalorder %s19, 1
    %p42 = por %p40, %p41
    %p44 = scmp.ne.s32.totalorder %s27, %s43
    %p45 = scmp.eq.s32.totalorder %s19, 0
    %p46 = por %p44, %p45
    %s48 = sadd.s32 %s47, 1
    %p51 = scmp.eq.s32.totalorder %s13, 1
    %p52 = scmp.ne.s32.totalorder %s47, %s49
    %p53 = scmp.eq.s32.totalorder %s13, 0
    %p54 = por %p52, %p53
    %p55 = scmp.ne.s32.totalorder %s47, %s49
    %p56 = scmp.eq.s32.totalorder %s18, 1
    %p57 = por %p55, %p56
    %p58 = scmp.ne.s32.totalorder %s49, %s50
    %p59 = scmp.eq.s32.totalorder %s18, 0
    %p60 = por %p58, %p59
    %p61 = scmp.ne.s32.totalorder %s49, %s50
    %p62 = scmp.eq.s32.totalorder %s19, 1
    %p63 = por %p61, %p62
    %p65 = scmp.ne.s32.totalorder %s50, %s64
    %p66 = scmp.eq.s32.totalorder %s19, 0
    %p67 = por %p65, %p66
    %s69 = sadd.s32 %s68, 1
    %p72 = scmp.eq.s32.totalorder %s13, 1
    %p73 = scmp.ne.s32.totalorder %s68, %s70
    %p74 = scmp.eq.s32.totalorder %s13, 0
    %p75 = por %p73, %p74
    %p76 = scmp.ne.s32.totalorder %s68, %s70
    %p77 = scmp.eq.s32.totalorder %s18, 1
    %p78 = por %p76, %p77
    %p79 = scmp.ne.s32.totalorder %s70, %s71
    %p80 = scmp.eq.s32.totalorder %s18, 0
    %p81 = por %p79, %p80
    %p82 = scmp.ne.s32.totalorder %s70, %s71
    %p83 = scmp.eq.s32.totalorder %s19, 1
    %p84 = por %p82, %p83
    %p86 = scmp.ne.s32.totalorder %s71, %s85
    %p87 = scmp.eq.s32.totalorder %s19, 0
    %p88 = por %p86, %p87
    %s90 = sadd.s32 %s89, 1
    %p93 = scmp.eq.s32.totalorder %s13, 1
    %p94 = scmp.ne.s32.totalorder %s89, %s91
    %p95 = scmp.eq.s32.totalorder %s13, 0
    %p96 = por %p94, %p95
    %p97 = scmp.ne.s32.totalorder %s89, %s91
    %p98 = scmp.eq.s32.totalorder %s18, 1
    %p99 = por %p97, %p98
    %p100 = scmp.ne.s32.totalorder %s91, %s92
    %p101 = scmp.eq.s32.totalorder %s18, 0
    %p102 = por %p100, %p101
    %p103 = scmp.ne.s32.totalorder %s91, %s92
    %p104 = scmp.eq.s32.totalorder %s19, 1
    %p105 = por %p103, %p104
    %p107 = scmp.ne.s32.totalorder %s92, %s106
    %p108 = scmp.eq.s32.totalorder %s19, 0
    %p109 = por %p107, %p108
    %s111 = sadd.s32 %s110, 1
    %p114 = scmp.eq.s32.totalorder %s13, 1
    %p115 = scmp.ne.s32.totalorder %s110, %s112
    %p116 = scmp.eq.s32.totalorder %s13, 0
    %p117 = por %p115, %p116
    %p118 = scmp.ne.s32.totalorder %s110, %s112
    %p119 = scmp.eq.s32.totalorder %s18, 1
    %p120 = por %p118, %p119
    %p121 = scmp.ne.s32.totalorder %s112, %s113
    %p122 = scmp.eq.s32.totalorder %s18, 0
    %p123 = por %p121, %p122
    %p124 = scmp.ne.s32.totalorder %s112, %s113
    %p125 = scmp.eq.s32.totalorder %s19, 1
    %p126 = por %p124, %p125
    %p128 = scmp.ne.s32.totalorder %s113, %s127
    %p129 = scmp.eq.s32.totalorder %s19, 0
    %p130 = por %p128, %p129
    %s131 = ssub.s32 %s13, %s20
    %p132 = scmp.eq.s32.totalorder %s131, 0
    %s134 = sadd.s32 %s133, 1
    %s135 = scalar_select %p132, %s133, %s134
    %p138 = pneg %p132
    %p139 = scmp.eq.s32.totalorder %s13, 1
    %p140 = por %p138, %p139
    %p141 = scmp.ne.s32.totalorder %s133, %s136
    %p142 = scmp.eq.s32.totalorder %s13, 0
    %p143 = por %p141, %p142
    %p144 = scmp.ne.s32.totalorder %s133, %s136
    %p145 = scmp.eq.s32.totalorder %s18, 1
    %p146 = por %p144, %p145
    %p147 = scmp.ne.s32.totalorder %s136, %s137
    %p148 = scmp.eq.s32.totalorder %s18, 0
    %p149 = por %p147, %p148
    %p150 = scmp.ne.s32.totalorder %s136, %s137
    %p151 = scmp.eq.s32.totalorder %s19, 1
    %p152 = por %p150, %p151
    %p154 = scmp.ne.s32.totalorder %s137, %s153
    %p155 = scmp.eq.s32.totalorder %s19, 0
    %p156 = por %p154, %p155
    %s157 = ssub.s32 %s13, %s20
    %p158 = scmp.eq.s32.totalorder %s157, 0
    %s160 = sadd.s32 %s159, 1
    %s161 = scalar_select %p158, %s159, %s160
    %p164 = pneg %p158
    %p165 = scmp.eq.s32.totalorder %s13, 1
    %p166 = por %p164, %p165
    %p167 = scmp.ne.s32.totalorder %s159, %s162
    %p168 = scmp.eq.s32.totalorder %s13, 0
    %p169 = por %p167, %p168
    %p170 = scmp.ne.s32.totalorder %s159, %s162
    %p171 = scmp.eq.s32.totalorder %s18, 1
    %p172 = por %p170, %p171
    %p173 = scmp.ne.s32.totalorder %s162, %s163
    %p174 = scmp.eq.s32.totalorder %s18, 0
    %p175 = por %p173, %p174
    %p176 = scmp.ne.s32.totalorder %s162, %s163
    %p177 = scmp.eq.s32.totalorder %s19, 1
    %p178 = por %p176, %p177
    %p180 = scmp.ne.s32.totalorder %s163, %s179
    %p181 = scmp.eq.s32.totalorder %s19, 0
    %p182 = por %p180, %p181
    %p183 = scmp.le.s32.totalorder 1, %s13
    %p184 = scmp.lt.s32.totalorder %s13, 3
    %p185 = pnand %p183, %p184
    %p186 = pneg %p185
    // Predicated region
    $region9: #{double_conv_block_pallas.4} parent=5 // pred_check
      _
    $region10: #{double_conv_block_pallas.4} parent=5 // pred_check_branch
      %188 = sbr.rel (%p185) target = $region12
    $region11: #{double_conv_block_pallas.4} parent=5 // pred_region
      %s189 = ssub.s32 %s13, 1
      // Predicated region
      $region13: #{double_conv_block_pallas.4} parent=11 // pred_check
        %p190 = pneg %p60
      $region14: #{double_conv_block_pallas.4} parent=11 // pred_check_branch
        %192 = sbr.rel (%p190) target = $region16
      $region15: #{double_conv_block_pallas.4} parent=11 // pred_region
        _
      $region16: #{double_conv_block_pallas.4} parent=11 // pred_fallthru
        _
      // Predicated region
      $region17: #{double_conv_block_pallas.4} parent=11 // pred_check
        %p193 = pneg %p81
      $region18: #{double_conv_block_pallas.4} parent=11 // pred_check_branch
        %195 = sbr.rel (%p193) target = $region20
      $region19: #{double_conv_block_pallas.4} parent=11 // pred_region
        _
      $region20: #{double_conv_block_pallas.4} parent=11 // pred_fallthru
        _
      // Predicated region
      $region21: #{double_conv_block_pallas.4} parent=11 // pred_check
        %p196 = pneg %p102
      $region22: #{double_conv_block_pallas.4} parent=11 // pred_check_branch
        %198 = sbr.rel (%p196) target = $region24
      $region23: #{double_conv_block_pallas.4} parent=11 // pred_region
        _
      $region24: #{double_conv_block_pallas.4} parent=11 // pred_fallthru
        _
      // Predicated region
      $region25: #{double_conv_block_pallas.4} parent=11 // pred_check
        %p199 = pneg %p123
      $region26: #{double_conv_block_pallas.4} parent=11 // pred_check_branch
        %201 = sbr.rel (%p199) target = $region28
      $region27: #{double_conv_block_pallas.4} parent=11 // pred_region
        _
      $region28: #{double_conv_block_pallas.4} parent=11 // pred_fallthru
        _
    $region12: #{double_conv_block_pallas.4} parent=5 // pred_fallthru
      _
    %p202 = scmp.lt.s32.totalorder %s13, 2
    // Predicated region
    $region29: #{double_conv_block_pallas.4} parent=5 // pred_check
      %p203 = pneg %p202
    $region30: #{double_conv_block_pallas.4} parent=5 // pred_check_branch
      %205 = sbr.rel (%p203) target = $region32
    $region31: #{double_conv_block_pallas.4} parent=5 // pred_region
      // Predicated region
      $region33: #{double_conv_block_pallas.4} parent=31 // pred_check
        %p206 = pneg %p33
      $region34: #{double_conv_block_pallas.4} parent=31 // pred_check_branch
        %208 = sbr.rel (%p206) target = $region36
      $region35: #{double_conv_block_pallas.4} parent=31 // pred_region
        %p209 = scmp.lt.s32.totalorder %s13, 1
        %s210 = scalar_select %p209, %s13, 1
        %s211 = smul.addr %s210, 6
        %s212 = smul.addr %s211, 8
        %s213 = scalar_lea.vmem %s0, %s212
      $region36: #{double_conv_block_pallas.4} parent=31 // pred_fallthru
        _
    $region32: #{double_conv_block_pallas.4} parent=5 // pred_fallthru
      _
    %p214 = scmp.le.s32.totalorder 1, %s13
    %p215 = scmp.lt.s32.totalorder %s13, 3
    %p216 = pnand %p214, %p215
    %p217 = pneg %p216
    // Predicated region
    $region37: #{double_conv_block_pallas.4} parent=5 // pred_check
      _
    $region38: #{double_conv_block_pallas.4} parent=5 // pred_check_branch
      %219 = sbr.rel (%p216) target = $region40
    $region39: #{double_conv_block_pallas.4} parent=5 // pred_region
      %s220 = ssub.s32 %s13, 1
      %p221 = scmp.lt.s32.totalorder %s18, 1
      %s222 = scalar_select %p221, %s18, 1
      %s223 = smul.addr %s222, 6
      %s224 = smul.addr %s223, 8
      %s225 = scalar_lea.vmem %s0, %s224
      %p226 = pneg %p39
      %p227 = pneg %p36
      %p228 = pneg %p60
      %p229 = pneg %p57
      %p230 = pneg %p81
      %p231 = pneg %p78
      %p232 = pneg %p102
      %p233 = pneg %p99
      %p234 = pneg %p123
      %p235 = pneg %p120
      %p236 = pneg %p149
      %p237 = pneg %p146
      %p238 = scmp.lt.s32.totalorder %s18, 1
      %s239 = scalar_select %p238, %s18, 1
      %s240 = smul.addr %s239, 6
      %s241 = smul.addr %s240, 8
      %s242 = scalar_lea.vmem %s5, %s241
      %p243 = pneg %p175
      %p244 = pneg %p172
      %p245 = scmp.lt.s32.totalorder %s18, 1
      %s246 = scalar_select %p245, %s18, 1
      %s247 = smul.addr %s246, 2
      %s248 = scalar_lea.vmem %s6, %s247
      %p249 = scmp.lt.s32.totalorder %s18, 1
      %s250 = scalar_select %p249, %s18, 1
      %s251 = smul.addr %s250, 6
      %s252 = smul.addr %s251, 8
      %s253 = scalar_lea.vmem %s0, %s252
      %p254 = scmp.lt.s32.totalorder %s18, 1
      %s255 = scalar_select %p254, %s18, 1
      %s256 = smul.addr %s255, 6
      %s257 = smul.addr %s256, 8
      %s258 = scalar_lea.vmem %s5, %s257
      %p259 = scmp.lt.s32.totalorder %s18, 1
      %s260 = scalar_select %p259, %s18, 1
      %s261 = smul.addr %s260, 2
      %s262 = scalar_lea.vmem %s6, %s261
      %v264 = vlaneseq
      %v265 = vshrl.u32 %v264, 7
      %v266 = vadd.s32 %v265, 8
      %v267 = vadd.s32 %v265, 16
      %v268 = vadd.s32 %v265, 24
      %v269 = vadd.s32 %v265, 32
      %v270 = vadd.s32 %v265, 40
      %vm271 = vcmp.ge.s32.totalorder %v265, 0
      %vm272 = vcmp.ge.s32.totalorder %v266, 0
      %vm273 = vcmp.ge.s32.totalorder %v267, 0
      %vm274 = vcmp.ge.s32.totalorder %v268, 0
      %vm275 = vcmp.ge.s32.totalorder %v269, 0
      %vm276 = vcmp.ge.s32.totalorder %v270, 0
      %vm277 = vcmp.lt.s32.totalorder %v265, 6
      %vm278 = vcmp.lt.s32.totalorder %v266, 6
      %vm279 = vcmp.lt.s32.totalorder %v267, 6
      %vm280 = vcmp.lt.s32.totalorder %v268, 6
      %vm281 = vcmp.lt.s32.totalorder %v269, 6
      %vm282 = vcmp.lt.s32.totalorder %v270, 6
      %vm283 = vmand %vm271, %vm277
      %vm284 = vmand %vm272, %vm278
      %vm285 = vmand %vm273, %vm279
      %vm286 = vmand %vm274, %vm280
      %vm287 = vmand %vm275, %vm281
      %vm288 = vmand %vm276, %vm282
      %vm289 = vcmp.ge.s32.totalorder %v265, 8
      %vm290 = vcmp.ge.s32.totalorder %v266, 8
      %vm291 = vcmp.ge.s32.totalorder %v267, 8
      %vm292 = vcmp.ge.s32.totalorder %v268, 8
      %vm293 = vcmp.ge.s32.totalorder %v269, 8
      %vm294 = vcmp.ge.s32.totalorder %v270, 8
      %vm295 = vcmp.lt.s32.totalorder %v265, 14
      %vm296 = vcmp.lt.s32.totalorder %v266, 14
      %vm297 = vcmp.lt.s32.totalorder %v267, 14
      %vm298 = vcmp.lt.s32.totalorder %v268, 14
      %vm299 = vcmp.lt.s32.totalorder %v269, 14
      %vm300 = vcmp.lt.s32.totalorder %v270, 14
      %vm301 = vmand %vm289, %vm295
      %vm302 = vmand %vm290, %vm296
      %vm303 = vmand %vm291, %vm297
      %vm304 = vmand %vm292, %vm298
      %vm305 = vmand %vm293, %vm299
      %vm306 = vmand %vm294, %vm300
      %vm307 = vmor %vm283, %vm301
      %vm308 = vmor %vm284, %vm302
      %vm309 = vmor %vm285, %vm303
      %vm310 = vmor %vm286, %vm304
      %vm311 = vmor %vm287, %vm305
      %vm312 = vmor %vm288, %vm306
      %vm313 = vcmp.ge.s32.totalorder %v265, 16
      %vm314 = vcmp.ge.s32.totalorder %v266, 16
      %vm315 = vcmp.ge.s32.totalorder %v267, 16
      %vm316 = vcmp.ge.s32.totalorder %v268, 16
      %vm317 = vcmp.ge.s32.totalorder %v269, 16
      %vm318 = vcmp.ge.s32.totalorder %v270, 16
      %vm319 = vcmp.lt.s32.totalorder %v265, 22
      %vm320 = vcmp.lt.s32.totalorder %v266, 22
      %vm321 = vcmp.lt.s32.totalorder %v267, 22
      %vm322 = vcmp.lt.s32.totalorder %v268, 22
      %vm323 = vcmp.lt.s32.totalorder %v269, 22
      %vm324 = vcmp.lt.s32.totalorder %v270, 22
      %vm325 = vmand %vm313, %vm319
      %vm326 = vmand %vm314, %vm320
      %vm327 = vmand %vm315, %vm321
      %vm328 = vmand %vm316, %vm322
      %vm329 = vmand %vm317, %vm323
      %vm330 = vmand %vm318, %vm324
      %vm331 = vmor %vm307, %vm325
      %vm332 = vmor %vm308, %vm326
      %vm333 = vmor %vm309, %vm327
      %vm334 = vmor %vm310, %vm328
      %vm335 = vmor %vm311, %vm329
      %vm336 = vmor %vm312, %vm330
      %vm337 = vcmp.ge.s32.totalorder %v265, 24
      %vm338 = vcmp.ge.s32.totalorder %v266, 24
      %vm339 = vcmp.ge.s32.totalorder %v267, 24
      %vm340 = vcmp.ge.s32.totalorder %v268, 24
      %vm341 = vcmp.ge.s32.totalorder %v269, 24
      %vm342 = vcmp.ge.s32.totalorder %v270, 24
      %vm343 = vcmp.lt.s32.totalorder %v265, 30
      %vm344 = vcmp.lt.s32.totalorder %v266, 30
      %vm345 = vcmp.lt.s32.totalorder %v267, 30
      %vm346 = vcmp.lt.s32.totalorder %v268, 30
      %vm347 = vcmp.lt.s32.totalorder %v269, 30
      %vm348 = vcmp.lt.s32.totalorder %v270, 30
      %vm349 = vmand %vm337, %vm343
      %vm350 = vmand %vm338, %vm344
      %vm351 = vmand %vm339, %vm345
      %vm352 = vmand %vm340, %vm346
      %vm353 = vmand %vm341, %vm347
      %vm354 = vmand %vm342, %vm348
      %vm355 = vmor %vm331, %vm349
      %vm356 = vmor %vm332, %vm350
      %vm357 = vmor %vm333, %vm351
      %vm358 = vmor %vm334, %vm352
      %vm359 = vmor %vm335, %vm353
      %vm360 = vmor %vm336, %vm354
      %vm361 = vcmp.ge.s32.totalorder %v265, 32
      %vm362 = vcmp.ge.s32.totalorder %v266, 32
      %vm363 = vcmp.ge.s32.totalorder %v267, 32
      %vm364 = vcmp.ge.s32.totalorder %v268, 32
      %vm365 = vcmp.ge.s32.totalorder %v269, 32
      %vm366 = vcmp.ge.s32.totalorder %v270, 32
      %vm367 = vcmp.lt.s32.totalorder %v265, 38
      %vm368 = vcmp.lt.s32.totalorder %v266, 38
      %vm369 = vcmp.lt.s32.totalorder %v267, 38
      %vm370 = vcmp.lt.s32.totalorder %v268, 38
      %vm371 = vcmp.lt.s32.totalorder %v269, 38
      %vm372 = vcmp.lt.s32.totalorder %v270, 38
      %vm373 = vmand %vm361, %vm367
      %vm374 = vmand %vm362, %vm368
      %vm375 = vmand %vm363, %vm369
      %vm376 = vmand %vm364, %vm370
      %vm377 = vmand %vm365, %vm371
      %vm378 = vmand %vm366, %vm372
      %vm379 = vmor %vm355, %vm373
      %vm380 = vmor %vm356, %vm374
      %vm381 = vmor %vm357, %vm375
      %vm382 = vmor %vm358, %vm376
      %vm383 = vmor %vm359, %vm377
      %vm384 = vmor %vm360, %vm378
      %vm385 = vcmp.ge.s32.totalorder %v265, 40
      %vm386 = vcmp.ge.s32.totalorder %v266, 40
      %vm387 = vcmp.ge.s32.totalorder %v267, 40
      %vm388 = vcmp.ge.s32.totalorder %v268, 40
      %vm389 = vcmp.ge.s32.totalorder %v269, 40
      %vm390 = vcmp.ge.s32.totalorder %v270, 40
      %vm391 = vcmp.lt.s32.totalorder %v265, 46
      %vm392 = vcmp.lt.s32.totalorder %v266, 46
      %vm393 = vcmp.lt.s32.totalorder %v267, 46
      %vm394 = vcmp.lt.s32.totalorder %v268, 46
      %vm395 = vcmp.lt.s32.totalorder %v269, 46
      %vm396 = vcmp.lt.s32.totalorder %v270, 46
      %vm397 = vmand %vm385, %vm391
      %vm398 = vmand %vm386, %vm392
      %vm399 = vmand %vm387, %vm393
      %vm400 = vmand %vm388, %vm394
      %vm401 = vmand %vm389, %vm395
      %vm402 = vmand %vm390, %vm396
      %vm403 = vmor %vm379, %vm397
      %vm404 = vmor %vm380, %vm398
      %vm405 = vmor %vm381, %vm399
      %vm406 = vmor %vm382, %vm400
      %vm407 = vmor %vm383, %vm401
      %vm408 = vmor %vm384, %vm402
      %v409 = vlaneseq
      %v410 = vand.u32 %v409, 127
      %vm411 = vcmp.ge.s32.totalorder %v410, 4
      %vm412 = vcmp.lt.s32.totalorder %v410, 28
      %vm413 = vmand %vm411, %vm412
      %v414 = vsel %vm403, 1, 0
      %v415 = vsel %vm404, 1, 0
      %v416 = vsel %vm405, 1, 0
      %v417 = vsel %vm406, 1, 0
      %v418 = vsel %vm407, 1, 0
      %v419 = vsel %vm408, 1, 0
      %vm420 = vcmp.eq.s32.totalorder %v414, 1
      %vm421 = vcmp.eq.s32.totalorder %v415, 1
      %vm422 = vcmp.eq.s32.totalorder %v416, 1
      %vm423 = vcmp.eq.s32.totalorder %v417, 1
      %vm424 = vcmp.eq.s32.totalorder %v418, 1
      %vm425 = vcmp.eq.s32.totalorder %v419, 1
      %v426 = vsel %vm413, 1, 0
      %vm427 = vcmp.eq.s32.totalorder %v426, 1
      %vm428 = vmand %vm420, %vm427
      %vm429 = vmand %vm421, %vm427
      %vm430 = vmand %vm422, %vm427
      %vm431 = vmand %vm423, %vm427
      %vm432 = vmand %vm424, %vm427
      %vm433 = vmand %vm425, %vm427
      %v434 = vld [vmem:[%s253] sm:$0xff]
      %v435 = vld [vmem:[%s253 + $0x8] sm:$0xff]
      %v436 = vld [vmem:[%s253 + $0x10] sm:$0xff]
      %v437 = vld [vmem:[%s253 + $0x18] sm:$0xff]
      %v438 = vld [vmem:[%s253 + $0x20] sm:$0xff]
      %v439 = vld [vmem:[%s253 + $0x28] sm:$0x3f]
      %v440 = vld [vmem:[%s3] sm:$0x1]
      %v442 = vlaneseq
      %v443 = vshrl.u32 %v442, 7
      %v444 = vsub.s32 0, %v443
      %v445 = vrot.slane %v440, %v444
      %v447 = vmul.f32 %v434, %v445
      %v448 = vmul.f32 %v435, %v445
      %v449 = vmul.f32 %v436, %v445
      %v450 = vmul.f32 %v437, %v445
      %v451 = vmul.f32 %v438, %v445
      %v452 = vmul.f32 %v439, %v445
      %v453 = vld [vmem:[%s4] sm:$0x1]
      %v455 = vlaneseq
      %v456 = vshrl.u32 %v455, 7
      %v457 = vsub.s32 0, %v456
      %v458 = vrot.slane %v453, %v457
      %v460 = vadd.f32 %v447, %v458
      %v461 = vadd.f32 %v448, %v458
      %v462 = vadd.f32 %v449, %v458
      %v463 = vadd.f32 %v450, %v458
      %v464 = vadd.f32 %v451, %v458
      %v465 = vadd.f32 %v452, %v458
      %v466 = vmax.f32 %v460, 0.0
      %v467 = vmax.f32 %v461, 0.0
      %v468 = vmax.f32 %v462, 0.0
      %v469 = vmax.f32 %v463, 0.0
      %v470 = vmax.f32 %v464, 0.0
      %v471 = vmax.f32 %v465, 0.0
      %v472 = vsel %vm428, %v466, 0.0
      %v473 = vsel %vm429, %v467, 0.0
      %v474 = vsel %vm430, %v468, 0.0
      %v475 = vsel %vm431, %v469, 0.0
      %v476 = vsel %vm432, %v470, 0.0
      %v477 = vsel %vm433, %v471, 0.0
      %v478 = vpack.c.bf16 %v473, %v472
      %v479 = vpack.c.bf16 %v475, %v474
      %v480 = vpack.c.bf16 %v477, %v476
      %vm481 = vcmask 257024
      %482 = vst.msk [vmem:[#allocation2] sm:$0xf] %vm481, 0
      %vm483 = vcmask 253952
      %vm484 = vsmask.f32 256
      %vm485 = vmand %vm483, %vm484
      %v486 = vld [vmem:[#allocation2 + $0x4] sm:$0x1]
      %v487 = vsel %vm485, 0, %v486
      %488 = vst [vmem:[#allocation2 + $0x4] sm:$0x1] %v487
      %vm489 = vcmask 257027
      %vm490 = vsmask.f32 7950
      %vm491 = vmand %vm489, %vm490
      %v492 = vld [vmem:[#allocation2 + $0x18] sm:$0x8]
      %v493 = vsel %vm491, 0, %v492
      %494 = vst [vmem:[#allocation2 + $0x18] sm:$0x8] %v493
      %495 = vst.msk [vmem:[#allocation2 + $0x1c] sm:$0xf] %vm481, 0
      %v499 = vunpack.c.l.b16 %v478
      %v500 = vunpack.c.h.b16 %v478
      %v501 = vunpack.c.l.b16 %v479
      %v502 = vunpack.c.h.b16 %v479
      %v503 = vunpack.c.l.b16 %v480
      %v504 = vunpack.c.h.b16 %v480
      %v505 = vpack.c.b16 %v499, %v499
      %v506 = vpack.c.b16 %v500, %v500
      %v507 = vpack.c.b16 %v501, %v501
      %v508 = vpack.c.b16 %v502, %v502
      %v509 = vpack.c.b16 %v503, %v503
      %v510 = vpack.c.b16 %v504, %v504
      %vm511 = vsmask.f32 4368
      %vm512 = vmor %vm484, %vm511
      %v514 = vshrl.u32 %v505, 16
      %v516 = vrot.slane %v514, 7
      %v517 = vshll.u32 %v505, 16
      %v519 = vor.u32 %v516, %v517
      %v520 = vrot.slane %v516, 4
      %v522 = vshrl.u32 %v506, 16
      %v524 = vrot.slane %v522, 7
      %v525 = vshll.u32 %v506, 16
      %v527 = vor.u32 %v524, %v525
      %v528 = vsel %vm512, %v520, %v527
      %v529 = vrot.slane %v524, 4
      %v531 = vshrl.u32 %v507, 16
      %v533 = vrot.slane %v531, 7
      %v534 = vshll.u32 %v507, 16
      %v536 = vor.u32 %v533, %v534
      %v537 = vsel %vm512, %v529, %v536
      %v538 = vrot.slane %v533, 4
      %v540 = vshrl.u32 %v508, 16
      %v542 = vrot.slane %v540, 7
      %v543 = vshll.u32 %v508, 16
      %v545 = vor.u32 %v542, %v543
      %v546 = vsel %vm512, %v538, %v545
      %v547 = vrot.slane %v542, 4
      %v549 = vshrl.u32 %v509, 16
      %v551 = vrot.slane %v549, 7
      %v552 = vshll.u32 %v509, 16
      %v554 = vor.u32 %v551, %v552
      %v555 = vsel %vm512, %v547, %v554
      %v556 = vrot.slane %v551, 4
      %v558 = vshrl.u32 %v510, 16
      %v560 = vrot.slane %v558, 7
      %v561 = vshll.u32 %v510, 16
      %v563 = vor.u32 %v560, %v561
      %v564 = vsel %vm512, %v556, %v563
      %vm571 = vcmask 257024
      %vm572 = vsmask.f32 7938
      %vm573 = vmand %vm571, %vm572
      %v574 = vld [vmem:[#allocation2 + $0x4] sm:$0xf]
      %v575 = vsel %vm573, %v519, %v574
      %576 = vst [vmem:[#allocation2 + $0x4] sm:$0xf] %v575
      %577 = vst.msk [vmem:[#allocation2 + $0x8] sm:$0xf] %vm481, %v528
      %578 = vst.msk [vmem:[#allocation2 + $0xc] sm:$0xf] %vm481, %v537
      %579 = vst.msk [vmem:[#allocation2 + $0x10] sm:$0xf] %vm481, %v546
      %580 = vst.msk [vmem:[#allocation2 + $0x14] sm:$0xf] %vm481, %v555
      %vm581 = vsmask.f32 3328
      %vm582 = vmand %vm571, %vm581
      %v583 = vld [vmem:[#allocation2 + $0x18] sm:$0xf]
      %v584 = vsel %vm582, %v564, %v583
      %585 = vst [vmem:[#allocation2 + $0x18] sm:$0xf] %v584
      %v586 = vld [vmem:[#allocation2] sm:$0xf]
      %v587 = vld [vmem:[#allocation2 + $0x4] sm:$0xf]
      %v588 = vld [vmem:[#allocation2 + $0x8] sm:$0xf]
      %v589 = vld [vmem:[#allocation2 + $0xc] sm:$0xf]
      %v590 = vld [vmem:[#allocation2 + $0x10] sm:$0xf]
      %v591 = vld [vmem:[#allocation2 + $0x14] sm:$0x7]
      %592 = vst.msk [vmem:[#allocation3] sm:$0xf] %vm481, %v586
      %593 = vst.msk [vmem:[#allocation3 + $0xc] sm:$0xf] %vm481, %v587
      %594 = vst.msk [vmem:[#allocation3 + $0x18] sm:$0xf] %vm481, %v588
      %595 = vst.msk [vmem:[#allocation3 + $0x24] sm:$0xf] %vm481, %v589
      %596 = vst.msk [vmem:[#allocation3 + $0x30] sm:$0xf] %vm481, %v590
      %vm597 = vcmask 256000
      %598 = vst.msk [vmem:[#allocation3 + $0x3c] sm:$0x7] %vm597, %v591
      %v599 = vld [vmem:[#allocation2] sm:$0xf]
      %v600 = vld [vmem:[#allocation2 + $0x4] sm:$0xf]
      %v601 = vld [vmem:[#allocation2 + $0x8] sm:$0xf]
      %v602 = vld [vmem:[#allocation2 + $0xc] sm:$0xf]
      %v603 = vld [vmem:[#allocation2 + $0x10] sm:$0xf]
      %v604 = vld [vmem:[#allocation2 + $0x14] sm:$0xf]
      %vm605 = vsmask.f32 7440
      %vm606 = vmor %vm581, %vm605
      %v608 = vshrl.u32 %v599, 16
      %v610 = vrot.slane %v608, 4
      %v611 = vshll.u32 %v599, 16
      %v613 = vrot.slane %v611, 5
      %v614 = vor.u32 %v610, %v613
      %v615 = vrot.slane %v614, 4
      %v617 = vshll.u32 %v600, 16
      %v619 = vrot.slane %v617, 5
      %v620 = vsel %vm606, %v615, %v619
      %v621 = vshrl.u32 %v600, 16
      %v623 = vrot.slane %v621, 4
      %v624 = vor.u32 %v623, %v619
      %v625 = vrot.slane %v624, 4
      %v627 = vshll.u32 %v601, 16
      %v629 = vrot.slane %v627, 5
      %v630 = vsel %vm606, %v625, %v629
      %v631 = vshrl.u32 %v601, 16
      %v633 = vrot.slane %v631, 4
      %v634 = vor.u32 %v633, %v629
      %v635 = vrot.slane %v634, 4
      %v637 = vshll.u32 %v602, 16
      %v639 = vrot.slane %v637, 5
      %v640 = vsel %vm606, %v635, %v639
      %v641 = vshrl.u32 %v602, 16
      %v643 = vrot.slane %v641, 4
      %v644 = vor.u32 %v643, %v639
      %v645 = vrot.slane %v644, 4
      %v647 = vshll.u32 %v603, 16
      %v649 = vrot.slane %v647, 5
      %v650 = vsel %vm606, %v645, %v649
      %v651 = vshrl.u32 %v603, 16
      %v653 = vrot.slane %v651, 4
      %v654 = vor.u32 %v653, %v649
      %v655 = vrot.slane %v654, 4
      %v657 = vshll.u32 %v604, 16
      %v659 = vrot.slane %v657, 5
      %v660 = vsel %vm606, %v655, %v659
      %v661 = vshrl.u32 %v604, 16
      %v663 = vrot.slane %v661, 4
      %v664 = vor.u32 %v663, %v659
      %v665 = vrot.slane %v664, 4
      %666 = vrot.lane.b32.xlu0 %v620, 32
      %v667 = vpop.permute.xlu0 %666
      %668 = vrot.lane.b32.xlu0 %v630, 32
      %v669 = vpop.permute.xlu0 %668
      %670 = vrot.lane.b32.xlu0 %v640, 32
      %v671 = vpop.permute.xlu0 %670
      %672 = vrot.lane.b32.xlu0 %v650, 32
      %v673 = vpop.permute.xlu0 %672
      %674 = vrot.lane.b32.xlu0 %v660, 32
      %v675 = vpop.permute.xlu0 %674
      %676 = vrot.lane.b32.xlu0 %v665, 32
      %v677 = vpop.permute.xlu0 %676
      %vm684 = vcmask 519424
      %685 = vst.msk [vmem:[#allocation3] sm:$0xf] %vm684, %v667
      %686 = vst.msk [vmem:[#allocation3 + $0xc] sm:$0xf] %vm684, %v669
      %687 = vst.msk [vmem:[#allocation3 + $0x18] sm:$0xf] %vm684, %v671
      %688 = vst.msk [vmem:[#allocation3 + $0x24] sm:$0xf] %vm684, %v673
      %689 = vst.msk [vmem:[#allocation3 + $0x30] sm:$0xf] %vm684, %v675
      %vm690 = vcmask 518400
      %691 = vst.msk [vmem:[#allocation3 + $0x3c] sm:$0x7] %vm690, %v677
      %v692 = vld [vmem:[#allocation2] sm:$0xe]
      %v693 = vld [vmem:[#allocation2 + $0x4] sm:$0xf]
      %v694 = vld [vmem:[#allocation2 + $0x8] sm:$0xf]
      %v695 = vld [vmem:[#allocation2 + $0xc] sm:$0xf]
      %v696 = vld [vmem:[#allocation2 + $0x10] sm:$0xf]
      %v697 = vld [vmem:[#allocation2 + $0x14] sm:$0xf]
      %vm704 = vcmask 1042432
      %vm705 = vcmask 1046532
      %vm706 = vmor %vm704, %vm705
      %v707 = vrot.slane %v692, 5
      %v708 = vrot.slane %v707, 4
      %v709 = vrot.slane %v693, 5
      %v710 = vsel %vm706, %v708, %v709
      %v711 = vrot.slane %v709, 4
      %v712 = vrot.slane %v694, 5
      %v713 = vsel %vm706, %v711, %v712
      %v714 = vrot.slane %v712, 4
      %v715 = vrot.slane %v695, 5
      %v716 = vsel %vm706, %v714, %v715
      %v717 = vrot.slane %v715, 4
      %v718 = vrot.slane %v696, 5
      %v719 = vsel %vm706, %v717, %v718
      %v720 = vrot.slane %v718, 4
      %v721 = vrot.slane %v697, 5
      %v722 = vsel %vm706, %v720, %v721
      %v723 = vrot.slane %v721, 4
      %724 = vrot.lane.b32.xlu0 %v710, 64
      %v725 = vpop.permute.xlu0 %724
      %726 = vrot.lane.b32.xlu0 %v713, 64
      %v727 = vpop.permute.xlu0 %726
      %728 = vrot.lane.b32.xlu0 %v716, 64
      %v729 = vpop.permute.xlu0 %728
      %730 = vrot.lane.b32.xlu0 %v719, 64
      %v731 = vpop.permute.xlu0 %730
      %732 = vrot.lane.b32.xlu0 %v722, 64
      %v733 = vpop.permute.xlu0 %732
      %734 = vrot.lane.b32.xlu0 %v723, 64
      %v735 = vpop.permute.xlu0 %734
      %vm742 = vcmask 781824
      %743 = vst.msk [vmem:[#allocation3] sm:$0xf] %vm742, %v725
      %744 = vst.msk [vmem:[#allocation3 + $0xc] sm:$0xf] %vm742, %v727
      %745 = vst.msk [vmem:[#allocation3 + $0x18] sm:$0xf] %vm742, %v729
      %746 = vst.msk [vmem:[#allocation3 + $0x24] sm:$0xf] %vm742, %v731
      %747 = vst.msk [vmem:[#allocation3 + $0x30] sm:$0xf] %vm742, %v733
      %vm748 = vcmask 780800
      %749 = vst.msk [vmem:[#allocation3 + $0x3c] sm:$0x7] %vm748, %v735
      %v750 = vld [vmem:[#allocation2 + $0x4] sm:$0xf]
      %v751 = vld [vmem:[#allocation2 + $0x8] sm:$0xf]
      %v752 = vld [vmem:[#allocation2 + $0xc] sm:$0xf]
      %v753 = vld [vmem:[#allocation2 + $0x10] sm:$0xf]
      %v754 = vld [vmem:[#allocation2 + $0x14] sm:$0xf]
      %v755 = vld [vmem:[#allocation2 + $0x18] sm:$0x7]
      %762 = vrot.lane.b32.xlu0 %v750, 96
      %v763 = vpop.permute.xlu0 %762
      %764 = vrot.lane.b32.xlu0 %v751, 96
      %v765 = vpop.permute.xlu0 %764
      %766 = vrot.lane.b32.xlu0 %v752, 96
      %v767 = vpop.permute.xlu0 %766
      %768 = vrot.lane.b32.xlu0 %v753, 96
      %v769 = vpop.permute.xlu0 %768
      %770 = vrot.lane.b32.xlu0 %v754, 96
      %v771 = vpop.permute.xlu0 %770
      %772 = vrot.lane.b32.xlu0 %v755, 96
      %v773 = vpop.permute.xlu0 %772
      %vm780 = vcmask 1044224
      %781 = vst.msk [vmem:[#allocation3] sm:$0xf] %vm780, %v763
      %782 = vst.msk [vmem:[#allocation3 + $0xc] sm:$0xf] %vm780, %v765
      %783 = vst.msk [vmem:[#allocation3 + $0x18] sm:$0xf] %vm780, %v767
      %784 = vst.msk [vmem:[#allocation3 + $0x24] sm:$0xf] %vm780, %v769
      %785 = vst.msk [vmem:[#allocation3 + $0x30] sm:$0xf] %vm780, %v771
      %vm786 = vcmask 1043200
      %787 = vst.msk [vmem:[#allocation3 + $0x3c] sm:$0x7] %vm786, %v773
      %v788 = vld [vmem:[#allocation2 + $0x4] sm:$0xf]
      %v789 = vld [vmem:[#allocation2 + $0x8] sm:$0xf]
      %v790 = vld [vmem:[#allocation2 + $0xc] sm:$0xf]
      %v791 = vld [vmem:[#allocation2 + $0x10] sm:$0xf]
      %v792 = vld [vmem:[#allocation2 + $0x14] sm:$0xf]
      %v793 = vld [vmem:[#allocation2 + $0x18] sm:$0xf]
      %v795 = vshrl.u32 %v788, 16
      %v797 = vrot.slane %v795, 4
      %v798 = vshll.u32 %v788, 16
      %v800 = vrot.slane %v798, 5
      %v801 = vor.u32 %v797, %v800
      %v802 = vrot.slane %v801, 4
      %v804 = vshll.u32 %v789, 16
      %v806 = vrot.slane %v804, 5
      %v807 = vsel %vm606, %v802, %v806
      %v808 = vshrl.u32 %v789, 16
      %v810 = vrot.slane %v808, 4
      %v811 = vor.u32 %v810, %v806
      %v812 = vrot.slane %v811, 4
      %v814 = vshll.u32 %v790, 16
      %v816 = vrot.slane %v814, 5
      %v817 = vsel %vm606, %v812, %v816
      %v818 = vshrl.u32 %v790, 16
      %v820 = vrot.slane %v818, 4
      %v821 = vor.u32 %v820, %v816
      %v822 = vrot.slane %v821, 4
      %v824 = vshll.u32 %v791, 16
      %v826 = vrot.slane %v824, 5
      %v827 = vsel %vm606, %v822, %v826
      %v828 = vshrl.u32 %v791, 16
      %v830 = vrot.slane %v828, 4
      %v831 = vor.u32 %v830, %v826
      %v832 = vrot.slane %v831, 4
      %v834 = vshll.u32 %v792, 16
      %v836 = vrot.slane %v834, 5
      %v837 = vsel %vm606, %v832, %v836
      %v838 = vshrl.u32 %v792, 16
      %v840 = vrot.slane %v838, 4
      %v841 = vor.u32 %v840, %v836
      %v842 = vrot.slane %v841, 4
      %v844 = vshll.u32 %v793, 16
      %v846 = vrot.slane %v844, 5
      %v847 = vsel %vm606, %v842, %v846
      %v848 = vshrl.u32 %v793, 16
      %v850 = vrot.slane %v848, 4
      %v851 = vor.u32 %v850, %v846
      %v852 = vrot.slane %v851, 4
      %859 = vst.msk [vmem:[#allocation3 + $0x4] sm:$0xf] %vm481, %v807
      %860 = vst.msk [vmem:[#allocation3 + $0x10] sm:$0xf] %vm481, %v817
      %861 = vst.msk [vmem:[#allocation3 + $0x1c] sm:$0xf] %vm481, %v827
      %862 = vst.msk [vmem:[#allocation3 + $0x28] sm:$0xf] %vm481, %v837
      %863 = vst.msk [vmem:[#allocation3 + $0x34] sm:$0xf] %vm481, %v847
      %864 = vst.msk [vmem:[#allocation3 + $0x40] sm:$0x7] %vm597, %v852
      %v865 = vld [vmem:[#allocation2 + $0x4] sm:$0xe]
      %v866 = vld [vmem:[#allocation2 + $0x8] sm:$0xf]
      %v867 = vld [vmem:[#allocation2 + $0xc] sm:$0xf]
      %v868 = vld [vmem:[#allocation2 + $0x10] sm:$0xf]
      %v869 = vld [vmem:[#allocation2 + $0x14] sm:$0xf]
      %v870 = vld [vmem:[#allocation2 + $0x18] sm:$0xf]
      %v877 = vrot.slane %v865, 5
      %v878 = vrot.slane %v877, 4
      %v879 = vrot.slane %v866, 5
      %v880 = vsel %vm706, %v878, %v879
      %v881 = vrot.slane %v879, 4
      %v882 = vrot.slane %v867, 5
      %v883 = vsel %vm706, %v881, %v882
      %v884 = vrot.slane %v882, 4
      %v885 = vrot.slane %v868, 5
      %v886 = vsel %vm706, %v884, %v885
      %v887 = vrot.slane %v885, 4
      %v888 = vrot.slane %v869, 5
      %v889 = vsel %vm706, %v887, %v888
      %v890 = vrot.slane %v888, 4
      %v891 = vrot.slane %v870, 5
      %v892 = vsel %vm706, %v890, %v891
      %v893 = vrot.slane %v891, 4
      %894 = vrot.lane.b32.xlu0 %v880, 32
      %v895 = vpop.permute.xlu0 %894
      %896 = vrot.lane.b32.xlu0 %v883, 32
      %v897 = vpop.permute.xlu0 %896
      %898 = vrot.lane.b32.xlu0 %v886, 32
      %v899 = vpop.permute.xlu0 %898
      %900 = vrot.lane.b32.xlu0 %v889, 32
      %v901 = vpop.permute.xlu0 %900
      %902 = vrot.lane.b32.xlu0 %v892, 32
      %v903 = vpop.permute.xlu0 %902
      %904 = vrot.lane.b32.xlu0 %v893, 32
      %v905 = vpop.permute.xlu0 %904
      %912 = vst.msk [vmem:[#allocation3 + $0x4] sm:$0xf] %vm684, %v895
      %913 = vst.msk [vmem:[#allocation3 + $0x10] sm:$0xf] %vm684, %v897
      %914 = vst.msk [vmem:[#allocation3 + $0x1c] sm:$0xf] %vm684, %v899
      %915 = vst.msk [vmem:[#allocation3 + $0x28] sm:$0xf] %vm684, %v901
      %916 = vst.msk [vmem:[#allocation3 + $0x34] sm:$0xf] %vm684, %v903
      %917 = vst.msk [vmem:[#allocation3 + $0x40] sm:$0x7] %vm690, %v905
      %v918 = vld [vmem:[#allocation2 + $0x8] sm:$0xf]
      %v919 = vld [vmem:[#allocation2 + $0xc] sm:$0xf]
      %v920 = vld [vmem:[#allocation2 + $0x10] sm:$0xf]
      %v921 = vld [vmem:[#allocation2 + $0x14] sm:$0xf]
      %v922 = vld [vmem:[#allocation2 + $0x18] sm:$0xf]
      %v923 = vld [vmem:[#allocation2 + $0x1c] sm:$0x7]
      %930 = vrot.lane.b32.xlu0 %v918, 64
      %v931 = vpop.permute.xlu0 %930
      %932 = vrot.lane.b32.xlu0 %v919, 64
      %v933 = vpop.permute.xlu0 %932
      %934 = vrot.lane.b32.xlu0 %v920, 64
      %v935 = vpop.permute.xlu0 %934
      %936 = vrot.lane.b32.xlu0 %v921, 64
      %v937 = vpop.permute.xlu0 %936
      %938 = vrot.lane.b32.xlu0 %v922, 64
      %v939 = vpop.permute.xlu0 %938
      %940 = vrot.lane.b32.xlu0 %v923, 64
      %v941 = vpop.permute.xlu0 %940
      %948 = vst.msk [vmem:[#allocation3 + $0x4] sm:$0xf] %vm742, %v931
      %949 = vst.msk [vmem:[#allocation3 + $0x10] sm:$0xf] %vm742, %v933
      %950 = vst.msk [vmem:[#allocation3 + $0x1c] sm:$0xf] %vm742, %v935
      %951 = vst.msk [vmem:[#allocation3 + $0x28] sm:$0xf] %vm742, %v937
      %952 = vst.msk [vmem:[#allocation3 + $0x34] sm:$0xf] %vm742, %v939
      %953 = vst.msk [vmem:[#allocation3 + $0x40] sm:$0x7] %vm748, %v941
      %v954 = vld [vmem:[#allocation2 + $0x8] sm:$0xf]
      %v955 = vld [vmem:[#allocation2 + $0xc] sm:$0xf]
      %v956 = vld [vmem:[#allocation2 + $0x10] sm:$0xf]
      %v957 = vld [vmem:[#allocation2 + $0x14] sm:$0xf]
      %v958 = vld [vmem:[#allocation2 + $0x18] sm:$0xf]
      %v959 = vld [vmem:[#allocation2 + $0x1c] sm:$0xf]
      %v961 = vshrl.u32 %v954, 16
      %v963 = vrot.slane %v961, 4
      %v964 = vshll.u32 %v954, 16
      %v966 = vrot.slane %v964, 5
      %v967 = vor.u32 %v963, %v966
      %v968 = vrot.slane %v967, 4
      %v970 = vshll.u32 %v955, 16
      %v972 = vrot.slane %v970, 5
      %v973 = vsel %vm606, %v968, %v972
      %v974 = vshrl.u32 %v955, 16
      %v976 = vrot.slane %v974, 4
      %v977 = vor.u32 %v976, %v972
      %v978 = vrot.slane %v977, 4
      %v980 = vshll.u32 %v956, 16
      %v982 = vrot.slane %v980, 5
      %v983 = vsel %vm606, %v978, %v982
      %v984 = vshrl.u32 %v956, 16
      %v986 = vrot.slane %v984, 4
      %v987 = vor.u32 %v986, %v982
      %v988 = vrot.slane %v987, 4
      %v990 = vshll.u32 %v957, 16
      %v992 = vrot.slane %v990, 5
      %v993 = vsel %vm606, %v988, %v992
      %v994 = vshrl.u32 %v957, 16
      %v996 = vrot.slane %v994, 4
      %v997 = vor.u32 %v996, %v992
      %v998 = vrot.slane %v997, 4
      %v1000 = vshll.u32 %v958, 16
      %v1002 = vrot.slane %v1000, 5
      %v1003 = vsel %vm606, %v998, %v1002
      %v1004 = vshrl.u32 %v958, 16
      %v1006 = vrot.slane %v1004, 4
      %v1007 = vor.u32 %v1006, %v1002
      %v1008 = vrot.slane %v1007, 4
      %v1010 = vshll.u32 %v959, 16
      %v1012 = vrot.slane %v1010, 5
      %v1013 = vsel %vm606, %v1008, %v1012
      %v1014 = vshrl.u32 %v959, 16
      %v1016 = vrot.slane %v1014, 4
      %v1017 = vor.u32 %v1016, %v1012
      %v1018 = vrot.slane %v1017, 4
      %1019 = vrot.lane.b32.xlu0 %v973, 96
      %v1020 = vpop.permute.xlu0 %1019
      %1021 = vrot.lane.b32.xlu0 %v983, 96
      %v1022 = vpop.permute.xlu0 %1021
      %1023 = vrot.lane.b32.xlu0 %v993, 96
      %v1024 = vpop.permute.xlu0 %1023
      %1025 = vrot.lane.b32.xlu0 %v1003, 96
      %v1026 = vpop.permute.xlu0 %1025
      %1027 = vrot.lane.b32.xlu0 %v1013, 96
      %v1028 = vpop.permute.xlu0 %1027
      %1029 = vrot.lane.b32.xlu0 %v1018, 96
      %v1030 = vpop.permute.xlu0 %1029
      %1037 = vst.msk [vmem:[#allocation3 + $0x4] sm:$0xf] %vm780, %v1020
      %1038 = vst.msk [vmem:[#allocation3 + $0x10] sm:$0xf] %vm780, %v1022
      %1039 = vst.msk [vmem:[#allocation3 + $0x1c] sm:$0xf] %vm780, %v1024
      %1040 = vst.msk [vmem:[#allocation3 + $0x28] sm:$0xf] %vm780, %v1026
      %1041 = vst.msk [vmem:[#allocation3 + $0x34] sm:$0xf] %vm780, %v1028
      %1042 = vst.msk [vmem:[#allocation3 + $0x40] sm:$0x7] %vm786, %v1030
      %v1043 = vld [vmem:[#allocation2 + $0x8] sm:$0xe]
      %v1044 = vld [vmem:[#allocation2 + $0xc] sm:$0xf]
      %v1045 = vld [vmem:[#allocation2 + $0x10] sm:$0xf]
      %v1046 = vld [vmem:[#allocation2 + $0x14] sm:$0xf]
      %v1047 = vld [vmem:[#allocation2 + $0x18] sm:$0xf]
      %v1048 = vld [vmem:[#allocation2 + $0x1c] sm:$0xf]
      %v1055 = vrot.slane %v1043, 5
      %v1056 = vrot.slane %v1055, 4
      %v1057 = vrot.slane %v1044, 5
      %v1058 = vsel %vm706, %v1056, %v1057
      %v1059 = vrot.slane %v1057, 4
      %v1060 = vrot.slane %v1045, 5
      %v1061 = vsel %vm706, %v1059, %v1060
      %v1062 = vrot.slane %v1060, 4
      %v1063 = vrot.slane %v1046, 5
      %v1064 = vsel %vm706, %v1062, %v1063
      %v1065 = vrot.slane %v1063, 4
      %v1066 = vrot.slane %v1047, 5
      %v1067 = vsel %vm706, %v1065, %v1066
      %v1068 = vrot.slane %v1066, 4
      %v1069 = vrot.slane %v1048, 5
      %v1070 = vsel %vm706, %v1068, %v1069
      %v1071 = vrot.slane %v1069, 4
      %1078 = vst.msk [vmem:[#allocation3 + $0x8] sm:$0xf] %vm481, %v1058
      %1079 = vst.msk [vmem:[#allocation3 + $0x14] sm:$0xf] %vm481, %v1061
      %1080 = vst.msk [vmem:[#allocation3 + $0x20] sm:$0xf] %vm481, %v1064
      %1081 = vst.msk [vmem:[#allocation3 + $0x2c] sm:$0xf] %vm481, %v1067
      %1082 = vst.msk [vmem:[#allocation3 + $0x38] sm:$0xf] %vm481, %v1070
      %1083 = vst.msk [vmem:[#allocation3 + $0x44] sm:$0x7] %vm597, %v1071
      %v1084 = vld [vmem:[#allocation3] sm:$0xff]
      %v1085 = vld [vmem:[#allocation3 + $0x8] sm:$0xf]
      %v1086 = vld [vmem:[#allocation3 + $0xc] sm:$0xff]
      %v1087 = vld [vmem:[#allocation3 + $0x14] sm:$0xf]
      %v1088 = vld [vmem:[#allocation3 + $0x18] sm:$0xff]
      %v1089 = vld [vmem:[#allocation3 + $0x20] sm:$0xf]
      %v1090 = vld [vmem:[#allocation3 + $0x24] sm:$0xff]
      %v1091 = vld [vmem:[#allocation3 + $0x2c] sm:$0xf]
      %v1092 = vld [vmem:[#allocation3 + $0x30] sm:$0xff]
      %v1093 = vld [vmem:[#allocation3 + $0x38] sm:$0xf]
      %v1094 = vld [vmem:[#allocation3 + $0x3c] sm:$0x77]
      %v1095 = vld [vmem:[#allocation3 + $0x44] sm:$0x7]
      %v1096 = vld [vmem:[%s1] sm:$0xf]
      %v1097 = vld [vmem:[%s1 + $0x4] sm:$0xf]
      %v1098 = vld [vmem:[%s1 + $0x8] sm:$0xf]
      %v1099 = vld [vmem:[%s1 + $0xc] sm:$0xf]
      %v1100 = vld [vmem:[%s1 + $0x10] sm:$0xf]
      %v1101 = vld [vmem:[%s1 + $0x14] sm:$0xf]
      %v1102 = vld [vmem:[%s1 + $0x18] sm:$0xf]
      %v1103 = vld [vmem:[%s1 + $0x1c] sm:$0xf]
      %v1104 = vld [vmem:[%s1 + $0x20] sm:$0xf]
      %v1105 = vld [vmem:[%s1 + $0x24] sm:$0xf]
      %v1106 = vld [vmem:[%s1 + $0x28] sm:$0xf]
      %v1107 = vld [vmem:[%s1 + $0x2c] sm:$0xf]
      %v1108 = vld [vmem:[%s1 + $0x30] sm:$0xf]
      %v1109 = vld [vmem:[%s1 + $0x34] sm:$0xf]
      %v1110 = vld [vmem:[%s1 + $0x38] sm:$0xf]
      %v1111 = vld [vmem:[%s1 + $0x3c] sm:$0xf]
      %v1112 = vld [vmem:[%s1 + $0x40] sm:$0xf]
      %v1113 = vld [vmem:[%s1 + $0x44] sm:$0xf]
      %v1114 = vld [vmem:[%s1 + $0x48] sm:$0xf]
      %v1115 = vld [vmem:[%s1 + $0x4c] sm:$0xf]
      %v1116 = vld [vmem:[%s1 + $0x50] sm:$0xf]
      %v1117 = vld [vmem:[%s1 + $0x54] sm:$0xf]
      %v1118 = vld [vmem:[%s1 + $0x58] sm:$0xf]
      %v1119 = vld [vmem:[%s1 + $0x5c] sm:$0xf]
      %v1120 = vld [vmem:[%s1 + $0x60] sm:$0xf]
      %v1121 = vld [vmem:[%s1 + $0x64] sm:$0xf]
      %v1122 = vld [vmem:[%s1 + $0x68] sm:$0xf]
      %v1123 = vld [vmem:[%s1 + $0x6c] sm:$0xf]
      %v1124 = vld [vmem:[%s1 + $0x70] sm:$0xf]
      %v1125 = vld [vmem:[%s1 + $0x74] sm:$0xf]
      %v1126 = vld [vmem:[%s1 + $0x78] sm:$0xf]
      %v1127 = vld [vmem:[%s1 + $0x7c] sm:$0xf]
      %v1128 = vld [vmem:[%s1 + $0x80] sm:$0xf]
      %v1129 = vld [vmem:[%s1 + $0x84] sm:$0xf]
      %v1130 = vld [vmem:[%s1 + $0x88] sm:$0xf]
      %v1131 = vld [vmem:[%s1 + $0x8c] sm:$0xf]
      %v1132 = vld [vmem:[%s2] sm:$0x1]
      %v1134 = vlaneseq
      %v1135 = vshrl.u32 %v1134, 7
      %v1136 = vsub.s32 0, %v1135
      %v1137 = vrot.slane %v1132, %v1136
      %v1151 = vunpack.c.l.b16 %v1084
      %v1152 = vunpack.c.h.b16 %v1084
      %v1153 = vunpack.c.l.b16 %v1085
      %v1154 = vunpack.c.l.b16 %v1086
      %v1155 = vunpack.c.h.b16 %v1086
      %v1156 = vunpack.c.l.b16 %v1087
      %v1157 = vunpack.c.l.b16 %v1088
      %v1158 = vunpack.c.h.b16 %v1088
      %v1159 = vunpack.c.l.b16 %v1089
      %v1160 = vunpack.c.l.b16 %v1090
      %v1161 = vunpack.c.h.b16 %v1090
      %v1162 = vunpack.c.l.b16 %v1091
      %v1163 = vunpack.c.l.b16 %v1092
      %v1164 = vunpack.c.h.b16 %v1092
      %v1165 = vunpack.c.l.b16 %v1093
      %v1166 = vunpack.c.l.b16 %v1094
      %v1167 = vunpack.c.h.b16 %v1094
      %v1168 = vunpack.c.l.b16 %v1095
      %v1169 = vpack.c.b16 %v1154, %v1151
      %v1170 = vpack.c.b16 %v1155, %v1152
      %v1171 = vpack.c.b16 %v1156, %v1153
      %v1172 = vpack.c.b16 %v1160, %v1157
      %v1173 = vpack.c.b16 %v1161, %v1158
      %v1174 = vpack.c.b16 %v1162, %v1159
      %v1175 = vpack.c.b16 %v1166, %v1163
      %v1176 = vpack.c.b16 %v1167, %v1164
      %v1177 = vpack.c.b16 %v1168, %v1165
      %v1220 = vunpack.c.l.b16 %v1096
      %v1221 = vunpack.c.l.b16 %v1097
      %v1222 = vunpack.c.l.b16 %v1098
      %v1223 = vunpack.c.l.b16 %v1099
      %v1224 = vunpack.c.l.b16 %v1100
      %v1225 = vunpack.c.l.b16 %v1101
      %v1226 = vunpack.c.l.b16 %v1102
      %v1227 = vunpack.c.l.b16 %v1103
      %v1228 = vunpack.c.l.b16 %v1104
      %v1229 = vunpack.c.l.b16 %v1105
      %v1230 = vunpack.c.l.b16 %v1106
      %v1231 = vunpack.c.l.b16 %v1107
      %v1232 = vunpack.c.l.b16 %v1108
      %v1233 = vunpack.c.l.b16 %v1109
      %v1234 = vunpack.c.l.b16 %v1110
      %v1235 = vunpack.c.l.b16 %v1111
      %v1236 = vunpack.c.l.b16 %v1112
      %v1237 = vunpack.c.l.b16 %v1113
      %v1238 = vunpack.c.l.b16 %v1114
      %v1239 = vunpack.c.l.b16 %v1115
      %v1240 = vunpack.c.l.b16 %v1116
      %v1241 = vunpack.c.l.b16 %v1117
      %v1242 = vunpack.c.l.b16 %v1118
      %v1243 = vunpack.c.l.b16 %v1119
      %v1244 = vunpack.c.l.b16 %v1120
      %v1245 = vunpack.c.l.b16 %v1121
      %v1246 = vunpack.c.l.b16 %v1122
      %v1247 = vunpack.c.l.b16 %v1123
      %v1248 = vunpack.c.l.b16 %v1124
      %v1249 = vunpack.c.l.b16 %v1125
      %v1250 = vunpack.c.l.b16 %v1126
      %v1251 = vunpack.c.l.b16 %v1127
      %v1252 = vunpack.c.l.b16 %v1128
      %v1253 = vunpack.c.l.b16 %v1129
      %v1254 = vunpack.c.l.b16 %v1130
      %v1255 = vunpack.c.l.b16 %v1131
      %v1256 = vpack.c.b16 %v1221, %v1220
      %v1257 = vpack.c.b16 %v1223, %v1222
      %v1258 = vpack.c.b16 %v1225, %v1224
      %v1259 = vpack.c.b16 %v1227, %v1226
      %v1260 = vpack.c.b16 %v1229, %v1228
      %v1261 = vpack.c.b16 %v1231, %v1230
      %v1262 = vpack.c.b16 %v1233, %v1232
      %v1263 = vpack.c.b16 %v1235, %v1234
      %v1264 = vpack.c.b16 %v1237, %v1236
      %v1265 = vpack.c.b16 %v1239, %v1238
      %v1266 = vpack.c.b16 %v1241, %v1240
      %v1267 = vpack.c.b16 %v1243, %v1242
      %v1268 = vpack.c.b16 %v1245, %v1244
      %v1269 = vpack.c.b16 %v1247, %v1246
      %v1270 = vpack.c.b16 %v1249, %v1248
      %v1271 = vpack.c.b16 %v1251, %v1250
      %v1272 = vpack.c.b16 %v1253, %v1252
      %v1273 = vpack.c.b16 %v1255, %v1254
      %vm1292 = vcmask 261120
      %v1294 = vsel %vm1292, %v1171, 0
      %v1297 = vsel %vm1292, %v1174, 0
      %v1300 = vsel %vm1292, %v1177, 0
      %1302 = vmatprep.subr.bf16.mxu0 0
      %1303 = vmatpush1.bf16.msra.mxu0 %v1263
      %1304 = vmatprep.subr.bf16.mxu0 0
      %1305 = vmatpush1.bf16.msra.mxu0 %v1262
      %1306 = vmatprep.subr.bf16.mxu0 0
      %1307 = vmatpush1.bf16.msra.mxu0 %v1261
      %1308 = vmatprep.subr.bf16.mxu0 0
      %1309 = vmatpush1.bf16.msra.mxu0 %v1260
      %1310 = vmatprep.subr.bf16.mxu0 0
      %1311 = vmatpush1.bf16.msra.mxu0 %v1259
      %1312 = vmatprep.subr.bf16.mxu0 0
      %1313 = vmatpush1.bf16.msra.mxu0 %v1258
      %1314 = vmatprep.subr.bf16.mxu0 0
      %1315 = vmatpush1.bf16.msra.mxu0 %v1257
      %1316 = vmatprep.subr.bf16.mxu0 0
      %1317 = vmatpush1.bf16.msra.mxu0 %v1256
      %1318 = vmatprep.subr.bf16.mxu0 0
      %1319 = vmatpush2.bf16.msra.mxu0 %v1271
      %1320 = vmatprep.subr.bf16.mxu0 0
      %1321 = vmatpush2.bf16.msra.mxu0 %v1270
      %1322 = vmatprep.subr.bf16.mxu0 0
      %1323 = vmatpush2.bf16.msra.mxu0 %v1269
      %1324 = vmatprep.subr.bf16.mxu0 0
      %1325 = vmatpush2.bf16.msra.mxu0 %v1268
      %1326 = vmatprep.subr.bf16.mxu0 0
      %1327 = vmatpush2.bf16.msra.mxu0 %v1267
      %1328 = vmatprep.subr.bf16.mxu0 0
      %1329 = vmatpush2.bf16.msra.mxu0 %v1266
      %1330 = vmatprep.subr.bf16.mxu0 0
      %1331 = vmatpush2.bf16.msra.mxu0 %v1265
      %1332 = vmatprep.subr.bf16.mxu0 0
      %1333 = vmatpush2.bf16.msra.mxu0 %v1264
      %1334 = vmatprep.mubr.bf16.mxu0 %v1170
      %1335 = vmatmul.mubr.bf16.gmra.mxu0 %v1169
      %v1336 = vpop.f32.mrf.mxu0
      %v1337 = vadd.f32 %v1137, %v1336
      %v1338 = vpop.f32.mrf.mxu0
      %v1339 = vpop.f32.mrf.mxu0
      %v1340 = vadd.f32 %v1137, %v1339
      %v1341 = vpop.f32.mrf.mxu0
      %1342 = vmatprep.mubr.bf16.mxu0 %v1173
      %1343 = vmatmul.mubr.bf16.gmra.mxu0 %v1172
      %v1344 = vpop.f32.mrf.mxu0
      %v1345 = vadd.f32 %v1137, %v1344
      %v1346 = vpop.f32.mrf.mxu0
      %v1347 = vpop.f32.mrf.mxu0
      %v1348 = vadd.f32 %v1137, %v1347
      %v1349 = vpop.f32.mrf.mxu0
      %1350 = vmatprep.mubr.bf16.mxu0 %v1176
      %1351 = vmatmul.mubr.bf16.gmra.mxu0 %v1175
      %v1352 = vpop.f32.mrf.mxu0
      %v1353 = vadd.f32 %v1137, %v1352
      %v1354 = vpop.f32.mrf.mxu0
      %v1355 = vpop.f32.mrf.mxu0
      %v1356 = vadd.f32 %v1137, %v1355
      %v1357 = vpop.f32.mrf.mxu0
      %1358 = vdwg.mxu0
      %1359 = vmatprep.subr.bf16.mxu0 0
      %1360 = vmatpush1.bf16.msra.mxu0 0
      %1361 = vmatprep.subr.bf16.mxu0 0
      %1362 = vmatpush1.bf16.msra.mxu0 0
      %1363 = vmatprep.subr.bf16.mxu0 0
      %1364 = vmatpush1.bf16.msra.mxu0 0
      %1365 = vmatprep.subr.bf16.mxu0 0
      %1366 = vmatpush1.bf16.msra.mxu0 0
      %1367 = vmatprep.subr.bf16.mxu0 0
      %1368 = vmatpush1.bf16.msra.mxu0 0
      %1369 = vmatprep.subr.bf16.mxu0 0
      %1370 = vmatpush1.bf16.msra.mxu0 0
      %1371 = vmatprep.subr.bf16.mxu0 0
      %1372 = vmatpush1.bf16.msra.mxu0 %v1273
      %1373 = vmatprep.subr.bf16.mxu0 0
      %1374 = vmatpush1.bf16.msra.mxu0 %v1272
      %1375 = vmatprep.subr.bf16.mxu0 0
      %1376 = vmatpush2.bf16.msra.mxu0 0
      %1377 = vmatprep.subr.bf16.mxu0 0
      %1378 = vmatpush2.bf16.msra.mxu0 0
      %1379 = vmatprep.subr.bf16.mxu0 0
      %1380 = vmatpush2.bf16.msra.mxu0 0
      %1381 = vmatprep.subr.bf16.mxu0 0
      %1382 = vmatpush2.bf16.msra.mxu0 0
      %1383 = vmatprep.subr.bf16.mxu0 0
      %1384 = vmatpush2.bf16.msra.mxu0 0
      %1385 = vmatprep.subr.bf16.mxu0 0
      %1386 = vmatpush2.bf16.msra.mxu0 0
      %1387 = vmatprep.subr.bf16.mxu0 0
      %1388 = vmatpush2.bf16.msra.mxu0 0
      %1389 = vmatprep.subr.bf16.mxu0 0
      %1390 = vmatpush2.bf16.msra.mxu0 0
      %1391 = vmatprep.mubr.bf16.mxu0 0
      %1392 = vmatmul.mubr.bf16.gmra.mxu0 %v1294
      %v1393 = vpop.f32.mrf.mxu0
      %v1394 = vadd.f32 %v1337, %v1393
      %v1395 = vpop.f32.mrf.mxu0
      %v1396 = vpop.f32.mrf.mxu0
      %v1397 = vadd.f32 %v1340, %v1396
      %v1398 = vpop.f32.mrf.mxu0
      %1399 = vmatprep.mubr.bf16.mxu0 0
      %1400 = vmatmul.mubr.bf16.gmra.mxu0 %v1297
      %v1401 = vpop.f32.mrf.mxu0
      %v1402 = vadd.f32 %v1345, %v1401
      %v1403 = vpop.f32.mrf.mxu0
      %v1404 = vpop.f32.mrf.mxu0
      %v1405 = vadd.f32 %v1348, %v1404
      %v1406 = vpop.f32.mrf.mxu0
      %1407 = vmatprep.mubr.bf16.mxu0 0
      %1408 = vmatmul.mubr.bf16.gmra.mxu0 %v1300
      %v1409 = vpop.f32.mrf.mxu0
      %v1410 = vadd.f32 %v1353, %v1409
      %v1411 = vpop.f32.mrf.mxu0
      %v1412 = vpop.f32.mrf.mxu0
      %v1413 = vadd.f32 %v1356, %v1412
      %v1414 = vpop.f32.mrf.mxu0
      %1415 = vdwg.mxu0
      %1416 = vst.msk [vmem:[%s258] sm:$0xff] %vm1292, %v1394
      %1417 = vst.msk [vmem:[%s258 + $0x8] sm:$0xff] %vm1292, %v1397
      %1418 = vst.msk [vmem:[%s258 + $0x10] sm:$0xff] %vm1292, %v1402
      %1419 = vst.msk [vmem:[%s258 + $0x18] sm:$0xff] %vm1292, %v1405
      %1420 = vst.msk [vmem:[%s258 + $0x20] sm:$0xff] %vm1292, %v1410
      %vm1421 = vcmask 259072
      %1422 = vst.msk [vmem:[%s258 + $0x28] sm:$0x3f] %vm1421, %v1413
      %v1423 = vsel %vm428, %v1394, 0.0
      %v1424 = vsel %vm429, %v1397, 0.0
      %v1425 = vsel %vm430, %v1402, 0.0
      %v1426 = vsel %vm431, %v1405, 0.0
      %v1427 = vsel %vm432, %v1410, 0.0
      %v1428 = vsel %vm433, %v1413, 0.0
      %v1429 = vsel %vm1292, %v1423, 0.0
      %v1430 = vsel %vm1292, %v1424, 0.0
      %v1431 = vadd.f32 %v1429, %v1430
      %v1432 = vsel %vm1292, %v1425, 0.0
      %v1433 = vadd.f32 %v1431, %v1432
      %v1434 = vsel %vm1292, %v1426, 0.0
      %v1435 = vadd.f32 %v1433, %v1434
      %v1436 = vsel %vm1292, %v1427, 0.0
      %v1437 = vadd.f32 %v1435, %v1436
      %v1438 = vsel %vm1421, %v1428, 0.0
      %v1439 = vadd.f32 %v1437, %v1438
      %v1440 = vrot.slane %v1439, 4
      %v1441 = vadd.f32 %v1439, %v1440
      %v1442 = vrot.slane %v1441, 2
      %v1443 = vadd.f32 %v1441, %v1442
      %v1444 = vrot.slane %v1443, 1
      %v1445 = vadd.f32 %v1443, %v1444
      %vm1446 = vcmask 253952
      %1447 = vst.msk [vmem:[%s262] sm:$0x1] %vm1446, %v1445
      %v1448 = vmul.f32 %v1423, %v1423
      %v1449 = vmul.f32 %v1424, %v1424
      %v1450 = vmul.f32 %v1425, %v1425
      %v1451 = vmul.f32 %v1426, %v1426
      %v1452 = vmul.f32 %v1427, %v1427
      %v1453 = vmul.f32 %v1428, %v1428
      %v1454 = vsel %vm1292, %v1448, 0.0
      %v1455 = vsel %vm1292, %v1449, 0.0
      %v1456 = vadd.f32 %v1454, %v1455
      %v1457 = vsel %vm1292, %v1450, 0.0
      %v1458 = vadd.f32 %v1456, %v1457
      %v1459 = vsel %vm1292, %v1451, 0.0
      %v1460 = vadd.f32 %v1458, %v1459
      %v1461 = vsel %vm1292, %v1452, 0.0
      %v1462 = vadd.f32 %v1460, %v1461
      %v1463 = vsel %vm1421, %v1453, 0.0
      %v1464 = vadd.f32 %v1462, %v1463
      %v1465 = vrot.slane %v1464, 4
      %v1466 = vadd.f32 %v1464, %v1465
      %v1467 = vrot.slane %v1466, 2
      %v1468 = vadd.f32 %v1466, %v1467
      %v1469 = vrot.slane %v1468, 1
      %v1470 = vadd.f32 %v1468, %v1469
      %1471 = vst.msk [vmem:[%s262 + $0x1] sm:$0x1] %vm1446, %v1470
      %p1472 = scmp.lt.s32.totalorder %s18, 1
      %s1473 = scalar_select %p1472, %s18, 1
      %s1474 = smul.addr %s1473, 6
      %s1475 = smul.addr %s1474, 8
      %s1476 = scalar_lea.vmem %s5, %s1475
      %p1477 = scmp.lt.s32.totalorder %s18, 1
      %s1478 = scalar_select %p1477, %s18, 1
      %s1479 = smul.addr %s1478, 2
      %s1480 = scalar_lea.vmem %s6, %s1479
      // Predicated region
      $region41: #{double_conv_block_pallas.4} parent=39 // pred_check
        %p1481 = pneg %p146
      $region42: #{double_conv_block_pallas.4} parent=39 // pred_check_branch
        %1483 = sbr.rel (%p1481) target = $region44
      $region43: #{double_conv_block_pallas.4} parent=39 // pred_region
        _
      $region44: #{double_conv_block_pallas.4} parent=39 // pred_fallthru
        _
      // Predicated region
      $region45: #{double_conv_block_pallas.4} parent=39 // pred_check
        %p1484 = pneg %p172
      $region46: #{double_conv_block_pallas.4} parent=39 // pred_check_branch
        %1486 = sbr.rel (%p1484) target = $region48
      $region47: #{double_conv_block_pallas.4} parent=39 // pred_region
        _
      $region48: #{double_conv_block_pallas.4} parent=39 // pred_fallthru
        _
    $region40: #{double_conv_block_pallas.4} parent=5 // pred_fallthru
      _
    %p1487 = scmp.le.s32.totalorder 2, %s13
    // Predicated region
    $region49: #{double_conv_block_pallas.4} parent=5 // pred_check
      %p1488 = pneg %p1487
    $region50: #{double_conv_block_pallas.4} parent=5 // pred_check_branch
      %1490 = sbr.rel (%p1488) target = $region52
    $region51: #{double_conv_block_pallas.4} parent=5 // pred_region
      %s1491 = ssub.s32 %s13, 2
      // Predicated region
      $region53: #{double_conv_block_pallas.4} parent=51 // pred_check
        %p1492 = pneg %p152
      $region54: #{double_conv_block_pallas.4} parent=51 // pred_check_branch
        %1494 = sbr.rel (%p1492) target = $region56
      $region55: #{double_conv_block_pallas.4} parent=51 // pred_region
        %p1495 = scmp.lt.s32.totalorder %s19, 1
        %s1496 = scalar_select %p1495, %s19, 1
        %s1497 = smul.addr %s1496, 6
        %s1498 = smul.addr %s1497, 8
        %s1499 = scalar_lea.vmem %s5, %s1498
      $region56: #{double_conv_block_pallas.4} parent=51 // pred_fallthru
        _
      // Predicated region
      $region57: #{double_conv_block_pallas.4} parent=51 // pred_check
        %p1500 = pneg %p178
      $region58: #{double_conv_block_pallas.4} parent=51 // pred_check_branch
        %1502 = sbr.rel (%p1500) target = $region60
      $region59: #{double_conv_block_pallas.4} parent=51 // pred_region
        %p1503 = scmp.lt.s32.totalorder %s19, 1
        %s1504 = scalar_select %p1503, %s19, 1
        %s1505 = smul.addr %s1504, 2
        %s1506 = scalar_lea.vmem %s6, %s1505
      $region60: #{double_conv_block_pallas.4} parent=51 // pred_fallthru
        _
    $region52: #{double_conv_block_pallas.4} parent=5 // pred_fallthru
      _
  $region6: #{double_conv_block_pallas.4} parent=0 // loop_footer
    %s17 = sadd.s32 1, %s13
  $region7: #{double_conv_block_pallas.4} parent=0 // loop_footer_branch
    %12 = sbr.rel target = $region3
  $region8: #{double_conv_block_pallas.4} parent=0 // loop_exit
    _

// kernel: double_conv_block_pallas.3
$region0: #{double_conv_block_pallas.3}
  #allocation0 [shape = 'u32[]', space=smem, size = 0x4, offset = 0x4, fixed_abs, tag = 'smem constant byte address 0x4 - core index']
  #allocation1 [shape = 'u32[144,128]{1,0:T(1,128)}', space=vmem, size = 0x12000, scoped, tag = 'internal scratch']
  #allocation2 [shape = 'bf16[64,32]{1,0:T(8,128)(2,1)}', space=vmem, size = 0x4000, scoped, tag = 'scratch operand']
  #allocation3 [shape = 'bf16[46,288]{1,0:T(8,128)(2,1)}', space=vmem, size = 0x9000, scoped, tag = 'scratch operand']
  %s0 = inlined_call_operand.vmem [shape: bf16[2,48,32], index: 0, kind: input, shape index: {}]
  %s1 = inlined_call_operand.vmem [shape: bf16[288,32], index: 1, kind: input, shape index: {}]
  %s2 = inlined_call_operand.vmem [shape: f32[1,32], index: 2, kind: input, shape index: {}]
  %s3 = inlined_call_operand.vmem [shape: f32[2,48,32], index: 3, kind: output, shape index: {0}]
  %s4 = inlined_call_operand.vmem [shape: f32[2,2,32], index: 4, kind: output, shape index: {1}]
  %5 = xla_tuple %s3, %s4
  %s6 = sld [smem:[#allocation0]]
  $region53: #{double_conv_block_pallas.3} parent=0
    _
  %s8 = ssub.s32 1, %s6
  %s9 = scalar_select 0, %s8, %s6
  loop: start=0, step=1, limit=4
  $region2: #{double_conv_block_pallas.3} parent=0 // loop_pre_header
    _
  $region3: #{double_conv_block_pallas.3} parent=0 // loop_header
    %s11 = sphi 0, %s15
    %p12 = scmp.ge.s32.totalorder %s11, 4
    %s21 = sphi 0, %s23
    %s24 = sphi 0, %s21
    %s25 = sphi 0, %s24
    %s41 = sphi 0, %s25
    %s45 = sphi 0, %s45
    %s47 = sphi 0, %s45
    %s48 = sphi 0, %s47
    %s62 = sphi 0, %s48
    %s66 = sphi 0, %s66
    %s68 = sphi 0, %s66
    %s69 = sphi 0, %s68
    %s83 = sphi 0, %s69
    %s89 = sphi 0, %s91
    %s92 = sphi 0, %s89
    %s93 = sphi 0, %s92
    %s109 = sphi 0, %s93
    %s115 = sphi 0, %s117
    %s118 = sphi 0, %s115
    %s119 = sphi 0, %s118
    %s135 = sphi 0, %s119
  $region4: #{double_conv_block_pallas.3} parent=0 // loop_header_branch
    %14 = sbr.rel (%p12) target = $region8
  $region5: #{double_conv_block_pallas.3} parent=0 // loop_body
    %s16 = ssub.s32 %s11, 1
    %s17 = ssub.s32 %s11, 2
    %s18 = sadd.s32 %s11, 1
    %s19 = ssub.s32 %s11, %s18
    %p20 = scmp.eq.s32.totalorder %s19, 0
    %s22 = sadd.s32 %s21, 1
    %s23 = scalar_select %p20, %s21, %s22
    %p26 = pneg %p20
    %p27 = scmp.eq.s32.totalorder %s11, 1
    %p28 = por %p26, %p27
    %p29 = scmp.ne.s32.totalorder %s21, %s24
    %p30 = scmp.eq.s32.totalorder %s11, 0
    %p31 = por %p29, %p30
    %p32 = scmp.ne.s32.totalorder %s21, %s24
    %p33 = scmp.eq.s32.totalorder %s16, 1
    %p34 = por %p32, %p33
    %p35 = scmp.ne.s32.totalorder %s24, %s25
    %p36 = scmp.eq.s32.totalorder %s16, 0
    %p37 = por %p35, %p36
    %p38 = scmp.ne.s32.totalorder %s24, %s25
    %p39 = scmp.eq.s32.totalorder %s17, 1
    %p40 = por %p38, %p39
    %p42 = scmp.ne.s32.totalorder %s25, %s41
    %p43 = scmp.eq.s32.totalorder %s17, 0
    %p44 = por %p42, %p43
    %s46 = sadd.s32 %s45, 1
    %p49 = scmp.eq.s32.totalorder %s11, 1
    %p50 = scmp.ne.s32.totalorder %s45, %s47
    %p51 = scmp.eq.s32.totalorder %s11, 0
    %p52 = por %p50, %p51
    %p53 = scmp.ne.s32.totalorder %s45, %s47
    %p54 = scmp.eq.s32.totalorder %s16, 1
    %p55 = por %p53, %p54
    %p56 = scmp.ne.s32.totalorder %s47, %s48
    %p57 = scmp.eq.s32.totalorder %s16, 0
    %p58 = por %p56, %p57
    %p59 = scmp.ne.s32.totalorder %s47, %s48
    %p60 = scmp.eq.s32.totalorder %s17, 1
    %p61 = por %p59, %p60
    %p63 = scmp.ne.s32.totalorder %s48, %s62
    %p64 = scmp.eq.s32.totalorder %s17, 0
    %p65 = por %p63, %p64
    %s67 = sadd.s32 %s66, 1
    %p70 = scmp.eq.s32.totalorder %s11, 1
    %p71 = scmp.ne.s32.totalorder %s66, %s68
    %p72 = scmp.eq.s32.totalorder %s11, 0
    %p73 = por %p71, %p72
    %p74 = scmp.ne.s32.totalorder %s66, %s68
    %p75 = scmp.eq.s32.totalorder %s16, 1
    %p76 = por %p74, %p75
    %p77 = scmp.ne.s32.totalorder %s68, %s69
    %p78 = scmp.eq.s32.totalorder %s16, 0
    %p79 = por %p77, %p78
    %p80 = scmp.ne.s32.totalorder %s68, %s69
    %p81 = scmp.eq.s32.totalorder %s17, 1
    %p82 = por %p80, %p81
    %p84 = scmp.ne.s32.totalorder %s69, %s83
    %p85 = scmp.eq.s32.totalorder %s17, 0
    %p86 = por %p84, %p85
    %s87 = ssub.s32 %s11, %s18
    %p88 = scmp.eq.s32.totalorder %s87, 0
    %s90 = sadd.s32 %s89, 1
    %s91 = scalar_select %p88, %s89, %s90
    %p94 = pneg %p88
    %p95 = scmp.eq.s32.totalorder %s11, 1
    %p96 = por %p94, %p95
    %p97 = scmp.ne.s32.totalorder %s89, %s92
    %p98 = scmp.eq.s32.totalorder %s11, 0
    %p99 = por %p97, %p98
    %p100 = scmp.ne.s32.totalorder %s89, %s92
    %p101 = scmp.eq.s32.totalorder %s16, 1
    %p102 = por %p100, %p101
    %p103 = scmp.ne.s32.totalorder %s92, %s93
    %p104 = scmp.eq.s32.totalorder %s16, 0
    %p105 = por %p103, %p104
    %p106 = scmp.ne.s32.totalorder %s92, %s93
    %p107 = scmp.eq.s32.totalorder %s17, 1
    %p108 = por %p106, %p107
    %p110 = scmp.ne.s32.totalorder %s93, %s109
    %p111 = scmp.eq.s32.totalorder %s17, 0
    %p112 = por %p110, %p111
    %s113 = ssub.s32 %s11, %s18
    %p114 = scmp.eq.s32.totalorder %s113, 0
    %s116 = sadd.s32 %s115, 1
    %s117 = scalar_select %p114, %s115, %s116
    %p120 = pneg %p114
    %p121 = scmp.eq.s32.totalorder %s11, 1
    %p122 = por %p120, %p121
    %p123 = scmp.ne.s32.totalorder %s115, %s118
    %p124 = scmp.eq.s32.totalorder %s11, 0
    %p125 = por %p123, %p124
    %p126 = scmp.ne.s32.totalorder %s115, %s118
    %p127 = scmp.eq.s32.totalorder %s16, 1
    %p128 = por %p126, %p127
    %p129 = scmp.ne.s32.totalorder %s118, %s119
    %p130 = scmp.eq.s32.totalorder %s16, 0
    %p131 = por %p129, %p130
    %p132 = scmp.ne.s32.totalorder %s118, %s119
    %p133 = scmp.eq.s32.totalorder %s17, 1
    %p134 = por %p132, %p133
    %p136 = scmp.ne.s32.totalorder %s119, %s135
    %p137 = scmp.eq.s32.totalorder %s17, 0
    %p138 = por %p136, %p137
    %p139 = scmp.le.s32.totalorder 1, %s11
    %p140 = scmp.lt.s32.totalorder %s11, 3
    %p141 = pnand %p139, %p140
    %p142 = pneg %p141
    // Predicated region
    $region9: #{double_conv_block_pallas.3} parent=5 // pred_check
      _
    $region10: #{double_conv_block_pallas.3} parent=5 // pred_check_branch
      %144 = sbr.rel (%p141) target = $region12
    $region11: #{double_conv_block_pallas.3} parent=5 // pred_region
      %s145 = ssub.s32 %s11, 1
      // Predicated region
      $region13: #{double_conv_block_pallas.3} parent=11 // pred_check
        %p146 = pneg %p58
      $region14: #{double_conv_block_pallas.3} parent=11 // pred_check_branch
        %148 = sbr.rel (%p146) target = $region16
      $region15: #{double_conv_block_pallas.3} parent=11 // pred_region
        _
      $region16: #{double_conv_block_pallas.3} parent=11 // pred_fallthru
        _
      // Predicated region
      $region17: #{double_conv_block_pallas.3} parent=11 // pred_check
        %p149 = pneg %p79
      $region18: #{double_conv_block_pallas.3} parent=11 // pred_check_branch
        %151 = sbr.rel (%p149) target = $region20
      $region19: #{double_conv_block_pallas.3} parent=11 // pred_region
        _
      $region20: #{double_conv_block_pallas.3} parent=11 // pred_fallthru
        _
    $region12: #{double_conv_block_pallas.3} parent=5 // pred_fallthru
      _
    %p152 = scmp.lt.s32.totalorder %s11, 2
    // Predicated region
    $region21: #{double_conv_block_pallas.3} parent=5 // pred_check
      %p153 = pneg %p152
    $region22: #{double_conv_block_pallas.3} parent=5 // pred_check_branch
      %155 = sbr.rel (%p153) target = $region24
    $region23: #{double_conv_block_pallas.3} parent=5 // pred_region
      // Predicated region
      $region25: #{double_conv_block_pallas.3} parent=23 // pred_check
        %p156 = pneg %p31
      $region26: #{double_conv_block_pallas.3} parent=23 // pred_check_branch
        %158 = sbr.rel (%p156) target = $region28
      $region27: #{double_conv_block_pallas.3} parent=23 // pred_region
        %p159 = scmp.lt.s32.totalorder %s11, 1
        %s160 = scalar_select %p159, %s11, 1
        %s161 = smul.addr %s160, 6
        %s162 = smul.addr %s161, 4
        %s163 = scalar_lea.vmem %s0, %s162
      $region28: #{double_conv_block_pallas.3} parent=23 // pred_fallthru
        _
    $region24: #{double_conv_block_pallas.3} parent=5 // pred_fallthru
      _
    %p164 = scmp.le.s32.totalorder 1, %s11
    %p165 = scmp.lt.s32.totalorder %s11, 3
    %p166 = pnand %p164, %p165
    %p167 = pneg %p166
    // Predicated region
    $region29: #{double_conv_block_pallas.3} parent=5 // pred_check
      _
    $region30: #{double_conv_block_pallas.3} parent=5 // pred_check_branch
      %169 = sbr.rel (%p166) target = $region32
    $region31: #{double_conv_block_pallas.3} parent=5 // pred_region
      %s170 = ssub.s32 %s11, 1
      %p171 = scmp.lt.s32.totalorder %s16, 1
      %s172 = scalar_select %p171, %s16, 1
      %s173 = smul.addr %s172, 6
      %s174 = smul.addr %s173, 4
      %s175 = scalar_lea.vmem %s0, %s174
      %p176 = pneg %p37
      %p177 = pneg %p34
      %p178 = pneg %p58
      %p179 = pneg %p55
      %p180 = pneg %p79
      %p181 = pneg %p76
      %p182 = pneg %p105
      %p183 = pneg %p102
      %p184 = scmp.lt.s32.totalorder %s16, 1
      %s185 = scalar_select %p184, %s16, 1
      %s186 = smul.addr %s185, 6
      %s187 = smul.addr %s186, 8
      %s188 = scalar_lea.vmem %s3, %s187
      %p189 = pneg %p131
      %p190 = pneg %p128
      %p191 = scmp.lt.s32.totalorder %s16, 1
      %s192 = scalar_select %p191, %s16, 1
      %s193 = smul.addr %s192, 2
      %s194 = scalar_lea.vmem %s4, %s193
      %p195 = scmp.lt.s32.totalorder %s16, 1
      %s196 = scalar_select %p195, %s16, 1
      %s197 = smul.addr %s196, 6
      %s198 = smul.addr %s197, 4
      %s199 = scalar_lea.vmem %s0, %s198
      %p200 = scmp.lt.s32.totalorder %s16, 1
      %s201 = scalar_select %p200, %s16, 1
      %s202 = smul.addr %s201, 6
      %s203 = smul.addr %s202, 8
      %s204 = scalar_lea.vmem %s3, %s203
      %p205 = scmp.lt.s32.totalorder %s16, 1
      %s206 = scalar_select %p205, %s16, 1
      %s207 = smul.addr %s206, 2
      %s208 = scalar_lea.vmem %s4, %s207
      %v210 = vlaneseq
      %v211 = vshrl.u32 %v210, 7
      %v212 = vadd.s32 %v211, 8
      %v213 = vadd.s32 %v211, 16
      %v214 = vadd.s32 %v211, 24
      %v215 = vadd.s32 %v211, 32
      %v216 = vadd.s32 %v211, 40
      %vm217 = vcmp.ge.s32.totalorder %v211, 0
      %vm218 = vcmp.ge.s32.totalorder %v212, 0
      %vm219 = vcmp.ge.s32.totalorder %v213, 0
      %vm220 = vcmp.ge.s32.totalorder %v214, 0
      %vm221 = vcmp.ge.s32.totalorder %v215, 0
      %vm222 = vcmp.ge.s32.totalorder %v216, 0
      %vm223 = vcmp.lt.s32.totalorder %v211, 6
      %vm224 = vcmp.lt.s32.totalorder %v212, 6
      %vm225 = vcmp.lt.s32.totalorder %v213, 6
      %vm226 = vcmp.lt.s32.totalorder %v214, 6
      %vm227 = vcmp.lt.s32.totalorder %v215, 6
      %vm228 = vcmp.lt.s32.totalorder %v216, 6
      %vm229 = vmand %vm217, %vm223
      %vm230 = vmand %vm218, %vm224
      %vm231 = vmand %vm219, %vm225
      %vm232 = vmand %vm220, %vm226
      %vm233 = vmand %vm221, %vm227
      %vm234 = vmand %vm222, %vm228
      %vm235 = vcmp.ge.s32.totalorder %v211, 8
      %vm236 = vcmp.ge.s32.totalorder %v212, 8
      %vm237 = vcmp.ge.s32.totalorder %v213, 8
      %vm238 = vcmp.ge.s32.totalorder %v214, 8
      %vm239 = vcmp.ge.s32.totalorder %v215, 8
      %vm240 = vcmp.ge.s32.totalorder %v216, 8
      %vm241 = vcmp.lt.s32.totalorder %v211, 14
      %vm242 = vcmp.lt.s32.totalorder %v212, 14
      %vm243 = vcmp.lt.s32.totalorder %v213, 14
      %vm244 = vcmp.lt.s32.totalorder %v214, 14
      %vm245 = vcmp.lt.s32.totalorder %v215, 14
      %vm246 = vcmp.lt.s32.totalorder %v216, 14
      %vm247 = vmand %vm235, %vm241
      %vm248 = vmand %vm236, %vm242
      %vm249 = vmand %vm237, %vm243
      %vm250 = vmand %vm238, %vm244
      %vm251 = vmand %vm239, %vm245
      %vm252 = vmand %vm240, %vm246
      %vm253 = vmor %vm229, %vm247
      %vm254 = vmor %vm230, %vm248
      %vm255 = vmor %vm231, %vm249
      %vm256 = vmor %vm232, %vm250
      %vm257 = vmor %vm233, %vm251
      %vm258 = vmor %vm234, %vm252
      %vm259 = vcmp.ge.s32.totalorder %v211, 16
      %vm260 = vcmp.ge.s32.totalorder %v212, 16
      %vm261 = vcmp.ge.s32.totalorder %v213, 16
      %vm262 = vcmp.ge.s32.totalorder %v214, 16
      %vm263 = vcmp.ge.s32.totalorder %v215, 16
      %vm264 = vcmp.ge.s32.totalorder %v216, 16
      %vm265 = vcmp.lt.s32.totalorder %v211, 22
      %vm266 = vcmp.lt.s32.totalorder %v212, 22
      %vm267 = vcmp.lt.s32.totalorder %v213, 22
      %vm268 = vcmp.lt.s32.totalorder %v214, 22
      %vm269 = vcmp.lt.s32.totalorder %v215, 22
      %vm270 = vcmp.lt.s32.totalorder %v216, 22
      %vm271 = vmand %vm259, %vm265
      %vm272 = vmand %vm260, %vm266
      %vm273 = vmand %vm261, %vm267
      %vm274 = vmand %vm262, %vm268
      %vm275 = vmand %vm263, %vm269
      %vm276 = vmand %vm264, %vm270
      %vm277 = vmor %vm253, %vm271
      %vm278 = vmor %vm254, %vm272
      %vm279 = vmor %vm255, %vm273
      %vm280 = vmor %vm256, %vm274
      %vm281 = vmor %vm257, %vm275
      %vm282 = vmor %vm258, %vm276
      %vm283 = vcmp.ge.s32.totalorder %v211, 24
      %vm284 = vcmp.ge.s32.totalorder %v212, 24
      %vm285 = vcmp.ge.s32.totalorder %v213, 24
      %vm286 = vcmp.ge.s32.totalorder %v214, 24
      %vm287 = vcmp.ge.s32.totalorder %v215, 24
      %vm288 = vcmp.ge.s32.totalorder %v216, 24
      %vm289 = vcmp.lt.s32.totalorder %v211, 30
      %vm290 = vcmp.lt.s32.totalorder %v212, 30
      %vm291 = vcmp.lt.s32.totalorder %v213, 30
      %vm292 = vcmp.lt.s32.totalorder %v214, 30
      %vm293 = vcmp.lt.s32.totalorder %v215, 30
      %vm294 = vcmp.lt.s32.totalorder %v216, 30
      %vm295 = vmand %vm283, %vm289
      %vm296 = vmand %vm284, %vm290
      %vm297 = vmand %vm285, %vm291
      %vm298 = vmand %vm286, %vm292
      %vm299 = vmand %vm287, %vm293
      %vm300 = vmand %vm288, %vm294
      %vm301 = vmor %vm277, %vm295
      %vm302 = vmor %vm278, %vm296
      %vm303 = vmor %vm279, %vm297
      %vm304 = vmor %vm280, %vm298
      %vm305 = vmor %vm281, %vm299
      %vm306 = vmor %vm282, %vm300
      %vm307 = vcmp.ge.s32.totalorder %v211, 32
      %vm308 = vcmp.ge.s32.totalorder %v212, 32
      %vm309 = vcmp.ge.s32.totalorder %v213, 32
      %vm310 = vcmp.ge.s32.totalorder %v214, 32
      %vm311 = vcmp.ge.s32.totalorder %v215, 32
      %vm312 = vcmp.ge.s32.totalorder %v216, 32
      %vm313 = vcmp.lt.s32.totalorder %v211, 38
      %vm314 = vcmp.lt.s32.totalorder %v212, 38
      %vm315 = vcmp.lt.s32.totalorder %v213, 38
      %vm316 = vcmp.lt.s32.totalorder %v214, 38
      %vm317 = vcmp.lt.s32.totalorder %v215, 38
      %vm318 = vcmp.lt.s32.totalorder %v216, 38
      %vm319 = vmand %vm307, %vm313
      %vm320 = vmand %vm308, %vm314
      %vm321 = vmand %vm309, %vm315
      %vm322 = vmand %vm310, %vm316
      %vm323 = vmand %vm311, %vm317
      %vm324 = vmand %vm312, %vm318
      %vm325 = vmor %vm301, %vm319
      %vm326 = vmor %vm302, %vm320
      %vm327 = vmor %vm303, %vm321
      %vm328 = vmor %vm304, %vm322
      %vm329 = vmor %vm305, %vm323
      %vm330 = vmor %vm306, %vm324
      %vm331 = vcmp.ge.s32.totalorder %v211, 40
      %vm332 = vcmp.ge.s32.totalorder %v212, 40
      %vm333 = vcmp.ge.s32.totalorder %v213, 40
      %vm334 = vcmp.ge.s32.totalorder %v214, 40
      %vm335 = vcmp.ge.s32.totalorder %v215, 40
      %vm336 = vcmp.ge.s32.totalorder %v216, 40
      %vm337 = vcmp.lt.s32.totalorder %v211, 46
      %vm338 = vcmp.lt.s32.totalorder %v212, 46
      %vm339 = vcmp.lt.s32.totalorder %v213, 46
      %vm340 = vcmp.lt.s32.totalorder %v214, 46
      %vm341 = vcmp.lt.s32.totalorder %v215, 46
      %vm342 = vcmp.lt.s32.totalorder %v216, 46
      %vm343 = vmand %vm331, %vm337
      %vm344 = vmand %vm332, %vm338
      %vm345 = vmand %vm333, %vm339
      %vm346 = vmand %vm334, %vm340
      %vm347 = vmand %vm335, %vm341
      %vm348 = vmand %vm336, %vm342
      %vm349 = vmor %vm325, %vm343
      %vm350 = vmor %vm326, %vm344
      %vm351 = vmor %vm327, %vm345
      %vm352 = vmor %vm328, %vm346
      %vm353 = vmor %vm329, %vm347
      %vm354 = vmor %vm330, %vm348
      %v355 = vlaneseq
      %v356 = vand.u32 %v355, 127
      %vm357 = vcmp.ge.s32.totalorder %v356, 4
      %vm358 = vcmp.lt.s32.totalorder %v356, 28
      %vm359 = vmand %vm357, %vm358
      %v360 = vsel %vm349, 1, 0
      %v361 = vsel %vm350, 1, 0
      %v362 = vsel %vm351, 1, 0
      %v363 = vsel %vm352, 1, 0
      %v364 = vsel %vm353, 1, 0
      %v365 = vsel %vm354, 1, 0
      %vm366 = vcmp.eq.s32.totalorder %v360, 1
      %vm367 = vcmp.eq.s32.totalorder %v361, 1
      %vm368 = vcmp.eq.s32.totalorder %v362, 1
      %vm369 = vcmp.eq.s32.totalorder %v363, 1
      %vm370 = vcmp.eq.s32.totalorder %v364, 1
      %vm371 = vcmp.eq.s32.totalorder %v365, 1
      %v372 = vsel %vm359, 1, 0
      %vm373 = vcmp.eq.s32.totalorder %v372, 1
      %vm374 = vmand %vm366, %vm373
      %vm375 = vmand %vm367, %vm373
      %vm376 = vmand %vm368, %vm373
      %vm377 = vmand %vm369, %vm373
      %vm378 = vmand %vm370, %vm373
      %vm379 = vmand %vm371, %vm373
      %v380 = vld [vmem:[%s199] sm:$0xf]
      %v381 = vld [vmem:[%s199 + $0x4] sm:$0xf]
      %v382 = vld [vmem:[%s199 + $0x8] sm:$0xf]
      %v383 = vld [vmem:[%s199 + $0xc] sm:$0xf]
      %v384 = vld [vmem:[%s199 + $0x10] sm:$0xf]
      %v385 = vld [vmem:[%s199 + $0x14] sm:$0x7]
      %vm386 = vcmask 257024
      %387 = vst.msk [vmem:[#allocation2] sm:$0xf] %vm386, 0
      %vm388 = vcmask 253952
      %vm389 = vsmask.f32 256
      %vm390 = vmand %vm388, %vm389
      %v391 = vld [vmem:[#allocation2 + $0x4] sm:$0x1]
      %v392 = vsel %vm390, 0, %v391
      %393 = vst [vmem:[#allocation2 + $0x4] sm:$0x1] %v392
      %vm394 = vcmask 257027
      %vm395 = vsmask.f32 7950
      %vm396 = vmand %vm394, %vm395
      %v397 = vld [vmem:[#allocation2 + $0x18] sm:$0x8]
      %v398 = vsel %vm396, 0, %v397
      %399 = vst [vmem:[#allocation2 + $0x18] sm:$0x8] %v398
      %400 = vst.msk [vmem:[#allocation2 + $0x1c] sm:$0xf] %vm386, 0
      %vm401 = vsmask.f32 4368
      %vm402 = vmor %vm389, %vm401
      %v404 = vshrl.u32 %v380, 16
      %v406 = vrot.slane %v404, 7
      %v407 = vshll.u32 %v380, 16
      %v409 = vor.u32 %v406, %v407
      %v410 = vrot.slane %v406, 4
      %v412 = vshrl.u32 %v381, 16
      %v414 = vrot.slane %v412, 7
      %v415 = vshll.u32 %v381, 16
      %v417 = vor.u32 %v414, %v415
      %v418 = vsel %vm402, %v410, %v417
      %v419 = vrot.slane %v414, 4
      %v421 = vshrl.u32 %v382, 16
      %v423 = vrot.slane %v421, 7
      %v424 = vshll.u32 %v382, 16
      %v426 = vor.u32 %v423, %v424
      %v427 = vsel %vm402, %v419, %v426
      %v428 = vrot.slane %v423, 4
      %v430 = vshrl.u32 %v383, 16
      %v432 = vrot.slane %v430, 7
      %v433 = vshll.u32 %v383, 16
      %v435 = vor.u32 %v432, %v433
      %v436 = vsel %vm402, %v428, %v435
      %v437 = vrot.slane %v432, 4
      %v439 = vshrl.u32 %v384, 16
      %v441 = vrot.slane %v439, 7
      %v442 = vshll.u32 %v384, 16
      %v444 = vor.u32 %v441, %v442
      %v445 = vsel %vm402, %v437, %v444
      %v446 = vrot.slane %v441, 4
      %v448 = vshrl.u32 %v385, 16
      %v450 = vrot.slane %v448, 7
      %v451 = vshll.u32 %v385, 16
      %v453 = vor.u32 %v450, %v451
      %v454 = vsel %vm402, %v446, %v453
      %vm461 = vcmask 257024
      %vm462 = vsmask.f32 7938
      %vm463 = vmand %vm461, %vm462
      %v464 = vld [vmem:[#allocation2 + $0x4] sm:$0xf]
      %v465 = vsel %vm463, %v409, %v464
      %466 = vst [vmem:[#allocation2 + $0x4] sm:$0xf] %v465
      %467 = vst.msk [vmem:[#allocation2 + $0x8] sm:$0xf] %vm386, %v418
      %468 = vst.msk [vmem:[#allocation2 + $0xc] sm:$0xf] %vm386, %v427
      %469 = vst.msk [vmem:[#allocation2 + $0x10] sm:$0xf] %vm386, %v436
      %470 = vst.msk [vmem:[#allocation2 + $0x14] sm:$0xf] %vm386, %v445
      %vm471 = vsmask.f32 3328
      %vm472 = vmand %vm461, %vm471
      %v473 = vld [vmem:[#allocation2 + $0x18] sm:$0xf]
      %v474 = vsel %vm472, %v454, %v473
      %475 = vst [vmem:[#allocation2 + $0x18] sm:$0xf] %v474
      %v476 = vld [vmem:[#allocation2] sm:$0xf]
      %v477 = vld [vmem:[#allocation2 + $0x4] sm:$0xf]
      %v478 = vld [vmem:[#allocation2 + $0x8] sm:$0xf]
      %v479 = vld [vmem:[#allocation2 + $0xc] sm:$0xf]
      %v480 = vld [vmem:[#allocation2 + $0x10] sm:$0xf]
      %v481 = vld [vmem:[#allocation2 + $0x14] sm:$0x7]
      %482 = vst.msk [vmem:[#allocation3] sm:$0xf] %vm386, %v476
      %483 = vst.msk [vmem:[#allocation3 + $0xc] sm:$0xf] %vm386, %v477
      %484 = vst.msk [vmem:[#allocation3 + $0x18] sm:$0xf] %vm386, %v478
      %485 = vst.msk [vmem:[#allocation3 + $0x24] sm:$0xf] %vm386, %v479
      %486 = vst.msk [vmem:[#allocation3 + $0x30] sm:$0xf] %vm386, %v480
      %vm487 = vcmask 256000
      %488 = vst.msk [vmem:[#allocation3 + $0x3c] sm:$0x7] %vm487, %v481
      %v489 = vld [vmem:[#allocation2] sm:$0xf]
      %v490 = vld [vmem:[#allocation2 + $0x4] sm:$0xf]
      %v491 = vld [vmem:[#allocation2 + $0x8] sm:$0xf]
      %v492 = vld [vmem:[#allocation2 + $0xc] sm:$0xf]
      %v493 = vld [vmem:[#allocation2 + $0x10] sm:$0xf]
      %v494 = vld [vmem:[#allocation2 + $0x14] sm:$0xf]
      %vm495 = vsmask.f32 7440
      %vm496 = vmor %vm471, %vm495
      %v498 = vshrl.u32 %v489, 16
      %v500 = vrot.slane %v498, 4
      %v501 = vshll.u32 %v489, 16
      %v503 = vrot.slane %v501, 5
      %v504 = vor.u32 %v500, %v503
      %v505 = vrot.slane %v504, 4
      %v507 = vshll.u32 %v490, 16
      %v509 = vrot.slane %v507, 5
      %v510 = vsel %vm496, %v505, %v509
      %v511 = vshrl.u32 %v490, 16
      %v513 = vrot.slane %v511, 4
      %v514 = vor.u32 %v513, %v509
      %v515 = vrot.slane %v514, 4
      %v517 = vshll.u32 %v491, 16
      %v519 = vrot.slane %v517, 5
      %v520 = vsel %vm496, %v515, %v519
      %v521 = vshrl.u32 %v491, 16
      %v523 = vrot.slane %v521, 4
      %v524 = vor.u32 %v523, %v519
      %v525 = vrot.slane %v524, 4
      %v527 = vshll.u32 %v492, 16
      %v529 = vrot.slane %v527, 5
      %v530 = vsel %vm496, %v525, %v529
      %v531 = vshrl.u32 %v492, 16
      %v533 = vrot.slane %v531, 4
      %v534 = vor.u32 %v533, %v529
      %v535 = vrot.slane %v534, 4
      %v537 = vshll.u32 %v493, 16
      %v539 = vrot.slane %v537, 5
      %v540 = vsel %vm496, %v535, %v539
      %v541 = vshrl.u32 %v493, 16
      %v543 = vrot.slane %v541, 4
      %v544 = vor.u32 %v543, %v539
      %v545 = vrot.slane %v544, 4
      %v547 = vshll.u32 %v494, 16
      %v549 = vrot.slane %v547, 5
      %v550 = vsel %vm496, %v545, %v549
      %v551 = vshrl.u32 %v494, 16
      %v553 = vrot.slane %v551, 4
      %v554 = vor.u32 %v553, %v549
      %v555 = vrot.slane %v554, 4
      %556 = vrot.lane.b32.xlu0 %v510, 32
      %v557 = vpop.permute.xlu0 %556
      %558 = vrot.lane.b32.xlu0 %v520, 32
      %v559 = vpop.permute.xlu0 %558
      %560 = vrot.lane.b32.xlu0 %v530, 32
      %v561 = vpop.permute.xlu0 %560
      %562 = vrot.lane.b32.xlu0 %v540, 32
      %v563 = vpop.permute.xlu0 %562
      %564 = vrot.lane.b32.xlu0 %v550, 32
      %v565 = vpop.permute.xlu0 %564
      %566 = vrot.lane.b32.xlu0 %v555, 32
      %v567 = vpop.permute.xlu0 %566
      %vm574 = vcmask 519424
      %575 = vst.msk [vmem:[#allocation3] sm:$0xf] %vm574, %v557
      %576 = vst.msk [vmem:[#allocation3 + $0xc] sm:$0xf] %vm574, %v559
      %577 = vst.msk [vmem:[#allocation3 + $0x18] sm:$0xf] %vm574, %v561
      %578 = vst.msk [vmem:[#allocation3 + $0x24] sm:$0xf] %vm574, %v563
      %579 = vst.msk [vmem:[#allocation3 + $0x30] sm:$0xf] %vm574, %v565
      %vm580 = vcmask 518400
      %581 = vst.msk [vmem:[#allocation3 + $0x3c] sm:$0x7] %vm580, %v567
      %v582 = vld [vmem:[#allocation2] sm:$0xe]
      %v583 = vld [vmem:[#allocation2 + $0x4] sm:$0xf]
      %v584 = vld [vmem:[#allocation2 + $0x8] sm:$0xf]
      %v585 = vld [vmem:[#allocation2 + $0xc] sm:$0xf]
      %v586 = vld [vmem:[#allocation2 + $0x10] sm:$0xf]
      %v587 = vld [vmem:[#allocation2 + $0x14] sm:$0xf]
      %vm594 = vcmask 1042432
      %vm595 = vcmask 1046532
      %vm596 = vmor %vm594, %vm595
      %v597 = vrot.slane %v582, 5
      %v598 = vrot.slane %v597, 4
      %v599 = vrot.slane %v583, 5
      %v600 = vsel %vm596, %v598, %v599
      %v601 = vrot.slane %v599, 4
      %v602 = vrot.slane %v584, 5
      %v603 = vsel %vm596, %v601, %v602
      %v604 = vrot.slane %v602, 4
      %v605 = vrot.slane %v585, 5
      %v606 = vsel %vm596, %v604, %v605
      %v607 = vrot.slane %v605, 4
      %v608 = vrot.slane %v586, 5
      %v609 = vsel %vm596, %v607, %v608
      %v610 = vrot.slane %v608, 4
      %v611 = vrot.slane %v587, 5
      %v612 = vsel %vm596, %v610, %v611
      %v613 = vrot.slane %v611, 4
      %614 = vrot.lane.b32.xlu0 %v600, 64
      %v615 = vpop.permute.xlu0 %614
      %616 = vrot.lane.b32.xlu0 %v603, 64
      %v617 = vpop.permute.xlu0 %616
      %618 = vrot.lane.b32.xlu0 %v606, 64
      %v619 = vpop.permute.xlu0 %618
      %620 = vrot.lane.b32.xlu0 %v609, 64
      %v621 = vpop.permute.xlu0 %620
      %622 = vrot.lane.b32.xlu0 %v612, 64
      %v623 = vpop.permute.xlu0 %622
      %624 = vrot.lane.b32.xlu0 %v613, 64
      %v625 = vpop.permute.xlu0 %624
      %vm632 = vcmask 781824
      %633 = vst.msk [vmem:[#allocation3] sm:$0xf] %vm632, %v615
      %634 = vst.msk [vmem:[#allocation3 + $0xc] sm:$0xf] %vm632, %v617
      %635 = vst.msk [vmem:[#allocation3 + $0x18] sm:$0xf] %vm632, %v619
      %636 = vst.msk [vmem:[#allocation3 + $0x24] sm:$0xf] %vm632, %v621
      %637 = vst.msk [vmem:[#allocation3 + $0x30] sm:$0xf] %vm632, %v623
      %vm638 = vcmask 780800
      %639 = vst.msk [vmem:[#allocation3 + $0x3c] sm:$0x7] %vm638, %v625
      %v640 = vld [vmem:[#allocation2 + $0x4] sm:$0xf]
      %v641 = vld [vmem:[#allocation2 + $0x8] sm:$0xf]
      %v642 = vld [vmem:[#allocation2 + $0xc] sm:$0xf]
      %v643 = vld [vmem:[#allocation2 + $0x10] sm:$0xf]
      %v644 = vld [vmem:[#allocation2 + $0x14] sm:$0xf]
      %v645 = vld [vmem:[#allocation2 + $0x18] sm:$0x7]
      %652 = vrot.lane.b32.xlu0 %v640, 96
      %v653 = vpop.permute.xlu0 %652
      %654 = vrot.lane.b32.xlu0 %v641, 96
      %v655 = vpop.permute.xlu0 %654
      %656 = vrot.lane.b32.xlu0 %v642, 96
      %v657 = vpop.permute.xlu0 %656
      %658 = vrot.lane.b32.xlu0 %v643, 96
      %v659 = vpop.permute.xlu0 %658
      %660 = vrot.lane.b32.xlu0 %v644, 96
      %v661 = vpop.permute.xlu0 %660
      %662 = vrot.lane.b32.xlu0 %v645, 96
      %v663 = vpop.permute.xlu0 %662
      %vm670 = vcmask 1044224
      %671 = vst.msk [vmem:[#allocation3] sm:$0xf] %vm670, %v653
      %672 = vst.msk [vmem:[#allocation3 + $0xc] sm:$0xf] %vm670, %v655
      %673 = vst.msk [vmem:[#allocation3 + $0x18] sm:$0xf] %vm670, %v657
      %674 = vst.msk [vmem:[#allocation3 + $0x24] sm:$0xf] %vm670, %v659
      %675 = vst.msk [vmem:[#allocation3 + $0x30] sm:$0xf] %vm670, %v661
      %vm676 = vcmask 1043200
      %677 = vst.msk [vmem:[#allocation3 + $0x3c] sm:$0x7] %vm676, %v663
      %v678 = vld [vmem:[#allocation2 + $0x4] sm:$0xf]
      %v679 = vld [vmem:[#allocation2 + $0x8] sm:$0xf]
      %v680 = vld [vmem:[#allocation2 + $0xc] sm:$0xf]
      %v681 = vld [vmem:[#allocation2 + $0x10] sm:$0xf]
      %v682 = vld [vmem:[#allocation2 + $0x14] sm:$0xf]
      %v683 = vld [vmem:[#allocation2 + $0x18] sm:$0xf]
      %v685 = vshrl.u32 %v678, 16
      %v687 = vrot.slane %v685, 4
      %v688 = vshll.u32 %v678, 16
      %v690 = vrot.slane %v688, 5
      %v691 = vor.u32 %v687, %v690
      %v692 = vrot.slane %v691, 4
      %v694 = vshll.u32 %v679, 16
      %v696 = vrot.slane %v694, 5
      %v697 = vsel %vm496, %v692, %v696
      %v698 = vshrl.u32 %v679, 16
      %v700 = vrot.slane %v698, 4
      %v701 = vor.u32 %v700, %v696
      %v702 = vrot.slane %v701, 4
      %v704 = vshll.u32 %v680, 16
      %v706 = vrot.slane %v704, 5
      %v707 = vsel %vm496, %v702, %v706
      %v708 = vshrl.u32 %v680, 16
      %v710 = vrot.slane %v708, 4
      %v711 = vor.u32 %v710, %v706
      %v712 = vrot.slane %v711, 4
      %v714 = vshll.u32 %v681, 16
      %v716 = vrot.slane %v714, 5
      %v717 = vsel %vm496, %v712, %v716
      %v718 = vshrl.u32 %v681, 16
      %v720 = vrot.slane %v718, 4
      %v721 = vor.u32 %v720, %v716
      %v722 = vrot.slane %v721, 4
      %v724 = vshll.u32 %v682, 16
      %v726 = vrot.slane %v724, 5
      %v727 = vsel %vm496, %v722, %v726
      %v728 = vshrl.u32 %v682, 16
      %v730 = vrot.slane %v728, 4
      %v731 = vor.u32 %v730, %v726
      %v732 = vrot.slane %v731, 4
      %v734 = vshll.u32 %v683, 16
      %v736 = vrot.slane %v734, 5
      %v737 = vsel %vm496, %v732, %v736
      %v738 = vshrl.u32 %v683, 16
      %v740 = vrot.slane %v738, 4
      %v741 = vor.u32 %v740, %v736
      %v742 = vrot.slane %v741, 4
      %749 = vst.msk [vmem:[#allocation3 + $0x4] sm:$0xf] %vm386, %v697
      %750 = vst.msk [vmem:[#allocation3 + $0x10] sm:$0xf] %vm386, %v707
      %751 = vst.msk [vmem:[#allocation3 + $0x1c] sm:$0xf] %vm386, %v717
      %752 = vst.msk [vmem:[#allocation3 + $0x28] sm:$0xf] %vm386, %v727
      %753 = vst.msk [vmem:[#allocation3 + $0x34] sm:$0xf] %vm386, %v737
      %754 = vst.msk [vmem:[#allocation3 + $0x40] sm:$0x7] %vm487, %v742
      %v755 = vld [vmem:[#allocation2 + $0x4] sm:$0xe]
      %v756 = vld [vmem:[#allocation2 + $0x8] sm:$0xf]
      %v757 = vld [vmem:[#allocation2 + $0xc] sm:$0xf]
      %v758 = vld [vmem:[#allocation2 + $0x10] sm:$0xf]
      %v759 = vld [vmem:[#allocation2 + $0x14] sm:$0xf]
      %v760 = vld [vmem:[#allocation2 + $0x18] sm:$0xf]
      %v767 = vrot.slane %v755, 5
      %v768 = vrot.slane %v767, 4
      %v769 = vrot.slane %v756, 5
      %v770 = vsel %vm596, %v768, %v769
      %v771 = vrot.slane %v769, 4
      %v772 = vrot.slane %v757, 5
      %v773 = vsel %vm596, %v771, %v772
      %v774 = vrot.slane %v772, 4
      %v775 = vrot.slane %v758, 5
      %v776 = vsel %vm596, %v774, %v775
      %v777 = vrot.slane %v775, 4
      %v778 = vrot.slane %v759, 5
      %v779 = vsel %vm596, %v777, %v778
      %v780 = vrot.slane %v778, 4
      %v781 = vrot.slane %v760, 5
      %v782 = vsel %vm596, %v780, %v781
      %v783 = vrot.slane %v781, 4
      %784 = vrot.lane.b32.xlu0 %v770, 32
      %v785 = vpop.permute.xlu0 %784
      %786 = vrot.lane.b32.xlu0 %v773, 32
      %v787 = vpop.permute.xlu0 %786
      %788 = vrot.lane.b32.xlu0 %v776, 32
      %v789 = vpop.permute.xlu0 %788
      %790 = vrot.lane.b32.xlu0 %v779, 32
      %v791 = vpop.permute.xlu0 %790
      %792 = vrot.lane.b32.xlu0 %v782, 32
      %v793 = vpop.permute.xlu0 %792
      %794 = vrot.lane.b32.xlu0 %v783, 32
      %v795 = vpop.permute.xlu0 %794
      %802 = vst.msk [vmem:[#allocation3 + $0x4] sm:$0xf] %vm574, %v785
      %803 = vst.msk [vmem:[#allocation3 + $0x10] sm:$0xf] %vm574, %v787
      %804 = vst.msk [vmem:[#allocation3 + $0x1c] sm:$0xf] %vm574, %v789
      %805 = vst.msk [vmem:[#allocation3 + $0x28] sm:$0xf] %vm574, %v791
      %806 = vst.msk [vmem:[#allocation3 + $0x34] sm:$0xf] %vm574, %v793
      %807 = vst.msk [vmem:[#allocation3 + $0x40] sm:$0x7] %vm580, %v795
      %v808 = vld [vmem:[#allocation2 + $0x8] sm:$0xf]
      %v809 = vld [vmem:[#allocation2 + $0xc] sm:$0xf]
      %v810 = vld [vmem:[#allocation2 + $0x10] sm:$0xf]
      %v811 = vld [vmem:[#allocation2 + $0x14] sm:$0xf]
      %v812 = vld [vmem:[#allocation2 + $0x18] sm:$0xf]
      %v813 = vld [vmem:[#allocation2 + $0x1c] sm:$0x7]
      %820 = vrot.lane.b32.xlu0 %v808, 64
      %v821 = vpop.permute.xlu0 %820
      %822 = vrot.lane.b32.xlu0 %v809, 64
      %v823 = vpop.permute.xlu0 %822
      %824 = vrot.lane.b32.xlu0 %v810, 64
      %v825 = vpop.permute.xlu0 %824
      %826 = vrot.lane.b32.xlu0 %v811, 64
      %v827 = vpop.permute.xlu0 %826
      %828 = vrot.lane.b32.xlu0 %v812, 64
      %v829 = vpop.permute.xlu0 %828
      %830 = vrot.lane.b32.xlu0 %v813, 64
      %v831 = vpop.permute.xlu0 %830
      %838 = vst.msk [vmem:[#allocation3 + $0x4] sm:$0xf] %vm632, %v821
      %839 = vst.msk [vmem:[#allocation3 + $0x10] sm:$0xf] %vm632, %v823
      %840 = vst.msk [vmem:[#allocation3 + $0x1c] sm:$0xf] %vm632, %v825
      %841 = vst.msk [vmem:[#allocation3 + $0x28] sm:$0xf] %vm632, %v827
      %842 = vst.msk [vmem:[#allocation3 + $0x34] sm:$0xf] %vm632, %v829
      %843 = vst.msk [vmem:[#allocation3 + $0x40] sm:$0x7] %vm638, %v831
      %v844 = vld [vmem:[#allocation2 + $0x8] sm:$0xf]
      %v845 = vld [vmem:[#allocation2 + $0xc] sm:$0xf]
      %v846 = vld [vmem:[#allocation2 + $0x10] sm:$0xf]
      %v847 = vld [vmem:[#allocation2 + $0x14] sm:$0xf]
      %v848 = vld [vmem:[#allocation2 + $0x18] sm:$0xf]
      %v849 = vld [vmem:[#allocation2 + $0x1c] sm:$0xf]
      %v851 = vshrl.u32 %v844, 16
      %v853 = vrot.slane %v851, 4
      %v854 = vshll.u32 %v844, 16
      %v856 = vrot.slane %v854, 5
      %v857 = vor.u32 %v853, %v856
      %v858 = vrot.slane %v857, 4
      %v860 = vshll.u32 %v845, 16
      %v862 = vrot.slane %v860, 5
      %v863 = vsel %vm496, %v858, %v862
      %v864 = vshrl.u32 %v845, 16
      %v866 = vrot.slane %v864, 4
      %v867 = vor.u32 %v866, %v862
      %v868 = vrot.slane %v867, 4
      %v870 = vshll.u32 %v846, 16
      %v872 = vrot.slane %v870, 5
      %v873 = vsel %vm496, %v868, %v872
      %v874 = vshrl.u32 %v846, 16
      %v876 = vrot.slane %v874, 4
      %v877 = vor.u32 %v876, %v872
      %v878 = vrot.slane %v877, 4
      %v880 = vshll.u32 %v847, 16
      %v882 = vrot.slane %v880, 5
      %v883 = vsel %vm496, %v878, %v882
      %v884 = vshrl.u32 %v847, 16
      %v886 = vrot.slane %v884, 4
      %v887 = vor.u32 %v886, %v882
      %v888 = vrot.slane %v887, 4
      %v890 = vshll.u32 %v848, 16
      %v892 = vrot.slane %v890, 5
      %v893 = vsel %vm496, %v888, %v892
      %v894 = vshrl.u32 %v848, 16
      %v896 = vrot.slane %v894, 4
      %v897 = vor.u32 %v896, %v892
      %v898 = vrot.slane %v897, 4
      %v900 = vshll.u32 %v849, 16
      %v902 = vrot.slane %v900, 5
      %v903 = vsel %vm496, %v898, %v902
      %v904 = vshrl.u32 %v849, 16
      %v906 = vrot.slane %v904, 4
      %v907 = vor.u32 %v906, %v902
      %v908 = vrot.slane %v907, 4
      %909 = vrot.lane.b32.xlu0 %v863, 96
      %v910 = vpop.permute.xlu0 %909
      %911 = vrot.lane.b32.xlu0 %v873, 96
      %v912 = vpop.permute.xlu0 %911
      %913 = vrot.lane.b32.xlu0 %v883, 96
      %v914 = vpop.permute.xlu0 %913
      %915 = vrot.lane.b32.xlu0 %v893, 96
      %v916 = vpop.permute.xlu0 %915
      %917 = vrot.lane.b32.xlu0 %v903, 96
      %v918 = vpop.permute.xlu0 %917
      %919 = vrot.lane.b32.xlu0 %v908, 96
      %v920 = vpop.permute.xlu0 %919
      %927 = vst.msk [vmem:[#allocation3 + $0x4] sm:$0xf] %vm670, %v910
      %928 = vst.msk [vmem:[#allocation3 + $0x10] sm:$0xf] %vm670, %v912
      %929 = vst.msk [vmem:[#allocation3 + $0x1c] sm:$0xf] %vm670, %v914
      %930 = vst.msk [vmem:[#allocation3 + $0x28] sm:$0xf] %vm670, %v916
      %931 = vst.msk [vmem:[#allocation3 + $0x34] sm:$0xf] %vm670, %v918
      %932 = vst.msk [vmem:[#allocation3 + $0x40] sm:$0x7] %vm676, %v920
      %v933 = vld [vmem:[#allocation2 + $0x8] sm:$0xe]
      %v934 = vld [vmem:[#allocation2 + $0xc] sm:$0xf]
      %v935 = vld [vmem:[#allocation2 + $0x10] sm:$0xf]
      %v936 = vld [vmem:[#allocation2 + $0x14] sm:$0xf]
      %v937 = vld [vmem:[#allocation2 + $0x18] sm:$0xf]
      %v938 = vld [vmem:[#allocation2 + $0x1c] sm:$0xf]
      %v945 = vrot.slane %v933, 5
      %v946 = vrot.slane %v945, 4
      %v947 = vrot.slane %v934, 5
      %v948 = vsel %vm596, %v946, %v947
      %v949 = vrot.slane %v947, 4
      %v950 = vrot.slane %v935, 5
      %v951 = vsel %vm596, %v949, %v950
      %v952 = vrot.slane %v950, 4
      %v953 = vrot.slane %v936, 5
      %v954 = vsel %vm596, %v952, %v953
      %v955 = vrot.slane %v953, 4
      %v956 = vrot.slane %v937, 5
      %v957 = vsel %vm596, %v955, %v956
      %v958 = vrot.slane %v956, 4
      %v959 = vrot.slane %v938, 5
      %v960 = vsel %vm596, %v958, %v959
      %v961 = vrot.slane %v959, 4
      %968 = vst.msk [vmem:[#allocation3 + $0x8] sm:$0xf] %vm386, %v948
      %969 = vst.msk [vmem:[#allocation3 + $0x14] sm:$0xf] %vm386, %v951
      %970 = vst.msk [vmem:[#allocation3 + $0x20] sm:$0xf] %vm386, %v954
      %971 = vst.msk [vmem:[#allocation3 + $0x2c] sm:$0xf] %vm386, %v957
      %972 = vst.msk [vmem:[#allocation3 + $0x38] sm:$0xf] %vm386, %v960
      %973 = vst.msk [vmem:[#allocation3 + $0x44] sm:$0x7] %vm487, %v961
      %v974 = vld [vmem:[#allocation3] sm:$0xff]
      %v975 = vld [vmem:[#allocation3 + $0x8] sm:$0xf]
      %v976 = vld [vmem:[#allocation3 + $0xc] sm:$0xff]
      %v977 = vld [vmem:[#allocation3 + $0x14] sm:$0xf]
      %v978 = vld [vmem:[#allocation3 + $0x18] sm:$0xff]
      %v979 = vld [vmem:[#allocation3 + $0x20] sm:$0xf]
      %v980 = vld [vmem:[#allocation3 + $0x24] sm:$0xff]
      %v981 = vld [vmem:[#allocation3 + $0x2c] sm:$0xf]
      %v982 = vld [vmem:[#allocation3 + $0x30] sm:$0xff]
      %v983 = vld [vmem:[#allocation3 + $0x38] sm:$0xf]
      %v984 = vld [vmem:[#allocation3 + $0x3c] sm:$0x77]
      %v985 = vld [vmem:[#allocation3 + $0x44] sm:$0x7]
      %v986 = vld [vmem:[%s1] sm:$0xf]
      %v987 = vld [vmem:[%s1 + $0x4] sm:$0xf]
      %v988 = vld [vmem:[%s1 + $0x8] sm:$0xf]
      %v989 = vld [vmem:[%s1 + $0xc] sm:$0xf]
      %v990 = vld [vmem:[%s1 + $0x10] sm:$0xf]
      %v991 = vld [vmem:[%s1 + $0x14] sm:$0xf]
      %v992 = vld [vmem:[%s1 + $0x18] sm:$0xf]
      %v993 = vld [vmem:[%s1 + $0x1c] sm:$0xf]
      %v994 = vld [vmem:[%s1 + $0x20] sm:$0xf]
      %v995 = vld [vmem:[%s1 + $0x24] sm:$0xf]
      %v996 = vld [vmem:[%s1 + $0x28] sm:$0xf]
      %v997 = vld [vmem:[%s1 + $0x2c] sm:$0xf]
      %v998 = vld [vmem:[%s1 + $0x30] sm:$0xf]
      %v999 = vld [vmem:[%s1 + $0x34] sm:$0xf]
      %v1000 = vld [vmem:[%s1 + $0x38] sm:$0xf]
      %v1001 = vld [vmem:[%s1 + $0x3c] sm:$0xf]
      %v1002 = vld [vmem:[%s1 + $0x40] sm:$0xf]
      %v1003 = vld [vmem:[%s1 + $0x44] sm:$0xf]
      %v1004 = vld [vmem:[%s1 + $0x48] sm:$0xf]
      %v1005 = vld [vmem:[%s1 + $0x4c] sm:$0xf]
      %v1006 = vld [vmem:[%s1 + $0x50] sm:$0xf]
      %v1007 = vld [vmem:[%s1 + $0x54] sm:$0xf]
      %v1008 = vld [vmem:[%s1 + $0x58] sm:$0xf]
      %v1009 = vld [vmem:[%s1 + $0x5c] sm:$0xf]
      %v1010 = vld [vmem:[%s1 + $0x60] sm:$0xf]
      %v1011 = vld [vmem:[%s1 + $0x64] sm:$0xf]
      %v1012 = vld [vmem:[%s1 + $0x68] sm:$0xf]
      %v1013 = vld [vmem:[%s1 + $0x6c] sm:$0xf]
      %v1014 = vld [vmem:[%s1 + $0x70] sm:$0xf]
      %v1015 = vld [vmem:[%s1 + $0x74] sm:$0xf]
      %v1016 = vld [vmem:[%s1 + $0x78] sm:$0xf]
      %v1017 = vld [vmem:[%s1 + $0x7c] sm:$0xf]
      %v1018 = vld [vmem:[%s1 + $0x80] sm:$0xf]
      %v1019 = vld [vmem:[%s1 + $0x84] sm:$0xf]
      %v1020 = vld [vmem:[%s1 + $0x88] sm:$0xf]
      %v1021 = vld [vmem:[%s1 + $0x8c] sm:$0xf]
      %v1022 = vld [vmem:[%s2] sm:$0x1]
      %v1024 = vlaneseq
      %v1025 = vshrl.u32 %v1024, 7
      %v1026 = vsub.s32 0, %v1025
      %v1027 = vrot.slane %v1022, %v1026
      %v1041 = vunpack.c.l.b16 %v974
      %v1042 = vunpack.c.h.b16 %v974
      %v1043 = vunpack.c.l.b16 %v975
      %v1044 = vunpack.c.l.b16 %v976
      %v1045 = vunpack.c.h.b16 %v976
      %v1046 = vunpack.c.l.b16 %v977
      %v1047 = vunpack.c.l.b16 %v978
      %v1048 = vunpack.c.h.b16 %v978
      %v1049 = vunpack.c.l.b16 %v979
      %v1050 = vunpack.c.l.b16 %v980
      %v1051 = vunpack.c.h.b16 %v980
      %v1052 = vunpack.c.l.b16 %v981
      %v1053 = vunpack.c.l.b16 %v982
      %v1054 = vunpack.c.h.b16 %v982
      %v1055 = vunpack.c.l.b16 %v983
      %v1056 = vunpack.c.l.b16 %v984
      %v1057 = vunpack.c.h.b16 %v984
      %v1058 = vunpack.c.l.b16 %v985
      %v1059 = vpack.c.b16 %v1044, %v1041
      %v1060 = vpack.c.b16 %v1045, %v1042
      %v1061 = vpack.c.b16 %v1046, %v1043
      %v1062 = vpack.c.b16 %v1050, %v1047
      %v1063 = vpack.c.b16 %v1051, %v1048
      %v1064 = vpack.c.b16 %v1052, %v1049
      %v1065 = vpack.c.b16 %v1056, %v1053
      %v1066 = vpack.c.b16 %v1057, %v1054
      %v1067 = vpack.c.b16 %v1058, %v1055
      %v1110 = vunpack.c.l.b16 %v986
      %v1111 = vunpack.c.l.b16 %v987
      %v1112 = vunpack.c.l.b16 %v988
      %v1113 = vunpack.c.l.b16 %v989
      %v1114 = vunpack.c.l.b16 %v990
      %v1115 = vunpack.c.l.b16 %v991
      %v1116 = vunpack.c.l.b16 %v992
      %v1117 = vunpack.c.l.b16 %v993
      %v1118 = vunpack.c.l.b16 %v994
      %v1119 = vunpack.c.l.b16 %v995
      %v1120 = vunpack.c.l.b16 %v996
      %v1121 = vunpack.c.l.b16 %v997
      %v1122 = vunpack.c.l.b16 %v998
      %v1123 = vunpack.c.l.b16 %v999
      %v1124 = vunpack.c.l.b16 %v1000
      %v1125 = vunpack.c.l.b16 %v1001
      %v1126 = vunpack.c.l.b16 %v1002
      %v1127 = vunpack.c.l.b16 %v1003
      %v1128 = vunpack.c.l.b16 %v1004
      %v1129 = vunpack.c.l.b16 %v1005
      %v1130 = vunpack.c.l.b16 %v1006
      %v1131 = vunpack.c.l.b16 %v1007
      %v1132 = vunpack.c.l.b16 %v1008
      %v1133 = vunpack.c.l.b16 %v1009
      %v1134 = vunpack.c.l.b16 %v1010
      %v1135 = vunpack.c.l.b16 %v1011
      %v1136 = vunpack.c.l.b16 %v1012
      %v1137 = vunpack.c.l.b16 %v1013
      %v1138 = vunpack.c.l.b16 %v1014
      %v1139 = vunpack.c.l.b16 %v1015
      %v1140 = vunpack.c.l.b16 %v1016
      %v1141 = vunpack.c.l.b16 %v1017
      %v1142 = vunpack.c.l.b16 %v1018
      %v1143 = vunpack.c.l.b16 %v1019
      %v1144 = vunpack.c.l.b16 %v1020
      %v1145 = vunpack.c.l.b16 %v1021
      %v1146 = vpack.c.b16 %v1111, %v1110
      %v1147 = vpack.c.b16 %v1113, %v1112
      %v1148 = vpack.c.b16 %v1115, %v1114
      %v1149 = vpack.c.b16 %v1117, %v1116
      %v1150 = vpack.c.b16 %v1119, %v1118
      %v1151 = vpack.c.b16 %v1121, %v1120
      %v1152 = vpack.c.b16 %v1123, %v1122
      %v1153 = vpack.c.b16 %v1125, %v1124
      %v1154 = vpack.c.b16 %v1127, %v1126
      %v1155 = vpack.c.b16 %v1129, %v1128
      %v1156 = vpack.c.b16 %v1131, %v1130
      %v1157 = vpack.c.b16 %v1133, %v1132
      %v1158 = vpack.c.b16 %v1135, %v1134
      %v1159 = vpack.c.b16 %v1137, %v1136
      %v1160 = vpack.c.b16 %v1139, %v1138
      %v1161 = vpack.c.b16 %v1141, %v1140
      %v1162 = vpack.c.b16 %v1143, %v1142
      %v1163 = vpack.c.b16 %v1145, %v1144
      %vm1182 = vcmask 261120
      %v1184 = vsel %vm1182, %v1061, 0
      %v1187 = vsel %vm1182, %v1064, 0
      %v1190 = vsel %vm1182, %v1067, 0
      %1192 = vmatprep.subr.bf16.mxu0 0
      %1193 = vmatpush1.bf16.msra.mxu0 %v1153
      %1194 = vmatprep.subr.bf16.mxu0 0
      %1195 = vmatpush1.bf16.msra.mxu0 %v1152
      %1196 = vmatprep.subr.bf16.mxu0 0
      %1197 = vmatpush1.bf16.msra.mxu0 %v1151
      %1198 = vmatprep.subr.bf16.mxu0 0
      %1199 = vmatpush1.bf16.msra.mxu0 %v1150
      %1200 = vmatprep.subr.bf16.mxu0 0
      %1201 = vmatpush1.bf16.msra.mxu0 %v1149
      %1202 = vmatprep.subr.bf16.mxu0 0
      %1203 = vmatpush1.bf16.msra.mxu0 %v1148
      %1204 = vmatprep.subr.bf16.mxu0 0
      %1205 = vmatpush1.bf16.msra.mxu0 %v1147
      %1206 = vmatprep.subr.bf16.mxu0 0
      %1207 = vmatpush1.bf16.msra.mxu0 %v1146
      %1208 = vmatprep.subr.bf16.mxu0 0
      %1209 = vmatpush2.bf16.msra.mxu0 %v1161
      %1210 = vmatprep.subr.bf16.mxu0 0
      %1211 = vmatpush2.bf16.msra.mxu0 %v1160
      %1212 = vmatprep.subr.bf16.mxu0 0
      %1213 = vmatpush2.bf16.msra.mxu0 %v1159
      %1214 = vmatprep.subr.bf16.mxu0 0
      %1215 = vmatpush2.bf16.msra.mxu0 %v1158
      %1216 = vmatprep.subr.bf16.mxu0 0
      %1217 = vmatpush2.bf16.msra.mxu0 %v1157
      %1218 = vmatprep.subr.bf16.mxu0 0
      %1219 = vmatpush2.bf16.msra.mxu0 %v1156
      %1220 = vmatprep.subr.bf16.mxu0 0
      %1221 = vmatpush2.bf16.msra.mxu0 %v1155
      %1222 = vmatprep.subr.bf16.mxu0 0
      %1223 = vmatpush2.bf16.msra.mxu0 %v1154
      %1224 = vmatprep.mubr.bf16.mxu0 %v1060
      %1225 = vmatmul.mubr.bf16.gmra.mxu0 %v1059
      %v1226 = vpop.f32.mrf.mxu0
      %v1227 = vadd.f32 %v1027, %v1226
      %v1228 = vpop.f32.mrf.mxu0
      %v1229 = vpop.f32.mrf.mxu0
      %v1230 = vadd.f32 %v1027, %v1229
      %v1231 = vpop.f32.mrf.mxu0
      %1232 = vmatprep.mubr.bf16.mxu0 %v1063
      %1233 = vmatmul.mubr.bf16.gmra.mxu0 %v1062
      %v1234 = vpop.f32.mrf.mxu0
      %v1235 = vadd.f32 %v1027, %v1234
      %v1236 = vpop.f32.mrf.mxu0
      %v1237 = vpop.f32.mrf.mxu0
      %v1238 = vadd.f32 %v1027, %v1237
      %v1239 = vpop.f32.mrf.mxu0
      %1240 = vmatprep.mubr.bf16.mxu0 %v1066
      %1241 = vmatmul.mubr.bf16.gmra.mxu0 %v1065
      %v1242 = vpop.f32.mrf.mxu0
      %v1243 = vadd.f32 %v1027, %v1242
      %v1244 = vpop.f32.mrf.mxu0
      %v1245 = vpop.f32.mrf.mxu0
      %v1246 = vadd.f32 %v1027, %v1245
      %v1247 = vpop.f32.mrf.mxu0
      %1248 = vdwg.mxu0
      %1249 = vmatprep.subr.bf16.mxu0 0
      %1250 = vmatpush1.bf16.msra.mxu0 0
      %1251 = vmatprep.subr.bf16.mxu0 0
      %1252 = vmatpush1.bf16.msra.mxu0 0
      %1253 = vmatprep.subr.bf16.mxu0 0
      %1254 = vmatpush1.bf16.msra.mxu0 0
      %1255 = vmatprep.subr.bf16.mxu0 0
      %1256 = vmatpush1.bf16.msra.mxu0 0
      %1257 = vmatprep.subr.bf16.mxu0 0
      %1258 = vmatpush1.bf16.msra.mxu0 0
      %1259 = vmatprep.subr.bf16.mxu0 0
      %1260 = vmatpush1.bf16.msra.mxu0 0
      %1261 = vmatprep.subr.bf16.mxu0 0
      %1262 = vmatpush1.bf16.msra.mxu0 %v1163
      %1263 = vmatprep.subr.bf16.mxu0 0
      %1264 = vmatpush1.bf16.msra.mxu0 %v1162
      %1265 = vmatprep.subr.bf16.mxu0 0
      %1266 = vmatpush2.bf16.msra.mxu0 0
      %1267 = vmatprep.subr.bf16.mxu0 0
      %1268 = vmatpush2.bf16.msra.mxu0 0
      %1269 = vmatprep.subr.bf16.mxu0 0
      %1270 = vmatpush2.bf16.msra.mxu0 0
      %1271 = vmatprep.subr.bf16.mxu0 0
      %1272 = vmatpush2.bf16.msra.mxu0 0
      %1273 = vmatprep.subr.bf16.mxu0 0
      %1274 = vmatpush2.bf16.msra.mxu0 0
      %1275 = vmatprep.subr.bf16.mxu0 0
      %1276 = vmatpush2.bf16.msra.mxu0 0
      %1277 = vmatprep.subr.bf16.mxu0 0
      %1278 = vmatpush2.bf16.msra.mxu0 0
      %1279 = vmatprep.subr.bf16.mxu0 0
      %1280 = vmatpush2.bf16.msra.mxu0 0
      %1281 = vmatprep.mubr.bf16.mxu0 0
      %1282 = vmatmul.mubr.bf16.gmra.mxu0 %v1184
      %v1283 = vpop.f32.mrf.mxu0
      %v1284 = vadd.f32 %v1227, %v1283
      %v1285 = vpop.f32.mrf.mxu0
      %v1286 = vpop.f32.mrf.mxu0
      %v1287 = vadd.f32 %v1230, %v1286
      %v1288 = vpop.f32.mrf.mxu0
      %1289 = vmatprep.mubr.bf16.mxu0 0
      %1290 = vmatmul.mubr.bf16.gmra.mxu0 %v1187
      %v1291 = vpop.f32.mrf.mxu0
      %v1292 = vadd.f32 %v1235, %v1291
      %v1293 = vpop.f32.mrf.mxu0
      %v1294 = vpop.f32.mrf.mxu0
      %v1295 = vadd.f32 %v1238, %v1294
      %v1296 = vpop.f32.mrf.mxu0
      %1297 = vmatprep.mubr.bf16.mxu0 0
      %1298 = vmatmul.mubr.bf16.gmra.mxu0 %v1190
      %v1299 = vpop.f32.mrf.mxu0
      %v1300 = vadd.f32 %v1243, %v1299
      %v1301 = vpop.f32.mrf.mxu0
      %v1302 = vpop.f32.mrf.mxu0
      %v1303 = vadd.f32 %v1246, %v1302
      %v1304 = vpop.f32.mrf.mxu0
      %1305 = vdwg.mxu0
      %1306 = vst.msk [vmem:[%s204] sm:$0xff] %vm1182, %v1284
      %1307 = vst.msk [vmem:[%s204 + $0x8] sm:$0xff] %vm1182, %v1287
      %1308 = vst.msk [vmem:[%s204 + $0x10] sm:$0xff] %vm1182, %v1292
      %1309 = vst.msk [vmem:[%s204 + $0x18] sm:$0xff] %vm1182, %v1295
      %1310 = vst.msk [vmem:[%s204 + $0x20] sm:$0xff] %vm1182, %v1300
      %vm1311 = vcmask 259072
      %1312 = vst.msk [vmem:[%s204 + $0x28] sm:$0x3f] %vm1311, %v1303
      %v1313 = vsel %vm374, %v1284, 0.0
      %v1314 = vsel %vm375, %v1287, 0.0
      %v1315 = vsel %vm376, %v1292, 0.0
      %v1316 = vsel %vm377, %v1295, 0.0
      %v1317 = vsel %vm378, %v1300, 0.0
      %v1318 = vsel %vm379, %v1303, 0.0
      %v1319 = vsel %vm1182, %v1313, 0.0
      %v1320 = vsel %vm1182, %v1314, 0.0
      %v1321 = vadd.f32 %v1319, %v1320
      %v1322 = vsel %vm1182, %v1315, 0.0
      %v1323 = vadd.f32 %v1321, %v1322
      %v1324 = vsel %vm1182, %v1316, 0.0
      %v1325 = vadd.f32 %v1323, %v1324
      %v1326 = vsel %vm1182, %v1317, 0.0
      %v1327 = vadd.f32 %v1325, %v1326
      %v1328 = vsel %vm1311, %v1318, 0.0
      %v1329 = vadd.f32 %v1327, %v1328
      %v1330 = vrot.slane %v1329, 4
      %v1331 = vadd.f32 %v1329, %v1330
      %v1332 = vrot.slane %v1331, 2
      %v1333 = vadd.f32 %v1331, %v1332
      %v1334 = vrot.slane %v1333, 1
      %v1335 = vadd.f32 %v1333, %v1334
      %vm1336 = vcmask 253952
      %1337 = vst.msk [vmem:[%s208] sm:$0x1] %vm1336, %v1335
      %v1338 = vmul.f32 %v1313, %v1313
      %v1339 = vmul.f32 %v1314, %v1314
      %v1340 = vmul.f32 %v1315, %v1315
      %v1341 = vmul.f32 %v1316, %v1316
      %v1342 = vmul.f32 %v1317, %v1317
      %v1343 = vmul.f32 %v1318, %v1318
      %v1344 = vsel %vm1182, %v1338, 0.0
      %v1345 = vsel %vm1182, %v1339, 0.0
      %v1346 = vadd.f32 %v1344, %v1345
      %v1347 = vsel %vm1182, %v1340, 0.0
      %v1348 = vadd.f32 %v1346, %v1347
      %v1349 = vsel %vm1182, %v1341, 0.0
      %v1350 = vadd.f32 %v1348, %v1349
      %v1351 = vsel %vm1182, %v1342, 0.0
      %v1352 = vadd.f32 %v1350, %v1351
      %v1353 = vsel %vm1311, %v1343, 0.0
      %v1354 = vadd.f32 %v1352, %v1353
      %v1355 = vrot.slane %v1354, 4
      %v1356 = vadd.f32 %v1354, %v1355
      %v1357 = vrot.slane %v1356, 2
      %v1358 = vadd.f32 %v1356, %v1357
      %v1359 = vrot.slane %v1358, 1
      %v1360 = vadd.f32 %v1358, %v1359
      %1361 = vst.msk [vmem:[%s208 + $0x1] sm:$0x1] %vm1336, %v1360
      %p1362 = scmp.lt.s32.totalorder %s16, 1
      %s1363 = scalar_select %p1362, %s16, 1
      %s1364 = smul.addr %s1363, 6
      %s1365 = smul.addr %s1364, 8
      %s1366 = scalar_lea.vmem %s3, %s1365
      %p1367 = scmp.lt.s32.totalorder %s16, 1
      %s1368 = scalar_select %p1367, %s16, 1
      %s1369 = smul.addr %s1368, 2
      %s1370 = scalar_lea.vmem %s4, %s1369
      // Predicated region
      $region33: #{double_conv_block_pallas.3} parent=31 // pred_check
        %p1371 = pneg %p102
      $region34: #{double_conv_block_pallas.3} parent=31 // pred_check_branch
        %1373 = sbr.rel (%p1371) target = $region36
      $region35: #{double_conv_block_pallas.3} parent=31 // pred_region
        _
      $region36: #{double_conv_block_pallas.3} parent=31 // pred_fallthru
        _
      // Predicated region
      $region37: #{double_conv_block_pallas.3} parent=31 // pred_check
        %p1374 = pneg %p128
      $region38: #{double_conv_block_pallas.3} parent=31 // pred_check_branch
        %1376 = sbr.rel (%p1374) target = $region40
      $region39: #{double_conv_block_pallas.3} parent=31 // pred_region
        _
      $region40: #{double_conv_block_pallas.3} parent=31 // pred_fallthru
        _
    $region32: #{double_conv_block_pallas.3} parent=5 // pred_fallthru
      _
    %p1377 = scmp.le.s32.totalorder 2, %s11
    // Predicated region
    $region41: #{double_conv_block_pallas.3} parent=5 // pred_check
      %p1378 = pneg %p1377
    $region42: #{double_conv_block_pallas.3} parent=5 // pred_check_branch
      %1380 = sbr.rel (%p1378) target = $region44
    $region43: #{double_conv_block_pallas.3} parent=5 // pred_region
      %s1381 = ssub.s32 %s11, 2
      // Predicated region
      $region45: #{double_conv_block_pallas.3} parent=43 // pred_check
        %p1382 = pneg %p108
      $region46: #{double_conv_block_pallas.3} parent=43 // pred_check_branch
        %1384 = sbr.rel (%p1382) target = $region48
      $region47: #{double_conv_block_pallas.3} parent=43 // pred_region
        %p1385 = scmp.lt.s32.totalorder %s17, 1
        %s1386 = scalar_select %p1385, %s17, 1
        %s1387 = smul.addr %s1386, 6
        %s1388 = smul.addr %s1387, 8
        %s1389 = scalar_lea.vmem %s3, %s1388
      $region48: #{double_conv_block_pallas.3} parent=43 // pred_fallthru
        _
      // Predicated region
      $region49: #{double_conv_block_pallas.3} parent=43 // pred_check
        %p1390 = pneg %p134
      $region50: #{double_conv_block_pallas.3} parent=43 // pred_check_branch
        %1392 = sbr.rel (%p1390) target = $region52
      $region51: #{double_conv_block_pallas.3} parent=43 // pred_region
        %p1393 = scmp.lt.s32.totalorder %s17, 1
        %s1394 = scalar_select %p1393, %s17, 1
        %s1395 = smul.addr %s1394, 2
        %s1396 = scalar_lea.vmem %s4, %s1395
      $region52: #{double_conv_block_pallas.3} parent=43 // pred_fallthru
        _
    $region44: #{double_conv_block_pallas.3} parent=5 // pred_fallthru
      _
  $region6: #{double_conv_block_pallas.3} parent=0 // loop_footer
    %s15 = sadd.s32 1, %s11
  $region7: #{double_conv_block_pallas.3} parent=0 // loop_footer_branch
    %10 = sbr.rel target = $region3
  $region8: #{double_conv_block_pallas.3} parent=0 // loop_exit
    _

</llo_original>
